<compile_context>
chip_gen: v6e
topology: v6e:2x2x1
jax: 0.10.0
libtpu: 0.0.40
codegen_flags: <defaults>
</compile_context>

<pallas_src>
import jax
import jax.numpy as jnp
from jax.experimental import pallas as pl
from jax.experimental.pallas import tpu as pltpu


# ------------------------------ kernel ------------------------------

def fused_mlp_kernel(x_ref, tkwr_ref,              # per-batch-tile activations
                     qagu_ref, qbd_ref,            # small resident weights
                     wg_ref, wu_ref, qbg_ref, qbu_ref,   # column-streamed (I tiles)
                     wd_ref, qad_ref,              # row-streamed (I tiles)
                     out_ref,
                     acc_ref, accad_ref, ag_ref):
    """Grid = (batch tiles [parallel], intermediate tiles [arbitrary])."""
    j = pl.program_id(1)
    f32 = jnp.float32
    cdt = wg_ref.dtype                              # MXU operand dtype (bf16)
    kr = accad_ref.shape[1]                         # K * R

    xb = x_ref[...]                                 # [TB, H+K]  (x' fold: [x | tkw])

    @pl.when(j == 0)
    def _init():
        acc_ref[...] = jnp.zeros_like(acc_ref)
        accad_ref[...] = jnp.zeros_like(accad_ref)
        # gate|up adapter "A" matmul, identical for every I tile -> cache it,
        # already scaled by the per-expert top_k weights (repeated per rank).
        tkwr = tkwr_ref[...]                        # [TB, KR] f32
        a_gu = jnp.dot(xb, qagu_ref[...], preferred_element_type=f32)   # [TB, 2KR]
        ag_ref[...] = a_gu * jnp.concatenate([tkwr, tkwr], axis=-1)

    agb = ag_ref[...].astype(cdt)                   # [TB, 2KR]

    # gate / up projections for this I tile (adapter scaling folded into qb*).
    gate = jnp.dot(xb, wg_ref[...], preferred_element_type=f32)
    gate = gate + jnp.dot(agb[:, :kr], qbg_ref[...], preferred_element_type=f32)
    up = jnp.dot(xb, wu_ref[...], preferred_element_type=f32)
    up = up + jnp.dot(agb[:, kr:], qbu_ref[...], preferred_element_type=f32)

    # act_fn = silu (config.hidden_act assumed 'silu'); elementwise math in f32.
    h = (gate * jax.nn.sigmoid(gate) * up).astype(cdt)        # [TB, block_i]

    # down projection: accumulate main matmul and adapter "A" over I tiles.
    acc_ref[...] += jnp.dot(h, wd_ref[...], preferred_element_type=f32)     # [TB, H]
    accad_ref[...] += jnp.dot(h, qad_ref[...], preferred_element_type=f32)  # [TB, KR]

    @pl.when(j == pl.num_programs(1) - 1)
    def _finish():
        ad = (accad_ref[...] * tkwr_ref[...]).astype(cdt)      # [TB, KR]
        out = acc_ref[...] + jnp.dot(ad, qbd_ref[...], preferred_element_type=f32)
        out_ref[...] = out.astype(out_ref.dtype)


# ------------------------------ packing ------------------------------

def pack_params(p, compute_dtype=jnp.bfloat16):
    """Pack / stack the FusedMLP parameters for the kernel.

    Expects pre-transposed params: wmask [K,H]; wg/wu [H,I]; wd [I,H];
    qa* [K,in,R]; qb* [K,R,out]; s* [1,out].
    The mask_up_proj is folded algebraically (see extend()) and the
    scaling_factor is folded into the stacked qb weights.
    """
    K, H, R = p["qag"].shape
    KR = K * R
    wmask = p["wmask"].astype(jnp.float32)                       # [K, H]

    def stack_qa(qa):                                            # [K,in,R] -> [in, K*R]
        return jnp.transpose(qa, (1, 0, 2)).reshape(qa.shape[1], KR)

    def stack_qb(qb, s):                                         # [K,R,out] -> [K*R,out]
        return (qb * s[None]).reshape(KR, qb.shape[2])

    def extend(w):                                               # fold x' = x + tkw@wmask
        return jnp.concatenate([w.astype(jnp.float32),
                                wmask @ w.astype(jnp.float32)], axis=0)   # [H+K, out]

    qagu = jnp.concatenate([stack_qa(p["qag"]), stack_qa(p["qau"])], axis=1)  # [H, 2KR]

    return {
        "wg": extend(p["wg"]).astype(compute_dtype),             # [H+K, I]
        "wu": extend(p["wu"]).astype(compute_dtype),             # [H+K, I]
        "qagu": extend(qagu).astype(compute_dtype),              # [H+K, 2KR]
        "qbg": stack_qb(p["qbg"], p["sg"]).astype(compute_dtype),  # [KR, I]
        "qbu": stack_qb(p["qbu"], p["su"]).astype(compute_dtype),  # [KR, I]
        "wd": p["wd"].astype(compute_dtype),                     # [I, H]
        "qad": stack_qa(p["qad"]).astype(compute_dtype),         # [I, KR]
        "qbd": stack_qb(p["qbd"], p["sd"]).astype(compute_dtype),  # [KR, H]
    }


# ------------------------------ wrapper ------------------------------

def _round_up(n, m):
    return ((n + m - 1) // m) * m


def _pick_i_tile(total, want):
    """Largest multiple of 128 that divides `total` and is <= want (else full)."""
    if total <= want:
        return total
    best = None
    t = 128
    while t <= want:
        if total % t == 0:
            best = t
        t += 128
    return best if best is not None else total


def fused_mlp(x, tkw, packed, *, block_b=256, block_i=512, out_dtype=jnp.float32):
    B, H = x.shape
    K = tkw.shape[1]
    HK, I = packed["wg"].shape
    KR = packed["qbd"].shape[0]
    R = KR // K
    assert HK == H + K, "packed weights do not match x / top_k_weights shapes"

    cdt = packed["wg"].dtype
    cdt_sz = jnp.dtype(cdt).itemsize
    out_sz = jnp.dtype(out_dtype).itemsize

    # Tile sizes; ragged batch handled by zero padding (sliced off at the end).
    bb = min(block_b, _round_up(B, 8))
    Bp = _round_up(B, bb)
    bi = _pick_i_tile(I, block_i)

    # x' fold: feed [x | tkw] so weights extended with (wmask @ W) rows apply
    # the mask_up_proj exactly inside the big matmuls.
    xext = jnp.concatenate([x.astype(jnp.float32), tkw.astype(jnp.float32)],
                           axis=1).astype(cdt)                       # [B, H+K]
    tkwr = jnp.repeat(tkw.astype(jnp.float32), R, axis=1)            # [B, K*R]
    if Bp != B:
        xext = jnp.pad(xext, ((0, Bp - B), (0, 0)))
        tkwr = jnp.pad(tkwr, ((0, Bp - B), (0, 0)))

    grid = (Bp // bb, I // bi)

    in_specs = [
        pl.BlockSpec((bb, HK), lambda i, j: (i, 0)),       # xext
        pl.BlockSpec((bb, KR), lambda i, j: (i, 0)),       # repeated top_k_weights
        pl.BlockSpec((HK, 2 * KR), lambda i, j: (0, 0)),   # qagu (small, resident)
        pl.BlockSpec((KR, H), lambda i, j: (0, 0)),        # qbd  (small, resident)
        pl.BlockSpec((HK, bi), lambda i, j: (0, j)),       # wg   (streamed over I)
        pl.BlockSpec((HK, bi), lambda i, j: (0, j)),       # wu
        pl.BlockSpec((KR, bi), lambda i, j: (0, j)),       # qbg
        pl.BlockSpec((KR, bi), lambda i, j: (0, j)),       # qbu
        pl.BlockSpec((bi, H), lambda i, j: (j, 0)),        # wd   (streamed over I)
        pl.BlockSpec((bi, KR), lambda i, j: (j, 0)),       # qad
    ]
    out_specs = pl.BlockSpec((bb, H), lambda i, j: (i, 0))

    scratch_shapes = [
        pltpu.VMEM((bb, H), jnp.float32),       # down accumulator
        pltpu.VMEM((bb, KR), jnp.float32),      # down adapter-A accumulator
        pltpu.VMEM((bb, 2 * KR), jnp.float32),  # scaled gate|up adapter-A
    ]

    # VMEM budget: streamed weight tiles are double-buffered, activations and
    # resident weights single-copy; clamp to 0.9x the chip's physical VMEM.
    streamed = 2 * cdt_sz * bi * (2 * HK + 3 * KR + H)
    resident = cdt_sz * (HK * 2 * KR + KR * H)
    act_in = 2 * (cdt_sz * bb * HK + 4 * bb * KR)
    out_buf = 2 * out_sz * bb * H
    scratch = 4 * bb * (H + 3 * KR)
    working = 4 * 4 * bb * bi                    # gate/up/h f32 live values + slack
    need = streamed + resident + act_in + out_buf + scratch + working + (6 << 20)
    try:
        vmem_cap = pltpu.get_tpu_info().vmem_capacity_bytes
    except Exception:  # info query only; conservative (v7x-sized) fallback
        vmem_cap = 64 << 20
    vmem_limit = int(max(min(need, int(0.9 * vmem_cap)), 16 << 20))

    out = pl.pallas_call(
        fused_mlp_kernel,
        out_shape=jax.ShapeDtypeStruct((Bp, H), out_dtype),
        grid_spec=pltpu.PrefetchScalarGridSpec(
            num_scalar_prefetch=0,
            grid=grid,
            in_specs=in_specs,
            out_specs=out_specs,
            scratch_shapes=scratch_shapes,
        ),
        compiler_params=pltpu.CompilerParams(
            dimension_semantics=("parallel", "arbitrary"),
            vmem_limit_bytes=vmem_limit),
    )(xext, tkwr,
      packed["qagu"], packed["qbd"],
      packed["wg"], packed["wu"], packed["qbg"], packed["qbu"],
      packed["wd"], packed["qad"])

    return out[:B] if Bp != B else out


# ------------------------- reference (plain JAX) -------------------------

_HI = jax.lax.Precision.HIGHEST


def _ref_fused_linear(x, tkw, w, qa, qb, s):
    out = jnp.dot(x, w, precision=_HI)
    a = jnp.einsum("bh,khr->bkr", x, qa, precision=_HI)
    b = jnp.einsum("bkr,kro->bko", a, qb, precision=_HI)
    adapt = jnp.sum(b * tkw[:, :, None], axis=1)
    return out + s * adapt


def fused_mlp_ref(x, tkw, p):
    x = x + jnp.dot(tkw, p["wmask"], precision=_HI)
    gate = _ref_fused_linear(x, tkw, p["wg"], p["qag"], p["qbg"], p["sg"])
    up = _ref_fused_linear(x, tkw, p["wu"], p["qau"], p["qbu"], p["su"])
    h = jax.nn.silu(gate) * up
    return _ref_fused_linear(h, tkw, p["wd"], p["qad"], p["qbd"], p["sd"])


# ------------------------------- main -------------------------------

if __name__ == "__main__":
    # Small but MXU-aligned shapes; B=200 exercises the ragged-batch padding,
    # block_b=128 / block_i=128 give a (2, 2) grid so both the batch axis and
    # the intermediate-dim accumulation path are exercised.
    B, H, I, K, R = 200, 128, 256, 4, 8

    key = jax.random.PRNGKey(0)
    keys = jax.random.split(key, 16)

    def nrm(k, shape, scale):
        return jax.random.normal(k, shape, jnp.float32) * scale

    # NOTE: the PyTorch 'mixture' adapters are zero-initialized; nonzero values
    # (and larger scales) are used here so the adapter + mask paths are visible
    # above the bf16 tolerance. scaling_factor default 0.1 -> 0.5 here.
    params = {
        "wmask": nrm(keys[0], (K, H), 0.5),
        "wg": nrm(keys[1], (H, I), 0.05),
        "qag": nrm(keys[2], (K, H, R), 0.2),
        "qbg": nrm(keys[3], (K, R, I), 0.2),
        "sg": jnp.full((1, I), 0.5, jnp.float32),
        "wu": nrm(keys[4], (H, I), 0.05),
        "qau": nrm(keys[5], (K, H, R), 0.2),
        "qbu": nrm(keys[6], (K, R, I), 0.2),
        "su": jnp.full((1, I), 0.5, jnp.float32),
        "wd": nrm(keys[7], (I, H), 0.05),
        "qad": nrm(keys[8], (K, I, R), 0.2),
        "qbd": nrm(keys[9], (K, R, H), 0.2),
        "sd": jnp.full((1, H), 0.5, jnp.float32),
    }

    x = jax.random.normal(keys[10], (B, H), jnp.float32)
    tkw = jax.nn.softmax(jax.random.normal(keys[11], (B, K), jnp.float32), axis=-1)

    # Round test data to bf16-representable values so the f32 reference and the
    # bf16 kernel consume identical inputs (isolates kernel math from test-data
    # quantization noise).
    q = lambda a: a.astype(jnp.bfloat16).astype(jnp.float32)
    params = {k: q(v) for k, v in params.items()}
    x = q(x)
    tkw = q(tkw)

    packed = pack_params(params, compute_dtype=jnp.bfloat16)

    out = jax.block_until_ready(fused_mlp(x, tkw, packed, block_b=128, block_i=128))

    ref = fused_mlp_ref(x, tkw, params)
    assert out.shape == (B, H)
    max_err = float(jnp.max(jnp.abs(out - ref)))
    scale = float(jnp.max(jnp.abs(ref)))
    # bf16 operands with f32 accumulation: allow ~3% of output scale.
    assert max_err <= 3e-2 * max(scale, 1.0), \
        f"max abs err {max_err} (ref scale {scale})"

    print("KERNEL_OK")
</pallas_src>

<mosaic_0001>
module attributes {stable_mosaic.version = 11 : i64} {
  func.func @fused_mlp_kernel(%arg0: i32, %arg1: i32, %arg2: memref<128x132xbf16, #tpu.memory_space<vmem>>, %arg3: memref<128x32xf32, #tpu.memory_space<vmem>>, %arg4: memref<132x64xbf16, #tpu.memory_space<vmem>>, %arg5: memref<32x128xbf16, #tpu.memory_space<vmem>>, %arg6: memref<132x128xbf16, #tpu.memory_space<vmem>>, %arg7: memref<132x128xbf16, #tpu.memory_space<vmem>>, %arg8: memref<32x128xbf16, #tpu.memory_space<vmem>>, %arg9: memref<32x128xbf16, #tpu.memory_space<vmem>>, %arg10: memref<128x128xbf16, #tpu.memory_space<vmem>>, %arg11: memref<128x32xbf16, #tpu.memory_space<vmem>>, %arg12: memref<128x128xf32, #tpu.memory_space<vmem>>, %arg13: memref<128x128xf32, #tpu.memory_space<vmem>>, %arg14: memref<128x32xf32, #tpu.memory_space<vmem>>, %arg15: memref<128x64xf32, #tpu.memory_space<vmem>>) attributes {dimension_semantics = [#tpu.dimension_semantics<parallel>, #tpu.dimension_semantics<arbitrary>], iteration_bounds = array<i64: 2, 2>, scalar_prefetch = 0 : i64, scratch_operands = 3 : i64, tpu.core_type = #tpu.core_type<tc>, window_params = [{transform_indices = @transform_0, window_bounds = array<i64: 128, 132>}, {transform_indices = @transform_1, window_bounds = array<i64: 128, 32>}, {pipeline_mode = #tpu.pipeline_mode<synchronous>, transform_indices = @transform_2, window_bounds = array<i64: 132, 64>}, {pipeline_mode = #tpu.pipeline_mode<synchronous>, transform_indices = @transform_3, window_bounds = array<i64: 32, 128>}, {transform_indices = @transform_4, window_bounds = array<i64: 132, 128>}, {transform_indices = @transform_5, window_bounds = array<i64: 132, 128>}, {transform_indices = @transform_6, window_bounds = array<i64: 32, 128>}, {transform_indices = @transform_7, window_bounds = array<i64: 32, 128>}, {transform_indices = @transform_8, window_bounds = array<i64: 128, 128>}, {transform_indices = @transform_9, window_bounds = array<i64: 128, 32>}, {transform_indices = @transform_10, window_bounds = array<i64: 128, 128>}]} {
    %c0 = arith.constant 0 : index
    %c0_0 = arith.constant 0 : index
    %0 = vector.load %arg2[%c0, %c0_0] : memref<128x132xbf16, #tpu.memory_space<vmem>>, vector<128x132xbf16>
    %c0_i32 = arith.constant 0 : i32
    %1 = arith.cmpi eq, %arg1, %c0_i32 : i32
    %2 = arith.extui %1 : i1 to i32
    %c0_i32_1 = arith.constant 0 : i32
    %3 = arith.cmpi ne, %2, %c0_i32_1 : i32
    scf.if %3 {
      %cst_31 = arith.constant 0.000000e+00 : f32
      %39 = vector.broadcast %cst_31 : f32 to vector<128x128xf32>
      %c0_32 = arith.constant 0 : index
      %c0_33 = arith.constant 0 : index
      %40 = vector.load %arg13[%c0_32, %c0_33] : memref<128x128xf32, #tpu.memory_space<vmem>>, vector<128x128xf32>
      tpu.vector_store %arg13[%c0_32, %c0_33], %39 {strides = array<i32>} : memref<128x128xf32, #tpu.memory_space<vmem>>, vector<128x128xf32>,
      %cst_34 = arith.constant 0.000000e+00 : f32
      %41 = vector.broadcast %cst_34 : f32 to vector<128x32xf32>
      %c0_35 = arith.constant 0 : index
      %c0_36 = arith.constant 0 : index
      %42 = vector.load %arg14[%c0_35, %c0_36] : memref<128x32xf32, #tpu.memory_space<vmem>>, vector<128x32xf32>
      tpu.vector_store %arg14[%c0_35, %c0_36], %41 {strides = array<i32>} : memref<128x32xf32, #tpu.memory_space<vmem>>, vector<128x32xf32>,
      %c0_37 = arith.constant 0 : index
      %c0_38 = arith.constant 0 : index
      %43 = vector.load %arg3[%c0_37, %c0_38] : memref<128x32xf32, #tpu.memory_space<vmem>>, vector<128x32xf32>
      %c0_39 = arith.constant 0 : index
      %c0_40 = arith.constant 0 : index
      %44 = vector.load %arg4[%c0_39, %c0_40] : memref<132x64xbf16, #tpu.memory_space<vmem>>, vector<132x64xbf16>
      %cst_41 = arith.constant dense<0.000000e+00> : vector<128x64xf32>
      %45 = tpu.matmul %0, %44, %cst_41 {dimension_numbers = #tpu.dot_dimension_numbers<[1], [0], [0], [1], [0, 0, 1, 1], [], []>} : vector<128x132xbf16>, vector<132x64xbf16>, vector<128x64xf32> -> vector<128x64xf32>
      %46 = tpu.concatenate %43, %43 in 1 : vector<128x32xf32>, vector<128x32xf32> -> vector<128x64xf32>
      %47 = arith.mulf %45, %46 : vector<128x64xf32>
      %c0_42 = arith.constant 0 : index
      %c0_43 = arith.constant 0 : index
      %48 = vector.load %arg15[%c0_42, %c0_43] : memref<128x64xf32, #tpu.memory_space<vmem>>, vector<128x64xf32>
      tpu.vector_store %arg15[%c0_42, %c0_43], %47 {strides = array<i32>} : memref<128x64xf32, #tpu.memory_space<vmem>>, vector<128x64xf32>,
    } else {
    }
    %c0_2 = arith.constant 0 : index
    %c0_3 = arith.constant 0 : index
    %4 = vector.load %arg15[%c0_2, %c0_3] : memref<128x64xf32, #tpu.memory_space<vmem>>, vector<128x64xf32>
    %5 = arith.truncf %4 : vector<128x64xf32> to vector<128x64xbf16>
    %c0_4 = arith.constant 0 : index
    %c0_5 = arith.constant 0 : index
    %6 = vector.load %arg6[%c0_4, %c0_5] : memref<132x128xbf16, #tpu.memory_space<vmem>>, vector<132x128xbf16>
    %cst = arith.constant dense<0.000000e+00> : vector<128x128xf32>
    %7 = tpu.matmul %0, %6, %cst {dimension_numbers = #tpu.dot_dimension_numbers<[1], [0], [0], [1], [0, 0, 1, 1], [], []>} : vector<128x132xbf16>, vector<132x128xbf16>, vector<128x128xf32> -> vector<128x128xf32>
    %8 = vector.extract_strided_slice %5 {offsets = [0, 0], sizes = [128, 32], strides = [1, 1]} : vector<128x64xbf16> to vector<128x32xbf16>
    %c0_6 = arith.constant 0 : index
    %c0_7 = arith.constant 0 : index
    %9 = vector.load %arg8[%c0_6, %c0_7] : memref<32x128xbf16, #tpu.memory_space<vmem>>, vector<32x128xbf16>
    %cst_8 = arith.constant dense<0.000000e+00> : vector<128x128xf32>
    %10 = tpu.matmul %8, %9, %cst_8 {dimension_numbers = #tpu.dot_dimension_numbers<[1], [0], [0], [1], [0, 0, 1, 1], [], []>} : vector<128x32xbf16>, vector<32x128xbf16>, vector<128x128xf32> -> vector<128x128xf32>
    %11 = arith.addf %7, %10 : vector<128x128xf32>
    %c0_9 = arith.constant 0 : index
    %c0_10 = arith.constant 0 : index
    %12 = vector.load %arg7[%c0_9, %c0_10] : memref<132x128xbf16, #tpu.memory_space<vmem>>, vector<132x128xbf16>
    %cst_11 = arith.constant dense<0.000000e+00> : vector<128x128xf32>
    %13 = tpu.matmul %0, %12, %cst_11 {dimension_numbers = #tpu.dot_dimension_numbers<[1], [0], [0], [1], [0, 0, 1, 1], [], []>} : vector<128x132xbf16>, vector<132x128xbf16>, vector<128x128xf32> -> vector<128x128xf32>
    %14 = vector.extract_strided_slice %5 {offsets = [0, 32], sizes = [128, 32], strides = [1, 1]} : vector<128x64xbf16> to vector<128x32xbf16>
    %c0_12 = arith.constant 0 : index
    %c0_13 = arith.constant 0 : index
    %15 = vector.load %arg9[%c0_12, %c0_13] : memref<32x128xbf16, #tpu.memory_space<vmem>>, vector<32x128xbf16>
    %cst_14 = arith.constant dense<0.000000e+00> : vector<128x128xf32>
    %16 = tpu.matmul %14, %15, %cst_14 {dimension_numbers = #tpu.dot_dimension_numbers<[1], [0], [0], [1], [0, 0, 1, 1], [], []>} : vector<128x32xbf16>, vector<32x128xbf16>, vector<128x128xf32> -> vector<128x128xf32>
    %17 = arith.addf %13, %16 : vector<128x128xf32>
    %18 = arith.negf %11 : vector<128x128xf32>
    %19 = math.exp %18 : vector<128x128xf32>
    %cst_15 = arith.constant 1.000000e+00 : f32
    %20 = vector.broadcast %cst_15 : f32 to vector<128x128xf32>
    %21 = arith.addf %20, %19 : vector<128x128xf32>
    %22 = arith.divf %20, %21 : vector<128x128xf32>
    %23 = arith.mulf %11, %22 : vector<128x128xf32>
    %24 = arith.mulf %23, %17 : vector<128x128xf32>
    %25 = arith.truncf %24 : vector<128x128xf32> to vector<128x128xbf16>
    %c0_16 = arith.constant 0 : index
    %c0_17 = arith.constant 0 : index
    %26 = vector.load %arg13[%c0_16, %c0_17] : memref<128x128xf32, #tpu.memory_space<vmem>>, vector<128x128xf32>
    %c0_18 = arith.constant 0 : index
    %c0_19 = arith.constant 0 : index
    %27 = vector.load %arg10[%c0_18, %c0_19] : memref<128x128xbf16, #tpu.memory_space<vmem>>, vector<128x128xbf16>
    %cst_20 = arith.constant dense<0.000000e+00> : vector<128x128xf32>
    %28 = tpu.matmul %25, %27, %cst_20 {dimension_numbers = #tpu.dot_dimension_numbers<[1], [0], [0], [1], [0, 0, 1, 1], [], []>} : vector<128x128xbf16>, vector<128x128xbf16>, vector<128x128xf32> -> vector<128x128xf32>
    %29 = arith.addf %26, %28 : vector<128x128xf32>
    %c0_21 = arith.constant 0 : index
    %c0_22 = arith.constant 0 : index
    %30 = vector.load %arg13[%c0_21, %c0_22] : memref<128x128xf32, #tpu.memory_space<vmem>>, vector<128x128xf32>
    tpu.vector_store %arg13[%c0_21, %c0_22], %29 {strides = array<i32>} : memref<128x128xf32, #tpu.memory_space<vmem>>, vector<128x128xf32>,
    %c0_23 = arith.constant 0 : index
    %c0_24 = arith.constant 0 : index
    %31 = vector.load %arg14[%c0_23, %c0_24] : memref<128x32xf32, #tpu.memory_space<vmem>>, vector<128x32xf32>
    %c0_25 = arith.constant 0 : index
    %c0_26 = arith.constant 0 : index
    %32 = vector.load %arg11[%c0_25, %c0_26] : memref<128x32xbf16, #tpu.memory_space<vmem>>, vector<128x32xbf16>
    %cst_27 = arith.constant dense<0.000000e+00> : vector<128x32xf32>
    %33 = tpu.matmul %25, %32, %cst_27 {dimension_numbers = #tpu.dot_dimension_numbers<[1], [0], [0], [1], [0, 0, 1, 1], [], []>} : vector<128x128xbf16>, vector<128x32xbf16>, vector<128x32xf32> -> vector<128x32xf32>
    %34 = arith.addf %31, %33 : vector<128x32xf32>
    %c0_28 = arith.constant 0 : index
    %c0_29 = arith.constant 0 : index
    %35 = vector.load %arg14[%c0_28, %c0_29] : memref<128x32xf32, #tpu.memory_space<vmem>>, vector<128x32xf32>
    tpu.vector_store %arg14[%c0_28, %c0_29], %34 {strides = array<i32>} : memref<128x32xf32, #tpu.memory_space<vmem>>, vector<128x32xf32>,
    %c1_i32 = arith.constant 1 : i32
    %36 = arith.cmpi eq, %arg1, %c1_i32 : i32
    %37 = arith.extui %36 : i1 to i32
    %c0_i32_30 = arith.constant 0 : i32
    %38 = arith.cmpi ne, %37, %c0_i32_30 : i32
    scf.if %38 {
      %c0_31 = arith.constant 0 : index
      %c0_32 = arith.constant 0 : index
      %39 = vector.load %arg14[%c0_31, %c0_32] : memref<128x32xf32, #tpu.memory_space<vmem>>, vector<128x32xf32>
      %c0_33 = arith.constant 0 : index
      %c0_34 = arith.constant 0 : index
      %40 = vector.load %arg3[%c0_33, %c0_34] : memref<128x32xf32, #tpu.memory_space<vmem>>, vector<128x32xf32>
      %41 = arith.mulf %39, %40 : vector<128x32xf32>
      %42 = arith.truncf %41 : vector<128x32xf32> to vector<128x32xbf16>
      %c0_35 = arith.constant 0 : index
      %c0_36 = arith.constant 0 : index
      %43 = vector.load %arg13[%c0_35, %c0_36] : memref<128x128xf32, #tpu.memory_space<vmem>>, vector<128x128xf32>
      %c0_37 = arith.constant 0 : index
      %c0_38 = arith.constant 0 : index
      %44 = vector.load %arg5[%c0_37, %c0_38] : memref<32x128xbf16, #tpu.memory_space<vmem>>, vector<32x128xbf16>
      %cst_39 = arith.constant dense<0.000000e+00> : vector<128x128xf32>
      %45 = tpu.matmul %42, %44, %cst_39 {dimension_numbers = #tpu.dot_dimension_numbers<[1], [0], [0], [1], [0, 0, 1, 1], [], []>} : vector<128x32xbf16>, vector<32x128xbf16>, vector<128x128xf32> -> vector<128x128xf32>
      %46 = arith.addf %43, %45 : vector<128x128xf32>
      %c0_40 = arith.constant 0 : index
      %c0_41 = arith.constant 0 : index
      %47 = vector.load %arg12[%c0_40, %c0_41] : memref<128x128xf32, #tpu.memory_space<vmem>>, vector<128x128xf32>
      tpu.vector_store %arg12[%c0_40, %c0_41], %46 {strides = array<i32>} : memref<128x128xf32, #tpu.memory_space<vmem>>, vector<128x128xf32>,
    } else {
    }
    return
  }
  func.func @transform_0(%arg0: i32, %arg1: i32) -> (i32, i32) {
    %c0_i32 = arith.constant 0 : i32
    %c0_i32_0 = arith.constant 0 : i32
    return %arg0, %c0_i32 : i32, i32
  }
  func.func @transform_1(%arg0: i32, %arg1: i32) -> (i32, i32) {
    %c0_i32 = arith.constant 0 : i32
    %c0_i32_0 = arith.constant 0 : i32
    return %arg0, %c0_i32 : i32, i32
  }
  func.func @transform_2(%arg0: i32, %arg1: i32) -> (i32, i32) {
    %c0_i32 = arith.constant 0 : i32
    %c0_i32_0 = arith.constant 0 : i32
    %c0_i32_1 = arith.constant 0 : i32
    return %c0_i32, %c0_i32_0 : i32, i32
  }
  func.func @transform_3(%arg0: i32, %arg1: i32) -> (i32, i32) {
    %c0_i32 = arith.constant 0 : i32
    %c0_i32_0 = arith.constant 0 : i32
    %c0_i32_1 = arith.constant 0 : i32
    return %c0_i32, %c0_i32_0 : i32, i32
  }
  func.func @transform_4(%arg0: i32, %arg1: i32) -> (i32, i32) {
    %c0_i32 = arith.constant 0 : i32
    %c0_i32_0 = arith.constant 0 : i32
    return %c0_i32, %arg1 : i32, i32
  }
  func.func @transform_5(%arg0: i32, %arg1: i32) -> (i32, i32) {
    %c0_i32 = arith.constant 0 : i32
    %c0_i32_0 = arith.constant 0 : i32
    return %c0_i32, %arg1 : i32, i32
  }
  func.func @transform_6(%arg0: i32, %arg1: i32) -> (i32, i32) {
    %c0_i32 = arith.constant 0 : i32
    %c0_i32_0 = arith.constant 0 : i32
    return %c0_i32, %arg1 : i32, i32
  }
  func.func @transform_7(%arg0: i32, %arg1: i32) -> (i32, i32) {
    %c0_i32 = arith.constant 0 : i32
    %c0_i32_0 = arith.constant 0 : i32
    return %c0_i32, %arg1 : i32, i32
  }
  func.func @transform_8(%arg0: i32, %arg1: i32) -> (i32, i32) {
    %c0_i32 = arith.constant 0 : i32
    %c0_i32_0 = arith.constant 0 : i32
    return %arg1, %c0_i32 : i32, i32
  }
  func.func @transform_9(%arg0: i32, %arg1: i32) -> (i32, i32) {
    %c0_i32 = arith.constant 0 : i32
    %c0_i32_0 = arith.constant 0 : i32
    return %arg1, %c0_i32 : i32, i32
  }
  func.func @transform_10(%arg0: i32, %arg1: i32) -> (i32, i32) {
    %c0_i32 = arith.constant 0 : i32
    %c0_i32_0 = arith.constant 0 : i32
    return %arg0, %c0_i32 : i32, i32
  }
}

</mosaic_0001>

<llo_original>
// kernel: tpu_custom_call.1
$region0: #{tpu_custom_call.1}
  #allocation0 [shape = 'u32[]', space=smem, size = 0x4, offset = 0x4, fixed_abs, tag = 'smem constant byte address 0x4 - core index']
  #allocation1 [shape = 'u32[144,128]{1,0:T(1,128)}', space=vmem, size = 0x12000, scoped, tag = 'internal scratch']
  #allocation2 [shape = 'f32[128,128]{1,0:T(8,128)}', space=vmem, size = 0x10000, scoped, tag = 'scratch operand']
  #allocation3 [shape = 'f32[128,32]{1,0:T(8,128)}', space=vmem, size = 0x10000, scoped, tag = 'scratch operand']
  #allocation4 [shape = 'f32[128,64]{1,0:T(8,128)}', space=vmem, size = 0x10000, scoped, tag = 'scratch operand']
  %s0 = inlined_call_operand.vmem [shape: bf16[256,132], index: 0, kind: input, shape index: {}]
  %s1 = inlined_call_operand.vmem [shape: f32[256,32], index: 1, kind: input, shape index: {}]
  %s2 = inlined_call_operand.vmem [shape: bf16[132,64], index: 2, kind: input, shape index: {}]
  %s3 = inlined_call_operand.vmem [shape: bf16[32,128], index: 3, kind: input, shape index: {}]
  %s4 = inlined_call_operand.vmem [shape: bf16[132,256], index: 4, kind: input, shape index: {}]
  %s5 = inlined_call_operand.vmem [shape: bf16[132,256], index: 5, kind: input, shape index: {}]
  %s6 = inlined_call_operand.vmem [shape: bf16[32,256], index: 6, kind: input, shape index: {}]
  %s7 = inlined_call_operand.vmem [shape: bf16[32,256], index: 7, kind: input, shape index: {}]
  %s8 = inlined_call_operand.vmem [shape: bf16[256,128], index: 8, kind: input, shape index: {}]
  %s9 = inlined_call_operand.vmem [shape: bf16[256,32], index: 9, kind: input, shape index: {}]
  %s10 = inlined_call_operand.hbm [shape: f32[256,128], index: 10, kind: output, shape index: {}]
  %s11 = sld [smem:[#allocation0]]
  $region245: #{tpu_custom_call.1} parent=0
    _
  %s13 = ssub.s32 1, %s11
  %s14 = scalar_select 0, %s13, %s11
  $region1: #{tpu_custom_call.1} parent=0
    #allocation5 [shape = 'u8[69632]{0}', space=vmem, size = 0x11000, scoped, tag = 'input window, operand 4']
    #allocation6 [shape = 'u8[69632]{0}', space=vmem, size = 0x11000, scoped, tag = 'input window, operand 5']
    #allocation7 [shape = 'u8[16384]{0}', space=vmem, size = 0x4000, scoped, tag = 'input window, operand 6']
    #allocation8 [shape = 'u8[16384]{0}', space=vmem, size = 0x4000, scoped, tag = 'input window, operand 7']
    #allocation9 [shape = 'u8[131072]{0}', space=vmem, size = 0x20000, scoped, tag = 'output window, operand 0']
    #allocation10 [shape = 's32[2]{0}', space=sflag, size = 0x8, scoped, tag = 'scoped memory for tpu_custom_call.1']
    %15 = vsyncpa [#allocation10], 0
    %s16 = scalar_lea.sflag [#allocation10], 1
    %17 = vsyncpa %s16, 0
    loop: start=0, step=1, limit=6
    $region2: #{tpu_custom_call.1} parent=1 // loop_pre_header
      _
    $region3: #{tpu_custom_call.1} parent=1 // loop_header
      %s19 = sphi 0, %s23
      %p20 = scmp.ge.s32.totalorder %s19, 6
      %s26 = sphi 0, %s38
      %s27 = sphi 0, %s34
      %s28 = sphi 0, %s26
      %s29 = sphi 0, %s27
      %s30 = sphi 0, %s28
      %s31 = sphi 0, %s29
      %s41 = sphi 0, %s43
      %s44 = sphi 0, %s41
      %s45 = sphi 0, %s44
      %s61 = sphi 0, %s45
      %s67 = sphi 0, %s69
      %s70 = sphi 0, %s67
      %s71 = sphi 0, %s70
      %s87 = sphi 0, %s71
      %s91 = sphi 0, %s91
      %s93 = sphi 0, %s91
      %s94 = sphi 0, %s93
      %s108 = sphi 0, %s94
      %s112 = sphi 0, %s112
      %s114 = sphi 0, %s112
      %s115 = sphi 0, %s114
      %s129 = sphi 0, %s115
      %s135 = sphi 0, %s137
      %s138 = sphi 0, %s135
      %s139 = sphi 0, %s138
      %s155 = sphi 0, %s139
      %s161 = sphi 0, %s163
      %s164 = sphi 0, %s161
      %s165 = sphi 0, %s164
      %s181 = sphi 0, %s165
      %s187 = sphi 0, %s189
      %s190 = sphi 0, %s187
      %s191 = sphi 0, %s190
      %s207 = sphi 0, %s191
      %s213 = sphi 0, %s215
      %s216 = sphi 0, %s213
      %s217 = sphi 0, %s216
      %s233 = sphi 0, %s217
      %s239 = sphi 0, %s241
      %s242 = sphi 0, %s239
      %s243 = sphi 0, %s242
      %s259 = sphi 0, %s243
      %s265 = sphi 0, %s267
      %s268 = sphi 0, %s265
      %s269 = sphi 0, %s268
      %s285 = sphi 0, %s269
      %s291 = sphi 0, %s293
      %s294 = sphi 0, %s291
      %s295 = sphi 0, %s294
      %s311 = sphi 0, %s295
    $region4: #{tpu_custom_call.1} parent=1 // loop_header_branch
      %22 = sbr.rel (%p20) target = $region8
    $region5: #{tpu_custom_call.1} parent=1 // loop_body
      %s24 = ssub.s32 %s19, 1
      %s25 = ssub.s32 %s19, 2
      %s32 = sadd.s32 1, %s27
      %p33 = scmp.ge.s32.totalorder %s32, 2
      %s34 = scalar_select %p33, 0, %s32
      %s35 = sadd.s32 1, %s26
      %s36 = scalar_select %p33, %s35, %s26
      %p37 = scmp.ge.s32.totalorder %s36, 2
      %s38 = scalar_select %p37, 0, %s36
      %s39 = ssub.s32 %s26, %s38
      %p40 = scmp.eq.s32.totalorder %s39, 0
      %s42 = sadd.s32 %s41, 1
      %s43 = scalar_select %p40, %s41, %s42
      %p46 = pneg %p40
      %p47 = scmp.eq.s32.totalorder %s19, 3
      %p48 = por %p46, %p47
      %p49 = scmp.ne.s32.totalorder %s41, %s44
      %p50 = scmp.eq.s32.totalorder %s19, 0
      %p51 = por %p49, %p50
      %p52 = scmp.ne.s32.totalorder %s41, %s44
      %p53 = scmp.eq.s32.totalorder %s24, 3
      %p54 = por %p52, %p53
      %p55 = scmp.ne.s32.totalorder %s44, %s45
      %p56 = scmp.eq.s32.totalorder %s24, 0
      %p57 = por %p55, %p56
      %p58 = scmp.ne.s32.totalorder %s44, %s45
      %p59 = scmp.eq.s32.totalorder %s25, 3
      %p60 = por %p58, %p59
      %p62 = scmp.ne.s32.totalorder %s45, %s61
      %p63 = scmp.eq.s32.totalorder %s25, 0
      %p64 = por %p62, %p63
      %s65 = ssub.s32 %s26, %s38
      %p66 = scmp.eq.s32.totalorder %s65, 0
      %s68 = sadd.s32 %s67, 1
      %s69 = scalar_select %p66, %s67, %s68
      %p72 = pneg %p66
      %p73 = scmp.eq.s32.totalorder %s19, 3
      %p74 = por %p72, %p73
      %p75 = scmp.ne.s32.totalorder %s67, %s70
      %p76 = scmp.eq.s32.totalorder %s19, 0
      %p77 = por %p75, %p76
      %p78 = scmp.ne.s32.totalorder %s67, %s70
      %p79 = scmp.eq.s32.totalorder %s24, 3
      %p80 = por %p78, %p79
      %p81 = scmp.ne.s32.totalorder %s70, %s71
      %p82 = scmp.eq.s32.totalorder %s24, 0
      %p83 = por %p81, %p82
      %p84 = scmp.ne.s32.totalorder %s70, %s71
      %p85 = scmp.eq.s32.totalorder %s25, 3
      %p86 = por %p84, %p85
      %p88 = scmp.ne.s32.totalorder %s71, %s87
      %p89 = scmp.eq.s32.totalorder %s25, 0
      %p90 = por %p88, %p89
      %s92 = sadd.s32 %s91, 1
      %p95 = scmp.eq.s32.totalorder %s19, 3
      %p96 = scmp.ne.s32.totalorder %s91, %s93
      %p97 = scmp.eq.s32.totalorder %s19, 0
      %p98 = por %p96, %p97
      %p99 = scmp.ne.s32.totalorder %s91, %s93
      %p100 = scmp.eq.s32.totalorder %s24, 3
      %p101 = por %p99, %p100
      %p102 = scmp.ne.s32.totalorder %s93, %s94
      %p103 = scmp.eq.s32.totalorder %s24, 0
      %p104 = por %p102, %p103
      %p105 = scmp.ne.s32.totalorder %s93, %s94
      %p106 = scmp.eq.s32.totalorder %s25, 3
      %p107 = por %p105, %p106
      %p109 = scmp.ne.s32.totalorder %s94, %s108
      %p110 = scmp.eq.s32.totalorder %s25, 0
      %p111 = por %p109, %p110
      %s113 = sadd.s32 %s112, 1
      %p116 = scmp.eq.s32.totalorder %s19, 3
      %p117 = scmp.ne.s32.totalorder %s112, %s114
      %p118 = scmp.eq.s32.totalorder %s19, 0
      %p119 = por %p117, %p118
      %p120 = scmp.ne.s32.totalorder %s112, %s114
      %p121 = scmp.eq.s32.totalorder %s24, 3
      %p122 = por %p120, %p121
      %p123 = scmp.ne.s32.totalorder %s114, %s115
      %p124 = scmp.eq.s32.totalorder %s24, 0
      %p125 = por %p123, %p124
      %p126 = scmp.ne.s32.totalorder %s114, %s115
      %p127 = scmp.eq.s32.totalorder %s25, 3
      %p128 = por %p126, %p127
      %p130 = scmp.ne.s32.totalorder %s115, %s129
      %p131 = scmp.eq.s32.totalorder %s25, 0
      %p132 = por %p130, %p131
      %s133 = ssub.s32 %s27, %s34
      %p134 = scmp.eq.s32.totalorder %s133, 0
      %s136 = sadd.s32 %s135, 1
      %s137 = scalar_select %p134, %s135, %s136
      %p140 = pneg %p134
      %p141 = scmp.eq.s32.totalorder %s19, 3
      %p142 = por %p140, %p141
      %p143 = scmp.ne.s32.totalorder %s135, %s138
      %p144 = scmp.eq.s32.totalorder %s19, 0
      %p145 = por %p143, %p144
      %p146 = scmp.ne.s32.totalorder %s135, %s138
      %p147 = scmp.eq.s32.totalorder %s24, 3
      %p148 = por %p146, %p147
      %p149 = scmp.ne.s32.totalorder %s138, %s139
      %p150 = scmp.eq.s32.totalorder %s24, 0
      %p151 = por %p149, %p150
      %p152 = scmp.ne.s32.totalorder %s138, %s139
      %p153 = scmp.eq.s32.totalorder %s25, 3
      %p154 = por %p152, %p153
      %p156 = scmp.ne.s32.totalorder %s139, %s155
      %p157 = scmp.eq.s32.totalorder %s25, 0
      %p158 = por %p156, %p157
      %s159 = ssub.s32 %s27, %s34
      %p160 = scmp.eq.s32.totalorder %s159, 0
      %s162 = sadd.s32 %s161, 1
      %s163 = scalar_select %p160, %s161, %s162
      %p166 = pneg %p160
      %p167 = scmp.eq.s32.totalorder %s19, 3
      %p168 = por %p166, %p167
      %p169 = scmp.ne.s32.totalorder %s161, %s164
      %p170 = scmp.eq.s32.totalorder %s19, 0
      %p171 = por %p169, %p170
      %p172 = scmp.ne.s32.totalorder %s161, %s164
      %p173 = scmp.eq.s32.totalorder %s24, 3
      %p174 = por %p172, %p173
      %p175 = scmp.ne.s32.totalorder %s164, %s165
      %p176 = scmp.eq.s32.totalorder %s24, 0
      %p177 = por %p175, %p176
      %p178 = scmp.ne.s32.totalorder %s164, %s165
      %p179 = scmp.eq.s32.totalorder %s25, 3
      %p180 = por %p178, %p179
      %p182 = scmp.ne.s32.totalorder %s165, %s181
      %p183 = scmp.eq.s32.totalorder %s25, 0
      %p184 = por %p182, %p183
      %s185 = ssub.s32 %s27, %s34
      %p186 = scmp.eq.s32.totalorder %s185, 0
      %s188 = sadd.s32 %s187, 1
      %s189 = scalar_select %p186, %s187, %s188
      %p192 = pneg %p186
      %p193 = scmp.eq.s32.totalorder %s19, 3
      %p194 = por %p192, %p193
      %p195 = scmp.ne.s32.totalorder %s187, %s190
      %p196 = scmp.eq.s32.totalorder %s19, 0
      %p197 = por %p195, %p196
      %p198 = scmp.ne.s32.totalorder %s187, %s190
      %p199 = scmp.eq.s32.totalorder %s24, 3
      %p200 = por %p198, %p199
      %p201 = scmp.ne.s32.totalorder %s190, %s191
      %p202 = scmp.eq.s32.totalorder %s24, 0
      %p203 = por %p201, %p202
      %p204 = scmp.ne.s32.totalorder %s190, %s191
      %p205 = scmp.eq.s32.totalorder %s25, 3
      %p206 = por %p204, %p205
      %p208 = scmp.ne.s32.totalorder %s191, %s207
      %p209 = scmp.eq.s32.totalorder %s25, 0
      %p210 = por %p208, %p209
      %s211 = ssub.s32 %s27, %s34
      %p212 = scmp.eq.s32.totalorder %s211, 0
      %s214 = sadd.s32 %s213, 1
      %s215 = scalar_select %p212, %s213, %s214
      %p218 = pneg %p212
      %p219 = scmp.eq.s32.totalorder %s19, 3
      %p220 = por %p218, %p219
      %p221 = scmp.ne.s32.totalorder %s213, %s216
      %p222 = scmp.eq.s32.totalorder %s19, 0
      %p223 = por %p221, %p222
      %p224 = scmp.ne.s32.totalorder %s213, %s216
      %p225 = scmp.eq.s32.totalorder %s24, 3
      %p226 = por %p224, %p225
      %p227 = scmp.ne.s32.totalorder %s216, %s217
      %p228 = scmp.eq.s32.totalorder %s24, 0
      %p229 = por %p227, %p228
      %p230 = scmp.ne.s32.totalorder %s216, %s217
      %p231 = scmp.eq.s32.totalorder %s25, 3
      %p232 = por %p230, %p231
      %p234 = scmp.ne.s32.totalorder %s217, %s233
      %p235 = scmp.eq.s32.totalorder %s25, 0
      %p236 = por %p234, %p235
      %s237 = ssub.s32 %s27, %s34
      %p238 = scmp.eq.s32.totalorder %s237, 0
      %s240 = sadd.s32 %s239, 1
      %s241 = scalar_select %p238, %s239, %s240
      %p244 = pneg %p238
      %p245 = scmp.eq.s32.totalorder %s19, 3
      %p246 = por %p244, %p245
      %p247 = scmp.ne.s32.totalorder %s239, %s242
      %p248 = scmp.eq.s32.totalorder %s19, 0
      %p249 = por %p247, %p248
      %p250 = scmp.ne.s32.totalorder %s239, %s242
      %p251 = scmp.eq.s32.totalorder %s24, 3
      %p252 = por %p250, %p251
      %p253 = scmp.ne.s32.totalorder %s242, %s243
      %p254 = scmp.eq.s32.totalorder %s24, 0
      %p255 = por %p253, %p254
      %p256 = scmp.ne.s32.totalorder %s242, %s243
      %p257 = scmp.eq.s32.totalorder %s25, 3
      %p258 = por %p256, %p257
      %p260 = scmp.ne.s32.totalorder %s243, %s259
      %p261 = scmp.eq.s32.totalorder %s25, 0
      %p262 = por %p260, %p261
      %s263 = ssub.s32 %s27, %s34
      %p264 = scmp.eq.s32.totalorder %s263, 0
      %s266 = sadd.s32 %s265, 1
      %s267 = scalar_select %p264, %s265, %s266
      %p270 = pneg %p264
      %p271 = scmp.eq.s32.totalorder %s19, 3
      %p272 = por %p270, %p271
      %p273 = scmp.ne.s32.totalorder %s265, %s268
      %p274 = scmp.eq.s32.totalorder %s19, 0
      %p275 = por %p273, %p274
      %p276 = scmp.ne.s32.totalorder %s265, %s268
      %p277 = scmp.eq.s32.totalorder %s24, 3
      %p278 = por %p276, %p277
      %p279 = scmp.ne.s32.totalorder %s268, %s269
      %p280 = scmp.eq.s32.totalorder %s24, 0
      %p281 = por %p279, %p280
      %p282 = scmp.ne.s32.totalorder %s268, %s269
      %p283 = scmp.eq.s32.totalorder %s25, 3
      %p284 = por %p282, %p283
      %p286 = scmp.ne.s32.totalorder %s269, %s285
      %p287 = scmp.eq.s32.totalorder %s25, 0
      %p288 = por %p286, %p287
      %s289 = ssub.s32 %s26, %s38
      %p290 = scmp.eq.s32.totalorder %s289, 0
      %s292 = sadd.s32 %s291, 1
      %s293 = scalar_select %p290, %s291, %s292
      %p296 = pneg %p290
      %p297 = scmp.eq.s32.totalorder %s19, 3
      %p298 = por %p296, %p297
      %p299 = scmp.ne.s32.totalorder %s291, %s294
      %p300 = scmp.eq.s32.totalorder %s19, 0
      %p301 = por %p299, %p300
      %p302 = scmp.ne.s32.totalorder %s291, %s294
      %p303 = scmp.eq.s32.totalorder %s24, 3
      %p304 = por %p302, %p303
      %p305 = scmp.ne.s32.totalorder %s294, %s295
      %p306 = scmp.eq.s32.totalorder %s24, 0
      %p307 = por %p305, %p306
      %p308 = scmp.ne.s32.totalorder %s294, %s295
      %p309 = scmp.eq.s32.totalorder %s25, 3
      %p310 = por %p308, %p309
      %p312 = scmp.ne.s32.totalorder %s295, %s311
      %p313 = scmp.eq.s32.totalorder %s25, 0
      %p314 = por %p312, %p313
      %p315 = scmp.le.s32.totalorder 1, %s19
      %p316 = scmp.lt.s32.totalorder %s19, 5
      %p317 = pnand %p315, %p316
      %p318 = pneg %p317
      // Predicated region
      $region9: #{tpu_custom_call.1} parent=5 // pred_check
        _
      $region10: #{tpu_custom_call.1} parent=5 // pred_check_branch
        %320 = sbr.rel (%p317) target = $region12
      $region11: #{tpu_custom_call.1} parent=5 // pred_region
        %s321 = ssub.s32 %s19, 1
        // Predicated region
        $region13: #{tpu_custom_call.1} parent=11 // pred_check
          %p322 = pneg %p104
        $region14: #{tpu_custom_call.1} parent=11 // pred_check_branch
          %324 = sbr.rel (%p322) target = $region16
        $region15: #{tpu_custom_call.1} parent=11 // pred_region
          _
        $region16: #{tpu_custom_call.1} parent=11 // pred_fallthru
          _
        // Predicated region
        $region17: #{tpu_custom_call.1} parent=11 // pred_check
          %p325 = pneg %p125
        $region18: #{tpu_custom_call.1} parent=11 // pred_check_branch
          %327 = sbr.rel (%p325) target = $region20
        $region19: #{tpu_custom_call.1} parent=11 // pred_region
          _
        $region20: #{tpu_custom_call.1} parent=11 // pred_fallthru
          _
      $region12: #{tpu_custom_call.1} parent=5 // pred_fallthru
        _
      %p328 = scmp.lt.s32.totalorder %s19, 4
      // Predicated region
      $region21: #{tpu_custom_call.1} parent=5 // pred_check
        %p329 = pneg %p328
      $region22: #{tpu_custom_call.1} parent=5 // pred_check_branch
        %331 = sbr.rel (%p329) target = $region24
      $region23: #{tpu_custom_call.1} parent=5 // pred_region
        // Predicated region
        $region25: #{tpu_custom_call.1} parent=23 // pred_check
          %p332 = pneg %p51
        $region26: #{tpu_custom_call.1} parent=23 // pred_check_branch
          %334 = sbr.rel (%p332) target = $region28
        $region27: #{tpu_custom_call.1} parent=23 // pred_region
          %s335 = smul.u32 16, %s26
          %p336 = scmp.lt.s32.totalorder %s335, 31
          %s337 = scalar_select %p336, %s335, 31
          %s338 = smul.addr %s337, 2
          %s339 = smul.addr %s338, 4
          %s340 = scalar_lea.vmem %s0, %s339
          %s341 = smul.u32 16, %s26
        $region28: #{tpu_custom_call.1} parent=23 // pred_fallthru
          _
        // Predicated region
        $region29: #{tpu_custom_call.1} parent=23 // pred_check
          %p342 = pneg %p77
        $region30: #{tpu_custom_call.1} parent=23 // pred_check_branch
          %344 = sbr.rel (%p342) target = $region32
        $region31: #{tpu_custom_call.1} parent=23 // pred_region
          %s345 = smul.u32 16, %s26
          %p346 = scmp.lt.s32.totalorder %s345, 31
          %s347 = scalar_select %p346, %s345, 31
          %s348 = smul.addr %s347, 8
          %s349 = scalar_lea.vmem %s1, %s348
          %s350 = smul.u32 16, %s26
        $region32: #{tpu_custom_call.1} parent=23 // pred_fallthru
          _
        // Predicated region
        $region33: #{tpu_custom_call.1} parent=23 // pred_check
          %p351 = pneg %p145
        $region34: #{tpu_custom_call.1} parent=23 // pred_check_branch
          %353 = sbr.rel (%p351) target = $region36
        $region35: #{tpu_custom_call.1} parent=23 // pred_region
          %s354 = sand.u32 %s135, 1
          %s355 = sand.u32 %s135, 1
          %s356 = smul.addr %s355, 68
          %s357 = scalar_lea.vmem [#allocation5], %s356
          %s358 = smul.addr %s27, 4
          %s359 = scalar_lea.vmem %s4, %s358
          // Predicated region
          $region37: #{tpu_custom_call.1} parent=35 // pred_check
            _
          $region38: #{tpu_custom_call.1} parent=35 // pred_check_branch
            %361 = sbr.rel (0) target = $region40
          $region39: #{tpu_custom_call.1} parent=35 // pred_region
            // Predicated region
            $region41: #{tpu_custom_call.1} parent=39 // pred_check
              _
            $region42: #{tpu_custom_call.1} parent=39 // pred_check_branch
              %363 = sbr.rel target = $region44
            $region43: #{tpu_custom_call.1} parent=39 // pred_region
              // Predicated region
              $region56: #{tpu_custom_call.1} parent=43 // pred_check
                _
              $region57: #{tpu_custom_call.1} parent=43 // pred_check_branch
                %411 = sbr.rel (0) target = $region59
              $region58: #{tpu_custom_call.1} parent=43 // pred_region
                loop: start=0, step=1, limit=1
                $region60: #{tpu_custom_call.1} parent=58 // loop_pre_header
                  _
                $region61: #{tpu_custom_call.1} parent=58 // loop_header
                  %s413 = sphi 0, %s417
                  %p414 = scmp.ge.s32.totalorder %s413, 1
                  %s418 = sphi %s359, %s359
                  %s419 = sphi %s357, %s357
                $region62: #{tpu_custom_call.1} parent=58 // loop_header_branch
                  %416 = sbr.rel (%p414) target = $region66
                $region63: #{tpu_custom_call.1} parent=58 // loop_body
                  _
                $region64: #{tpu_custom_call.1} parent=58 // loop_footer
                  %s417 = sadd.s32 1, %s413
                $region65: #{tpu_custom_call.1} parent=58 // loop_footer_branch
                  %412 = sbr.rel target = $region61
                $region66: #{tpu_custom_call.1} parent=58 // loop_exit
                  _
                %s421 = ssub.s32 16, 1
                loop: start=0, step=1, limit=1
                $region67: #{tpu_custom_call.1} parent=58 // loop_pre_header
                  _
                $region68: #{tpu_custom_call.1} parent=58 // loop_header
                  %s423 = sphi 0, %s427
                  %p424 = scmp.ge.s32.totalorder %s423, 1
                  %s428 = sphi %s359, %s359
                  %s429 = sphi %s357, %s357
                $region69: #{tpu_custom_call.1} parent=58 // loop_header_branch
                  %426 = sbr.rel (%p424) target = $region73
                $region70: #{tpu_custom_call.1} parent=58 // loop_body
                  %v430 = vld [vmem:[%s428] sm:%s421]
                  %431 = vst [vmem:[%s429] sm:%s421] %v430
                  %v432 = vld [vmem:[%s428 + $0x8] sm:%s421]
                  %433 = vst [vmem:[%s429 + $0x4] sm:%s421] %v432
                  %v434 = vld [vmem:[%s428 + $0x10] sm:%s421]
                  %435 = vst [vmem:[%s429 + $0x8] sm:%s421] %v434
                  %v436 = vld [vmem:[%s428 + $0x18] sm:%s421]
                  %437 = vst [vmem:[%s429 + $0xc] sm:%s421] %v436
                  %v438 = vld [vmem:[%s428 + $0x20] sm:%s421]
                  %439 = vst [vmem:[%s429 + $0x10] sm:%s421] %v438
                  %v440 = vld [vmem:[%s428 + $0x28] sm:%s421]
                  %441 = vst [vmem:[%s429 + $0x14] sm:%s421] %v440
                  %v442 = vld [vmem:[%s428 + $0x30] sm:%s421]
                  %443 = vst [vmem:[%s429 + $0x18] sm:%s421] %v442
                  %v444 = vld [vmem:[%s428 + $0x38] sm:%s421]
                  %445 = vst [vmem:[%s429 + $0x1c] sm:%s421] %v444
                  %v446 = vld [vmem:[%s428 + $0x40] sm:%s421]
                  %447 = vst [vmem:[%s429 + $0x20] sm:%s421] %v446
                  %v448 = vld [vmem:[%s428 + $0x48] sm:%s421]
                  %449 = vst [vmem:[%s429 + $0x24] sm:%s421] %v448
                  %v450 = vld [vmem:[%s428 + $0x50] sm:%s421]
                  %451 = vst [vmem:[%s429 + $0x28] sm:%s421] %v450
                  %v452 = vld [vmem:[%s428 + $0x58] sm:%s421]
                  %453 = vst [vmem:[%s429 + $0x2c] sm:%s421] %v452
                  %v454 = vld [vmem:[%s428 + $0x60] sm:%s421]
                  %455 = vst [vmem:[%s429 + $0x30] sm:%s421] %v454
                  %v456 = vld [vmem:[%s428 + $0x68] sm:%s421]
                  %457 = vst [vmem:[%s429 + $0x34] sm:%s421] %v456
                  %v458 = vld [vmem:[%s428 + $0x70] sm:%s421]
                  %459 = vst [vmem:[%s429 + $0x38] sm:%s421] %v458
                  %v460 = vld [vmem:[%s428 + $0x78] sm:%s421]
                  %461 = vst [vmem:[%s429 + $0x3c] sm:%s421] %v460
                  %v462 = vld [vmem:[%s428 + $0x80] sm:%s421]
                  %463 = vst [vmem:[%s429 + $0x40] sm:%s421] %v462
                $region71: #{tpu_custom_call.1} parent=58 // loop_footer
                  %s427 = sadd.s32 1, %s423
                $region72: #{tpu_custom_call.1} parent=58 // loop_footer_branch
                  %422 = sbr.rel target = $region68
                $region73: #{tpu_custom_call.1} parent=58 // loop_exit
                  _
              $region59: #{tpu_custom_call.1} parent=43 // pred_fallthru
                _
            $region44: #{tpu_custom_call.1} parent=39 // pred_fallthru
              _
            // Predicated region
            $region45: #{tpu_custom_call.1} parent=39 // pred_check
              _
            $region46: #{tpu_custom_call.1} parent=39 // pred_check_branch
              %365 = sbr.rel (0) target = $region48
            $region47: #{tpu_custom_call.1} parent=39 // pred_region
              %s367 = ssub.s32 16, 1
              loop: start=0, step=1, limit=1
              $region49: #{tpu_custom_call.1} parent=47 // loop_pre_header
                _
              $region50: #{tpu_custom_call.1} parent=47 // loop_header
                %s369 = sphi 0, %s373
                %p370 = scmp.ge.s32.totalorder %s369, 1
                %s374 = sphi %s359, %s359
                %s375 = sphi %s357, %s357
              $region51: #{tpu_custom_call.1} parent=47 // loop_header_branch
                %372 = sbr.rel (%p370) target = $region55
              $region52: #{tpu_custom_call.1} parent=47 // loop_body
                %v376 = vld [vmem:[%s374] sm:%s367]
                %377 = vst [vmem:[%s375] sm:%s367] %v376
                %v378 = vld [vmem:[%s374 + $0x8] sm:%s367]
                %379 = vst [vmem:[%s375 + $0x4] sm:%s367] %v378
                %v380 = vld [vmem:[%s374 + $0x10] sm:%s367]
                %381 = vst [vmem:[%s375 + $0x8] sm:%s367] %v380
                %v382 = vld [vmem:[%s374 + $0x18] sm:%s367]
                %383 = vst [vmem:[%s375 + $0xc] sm:%s367] %v382
                %v384 = vld [vmem:[%s374 + $0x20] sm:%s367]
                %385 = vst [vmem:[%s375 + $0x10] sm:%s367] %v384
                %v386 = vld [vmem:[%s374 + $0x28] sm:%s367]
                %387 = vst [vmem:[%s375 + $0x14] sm:%s367] %v386
                %v388 = vld [vmem:[%s374 + $0x30] sm:%s367]
                %389 = vst [vmem:[%s375 + $0x18] sm:%s367] %v388
                %v390 = vld [vmem:[%s374 + $0x38] sm:%s367]
                %391 = vst [vmem:[%s375 + $0x1c] sm:%s367] %v390
                %v392 = vld [vmem:[%s374 + $0x40] sm:%s367]
                %393 = vst [vmem:[%s375 + $0x20] sm:%s367] %v392
                %v394 = vld [vmem:[%s374 + $0x48] sm:%s367]
                %395 = vst [vmem:[%s375 + $0x24] sm:%s367] %v394
                %v396 = vld [vmem:[%s374 + $0x50] sm:%s367]
                %397 = vst [vmem:[%s375 + $0x28] sm:%s367] %v396
                %v398 = vld [vmem:[%s374 + $0x58] sm:%s367]
                %399 = vst [vmem:[%s375 + $0x2c] sm:%s367] %v398
                %v400 = vld [vmem:[%s374 + $0x60] sm:%s367]
                %401 = vst [vmem:[%s375 + $0x30] sm:%s367] %v400
                %v402 = vld [vmem:[%s374 + $0x68] sm:%s367]
                %403 = vst [vmem:[%s375 + $0x34] sm:%s367] %v402
                %v404 = vld [vmem:[%s374 + $0x70] sm:%s367]
                %405 = vst [vmem:[%s375 + $0x38] sm:%s367] %v404
                %v406 = vld [vmem:[%s374 + $0x78] sm:%s367]
                %407 = vst [vmem:[%s375 + $0x3c] sm:%s367] %v406
                %v408 = vld [vmem:[%s374 + $0x80] sm:%s367]
                %409 = vst [vmem:[%s375 + $0x40] sm:%s367] %v408
              $region53: #{tpu_custom_call.1} parent=47 // loop_footer
                %s373 = sadd.s32 1, %s369
              $region54: #{tpu_custom_call.1} parent=47 // loop_footer_branch
                %368 = sbr.rel target = $region50
              $region55: #{tpu_custom_call.1} parent=47 // loop_exit
                _
            $region48: #{tpu_custom_call.1} parent=39 // pred_fallthru
              _
          $region40: #{tpu_custom_call.1} parent=35 // pred_fallthru
            _
          %464 = vnop
        $region36: #{tpu_custom_call.1} parent=23 // pred_fallthru
          _
        // Predicated region
        $region74: #{tpu_custom_call.1} parent=23 // pred_check
          %p465 = pneg %p171
        $region75: #{tpu_custom_call.1} parent=23 // pred_check_branch
          %467 = sbr.rel (%p465) target = $region77
        $region76: #{tpu_custom_call.1} parent=23 // pred_region
          %s468 = sand.u32 %s161, 1
          %s469 = sand.u32 %s161, 1
          %s470 = smul.addr %s469, 68
          %s471 = scalar_lea.vmem [#allocation6], %s470
          %s472 = smul.addr %s27, 4
          %s473 = scalar_lea.vmem %s5, %s472
          // Predicated region
          $region78: #{tpu_custom_call.1} parent=76 // pred_check
            _
          $region79: #{tpu_custom_call.1} parent=76 // pred_check_branch
            %475 = sbr.rel (0) target = $region81
          $region80: #{tpu_custom_call.1} parent=76 // pred_region
            // Predicated region
            $region82: #{tpu_custom_call.1} parent=80 // pred_check
              _
            $region83: #{tpu_custom_call.1} parent=80 // pred_check_branch
              %477 = sbr.rel target = $region85
            $region84: #{tpu_custom_call.1} parent=80 // pred_region
              // Predicated region
              $region97: #{tpu_custom_call.1} parent=84 // pred_check
                _
              $region98: #{tpu_custom_call.1} parent=84 // pred_check_branch
                %525 = sbr.rel (0) target = $region100
              $region99: #{tpu_custom_call.1} parent=84 // pred_region
                loop: start=0, step=1, limit=1
                $region101: #{tpu_custom_call.1} parent=99 // loop_pre_header
                  _
                $region102: #{tpu_custom_call.1} parent=99 // loop_header
                  %s527 = sphi 0, %s531
                  %p528 = scmp.ge.s32.totalorder %s527, 1
                  %s532 = sphi %s473, %s473
                  %s533 = sphi %s471, %s471
                $region103: #{tpu_custom_call.1} parent=99 // loop_header_branch
                  %530 = sbr.rel (%p528) target = $region107
                $region104: #{tpu_custom_call.1} parent=99 // loop_body
                  _
                $region105: #{tpu_custom_call.1} parent=99 // loop_footer
                  %s531 = sadd.s32 1, %s527
                $region106: #{tpu_custom_call.1} parent=99 // loop_footer_branch
                  %526 = sbr.rel target = $region102
                $region107: #{tpu_custom_call.1} parent=99 // loop_exit
                  _
                %s535 = ssub.s32 16, 1
                loop: start=0, step=1, limit=1
                $region108: #{tpu_custom_call.1} parent=99 // loop_pre_header
                  _
                $region109: #{tpu_custom_call.1} parent=99 // loop_header
                  %s537 = sphi 0, %s541
                  %p538 = scmp.ge.s32.totalorder %s537, 1
                  %s542 = sphi %s473, %s473
                  %s543 = sphi %s471, %s471
                $region110: #{tpu_custom_call.1} parent=99 // loop_header_branch
                  %540 = sbr.rel (%p538) target = $region114
                $region111: #{tpu_custom_call.1} parent=99 // loop_body
                  %v544 = vld [vmem:[%s542] sm:%s535]
                  %545 = vst [vmem:[%s543] sm:%s535] %v544
                  %v546 = vld [vmem:[%s542 + $0x8] sm:%s535]
                  %547 = vst [vmem:[%s543 + $0x4] sm:%s535] %v546
                  %v548 = vld [vmem:[%s542 + $0x10] sm:%s535]
                  %549 = vst [vmem:[%s543 + $0x8] sm:%s535] %v548
                  %v550 = vld [vmem:[%s542 + $0x18] sm:%s535]
                  %551 = vst [vmem:[%s543 + $0xc] sm:%s535] %v550
                  %v552 = vld [vmem:[%s542 + $0x20] sm:%s535]
                  %553 = vst [vmem:[%s543 + $0x10] sm:%s535] %v552
                  %v554 = vld [vmem:[%s542 + $0x28] sm:%s535]
                  %555 = vst [vmem:[%s543 + $0x14] sm:%s535] %v554
                  %v556 = vld [vmem:[%s542 + $0x30] sm:%s535]
                  %557 = vst [vmem:[%s543 + $0x18] sm:%s535] %v556
                  %v558 = vld [vmem:[%s542 + $0x38] sm:%s535]
                  %559 = vst [vmem:[%s543 + $0x1c] sm:%s535] %v558
                  %v560 = vld [vmem:[%s542 + $0x40] sm:%s535]
                  %561 = vst [vmem:[%s543 + $0x20] sm:%s535] %v560
                  %v562 = vld [vmem:[%s542 + $0x48] sm:%s535]
                  %563 = vst [vmem:[%s543 + $0x24] sm:%s535] %v562
                  %v564 = vld [vmem:[%s542 + $0x50] sm:%s535]
                  %565 = vst [vmem:[%s543 + $0x28] sm:%s535] %v564
                  %v566 = vld [vmem:[%s542 + $0x58] sm:%s535]
                  %567 = vst [vmem:[%s543 + $0x2c] sm:%s535] %v566
                  %v568 = vld [vmem:[%s542 + $0x60] sm:%s535]
                  %569 = vst [vmem:[%s543 + $0x30] sm:%s535] %v568
                  %v570 = vld [vmem:[%s542 + $0x68] sm:%s535]
                  %571 = vst [vmem:[%s543 + $0x34] sm:%s535] %v570
                  %v572 = vld [vmem:[%s542 + $0x70] sm:%s535]
                  %573 = vst [vmem:[%s543 + $0x38] sm:%s535] %v572
                  %v574 = vld [vmem:[%s542 + $0x78] sm:%s535]
                  %575 = vst [vmem:[%s543 + $0x3c] sm:%s535] %v574
                  %v576 = vld [vmem:[%s542 + $0x80] sm:%s535]
                  %577 = vst [vmem:[%s543 + $0x40] sm:%s535] %v576
                $region112: #{tpu_custom_call.1} parent=99 // loop_footer
                  %s541 = sadd.s32 1, %s537
                $region113: #{tpu_custom_call.1} parent=99 // loop_footer_branch
                  %536 = sbr.rel target = $region109
                $region114: #{tpu_custom_call.1} parent=99 // loop_exit
                  _
              $region100: #{tpu_custom_call.1} parent=84 // pred_fallthru
                _
            $region85: #{tpu_custom_call.1} parent=80 // pred_fallthru
              _
            // Predicated region
            $region86: #{tpu_custom_call.1} parent=80 // pred_check
              _
            $region87: #{tpu_custom_call.1} parent=80 // pred_check_branch
              %479 = sbr.rel (0) target = $region89
            $region88: #{tpu_custom_call.1} parent=80 // pred_region
              %s481 = ssub.s32 16, 1
              loop: start=0, step=1, limit=1
              $region90: #{tpu_custom_call.1} parent=88 // loop_pre_header
                _
              $region91: #{tpu_custom_call.1} parent=88 // loop_header
                %s483 = sphi 0, %s487
                %p484 = scmp.ge.s32.totalorder %s483, 1
                %s488 = sphi %s473, %s473
                %s489 = sphi %s471, %s471
              $region92: #{tpu_custom_call.1} parent=88 // loop_header_branch
                %486 = sbr.rel (%p484) target = $region96
              $region93: #{tpu_custom_call.1} parent=88 // loop_body
                %v490 = vld [vmem:[%s488] sm:%s481]
                %491 = vst [vmem:[%s489] sm:%s481] %v490
                %v492 = vld [vmem:[%s488 + $0x8] sm:%s481]
                %493 = vst [vmem:[%s489 + $0x4] sm:%s481] %v492
                %v494 = vld [vmem:[%s488 + $0x10] sm:%s481]
                %495 = vst [vmem:[%s489 + $0x8] sm:%s481] %v494
                %v496 = vld [vmem:[%s488 + $0x18] sm:%s481]
                %497 = vst [vmem:[%s489 + $0xc] sm:%s481] %v496
                %v498 = vld [vmem:[%s488 + $0x20] sm:%s481]
                %499 = vst [vmem:[%s489 + $0x10] sm:%s481] %v498
                %v500 = vld [vmem:[%s488 + $0x28] sm:%s481]
                %501 = vst [vmem:[%s489 + $0x14] sm:%s481] %v500
                %v502 = vld [vmem:[%s488 + $0x30] sm:%s481]
                %503 = vst [vmem:[%s489 + $0x18] sm:%s481] %v502
                %v504 = vld [vmem:[%s488 + $0x38] sm:%s481]
                %505 = vst [vmem:[%s489 + $0x1c] sm:%s481] %v504
                %v506 = vld [vmem:[%s488 + $0x40] sm:%s481]
                %507 = vst [vmem:[%s489 + $0x20] sm:%s481] %v506
                %v508 = vld [vmem:[%s488 + $0x48] sm:%s481]
                %509 = vst [vmem:[%s489 + $0x24] sm:%s481] %v508
                %v510 = vld [vmem:[%s488 + $0x50] sm:%s481]
                %511 = vst [vmem:[%s489 + $0x28] sm:%s481] %v510
                %v512 = vld [vmem:[%s488 + $0x58] sm:%s481]
                %513 = vst [vmem:[%s489 + $0x2c] sm:%s481] %v512
                %v514 = vld [vmem:[%s488 + $0x60] sm:%s481]
                %515 = vst [vmem:[%s489 + $0x30] sm:%s481] %v514
                %v516 = vld [vmem:[%s488 + $0x68] sm:%s481]
                %517 = vst [vmem:[%s489 + $0x34] sm:%s481] %v516
                %v518 = vld [vmem:[%s488 + $0x70] sm:%s481]
                %519 = vst [vmem:[%s489 + $0x38] sm:%s481] %v518
                %v520 = vld [vmem:[%s488 + $0x78] sm:%s481]
                %521 = vst [vmem:[%s489 + $0x3c] sm:%s481] %v520
                %v522 = vld [vmem:[%s488 + $0x80] sm:%s481]
                %523 = vst [vmem:[%s489 + $0x40] sm:%s481] %v522
              $region94: #{tpu_custom_call.1} parent=88 // loop_footer
                %s487 = sadd.s32 1, %s483
              $region95: #{tpu_custom_call.1} parent=88 // loop_footer_branch
                %482 = sbr.rel target = $region91
              $region96: #{tpu_custom_call.1} parent=88 // loop_exit
                _
            $region89: #{tpu_custom_call.1} parent=80 // pred_fallthru
              _
          $region81: #{tpu_custom_call.1} parent=76 // pred_fallthru
            _
          %578 = vnop
        $region77: #{tpu_custom_call.1} parent=23 // pred_fallthru
          _
        // Predicated region
        $region115: #{tpu_custom_call.1} parent=23 // pred_check
          %p579 = pneg %p197
        $region116: #{tpu_custom_call.1} parent=23 // pred_check_branch
          %581 = sbr.rel (%p579) target = $region118
        $region117: #{tpu_custom_call.1} parent=23 // pred_region
          %s582 = sand.u32 %s187, 1
          %s583 = sand.u32 %s187, 1
          %s584 = smul.addr %s583, 16
          %s585 = scalar_lea.vmem [#allocation7], %s584
          %s586 = smul.addr %s27, 4
          %s587 = scalar_lea.vmem %s6, %s586
          // Predicated region
          $region119: #{tpu_custom_call.1} parent=117 // pred_check
            _
          $region120: #{tpu_custom_call.1} parent=117 // pred_check_branch
            %589 = sbr.rel (0) target = $region122
          $region121: #{tpu_custom_call.1} parent=117 // pred_region
            // Predicated region
            $region123: #{tpu_custom_call.1} parent=121 // pred_check
              _
            $region124: #{tpu_custom_call.1} parent=121 // pred_check_branch
              %591 = sbr.rel target = $region126
            $region125: #{tpu_custom_call.1} parent=121 // pred_region
              // Predicated region
              $region138: #{tpu_custom_call.1} parent=125 // pred_check
                _
              $region139: #{tpu_custom_call.1} parent=125 // pred_check_branch
                %613 = sbr.rel (0) target = $region141
              $region140: #{tpu_custom_call.1} parent=125 // pred_region
                loop: start=0, step=1, limit=1
                $region142: #{tpu_custom_call.1} parent=140 // loop_pre_header
                  _
                $region143: #{tpu_custom_call.1} parent=140 // loop_header
                  %s615 = sphi 0, %s619
                  %p616 = scmp.ge.s32.totalorder %s615, 1
                  %s620 = sphi %s587, %s587
                  %s621 = sphi %s585, %s585
                $region144: #{tpu_custom_call.1} parent=140 // loop_header_branch
                  %618 = sbr.rel (%p616) target = $region148
                $region145: #{tpu_custom_call.1} parent=140 // loop_body
                  _
                $region146: #{tpu_custom_call.1} parent=140 // loop_footer
                  %s619 = sadd.s32 1, %s615
                $region147: #{tpu_custom_call.1} parent=140 // loop_footer_branch
                  %614 = sbr.rel target = $region143
                $region148: #{tpu_custom_call.1} parent=140 // loop_exit
                  _
                %s623 = ssub.s32 16, 1
                loop: start=0, step=1, limit=1
                $region149: #{tpu_custom_call.1} parent=140 // loop_pre_header
                  _
                $region150: #{tpu_custom_call.1} parent=140 // loop_header
                  %s625 = sphi 0, %s629
                  %p626 = scmp.ge.s32.totalorder %s625, 1
                  %s630 = sphi %s587, %s587
                  %s631 = sphi %s585, %s585
                $region151: #{tpu_custom_call.1} parent=140 // loop_header_branch
                  %628 = sbr.rel (%p626) target = $region155
                $region152: #{tpu_custom_call.1} parent=140 // loop_body
                  %v632 = vld [vmem:[%s630] sm:%s623]
                  %633 = vst [vmem:[%s631] sm:%s623] %v632
                  %v634 = vld [vmem:[%s630 + $0x8] sm:%s623]
                  %635 = vst [vmem:[%s631 + $0x4] sm:%s623] %v634
                  %v636 = vld [vmem:[%s630 + $0x10] sm:%s623]
                  %637 = vst [vmem:[%s631 + $0x8] sm:%s623] %v636
                  %v638 = vld [vmem:[%s630 + $0x18] sm:%s623]
                  %639 = vst [vmem:[%s631 + $0xc] sm:%s623] %v638
                $region153: #{tpu_custom_call.1} parent=140 // loop_footer
                  %s629 = sadd.s32 1, %s625
                $region154: #{tpu_custom_call.1} parent=140 // loop_footer_branch
                  %624 = sbr.rel target = $region150
                $region155: #{tpu_custom_call.1} parent=140 // loop_exit
                  _
              $region141: #{tpu_custom_call.1} parent=125 // pred_fallthru
                _
            $region126: #{tpu_custom_call.1} parent=121 // pred_fallthru
              _
            // Predicated region
            $region127: #{tpu_custom_call.1} parent=121 // pred_check
              _
            $region128: #{tpu_custom_call.1} parent=121 // pred_check_branch
              %593 = sbr.rel (0) target = $region130
            $region129: #{tpu_custom_call.1} parent=121 // pred_region
              %s595 = ssub.s32 16, 1
              loop: start=0, step=1, limit=1
              $region131: #{tpu_custom_call.1} parent=129 // loop_pre_header
                _
              $region132: #{tpu_custom_call.1} parent=129 // loop_header
                %s597 = sphi 0, %s601
                %p598 = scmp.ge.s32.totalorder %s597, 1
                %s602 = sphi %s587, %s587
                %s603 = sphi %s585, %s585
              $region133: #{tpu_custom_call.1} parent=129 // loop_header_branch
                %600 = sbr.rel (%p598) target = $region137
              $region134: #{tpu_custom_call.1} parent=129 // loop_body
                %v604 = vld [vmem:[%s602] sm:%s595]
                %605 = vst [vmem:[%s603] sm:%s595] %v604
                %v606 = vld [vmem:[%s602 + $0x8] sm:%s595]
                %607 = vst [vmem:[%s603 + $0x4] sm:%s595] %v606
                %v608 = vld [vmem:[%s602 + $0x10] sm:%s595]
                %609 = vst [vmem:[%s603 + $0x8] sm:%s595] %v608
                %v610 = vld [vmem:[%s602 + $0x18] sm:%s595]
                %611 = vst [vmem:[%s603 + $0xc] sm:%s595] %v610
              $region135: #{tpu_custom_call.1} parent=129 // loop_footer
                %s601 = sadd.s32 1, %s597
              $region136: #{tpu_custom_call.1} parent=129 // loop_footer_branch
                %596 = sbr.rel target = $region132
              $region137: #{tpu_custom_call.1} parent=129 // loop_exit
                _
            $region130: #{tpu_custom_call.1} parent=121 // pred_fallthru
              _
          $region122: #{tpu_custom_call.1} parent=117 // pred_fallthru
            _
          %640 = vnop
        $region118: #{tpu_custom_call.1} parent=23 // pred_fallthru
          _
        // Predicated region
        $region156: #{tpu_custom_call.1} parent=23 // pred_check
          %p641 = pneg %p223
        $region157: #{tpu_custom_call.1} parent=23 // pred_check_branch
          %643 = sbr.rel (%p641) target = $region159
        $region158: #{tpu_custom_call.1} parent=23 // pred_region
          %s644 = sand.u32 %s213, 1
          %s645 = sand.u32 %s213, 1
          %s646 = smul.addr %s645, 16
          %s647 = scalar_lea.vmem [#allocation8], %s646
          %s648 = smul.addr %s27, 4
          %s649 = scalar_lea.vmem %s7, %s648
          // Predicated region
          $region160: #{tpu_custom_call.1} parent=158 // pred_check
            _
          $region161: #{tpu_custom_call.1} parent=158 // pred_check_branch
            %651 = sbr.rel (0) target = $region163
          $region162: #{tpu_custom_call.1} parent=158 // pred_region
            // Predicated region
            $region164: #{tpu_custom_call.1} parent=162 // pred_check
              _
            $region165: #{tpu_custom_call.1} parent=162 // pred_check_branch
              %653 = sbr.rel target = $region167
            $region166: #{tpu_custom_call.1} parent=162 // pred_region
              // Predicated region
              $region179: #{tpu_custom_call.1} parent=166 // pred_check
                _
              $region180: #{tpu_custom_call.1} parent=166 // pred_check_branch
                %675 = sbr.rel (0) target = $region182
              $region181: #{tpu_custom_call.1} parent=166 // pred_region
                loop: start=0, step=1, limit=1
                $region183: #{tpu_custom_call.1} parent=181 // loop_pre_header
                  _
                $region184: #{tpu_custom_call.1} parent=181 // loop_header
                  %s677 = sphi 0, %s681
                  %p678 = scmp.ge.s32.totalorder %s677, 1
                  %s682 = sphi %s649, %s649
                  %s683 = sphi %s647, %s647
                $region185: #{tpu_custom_call.1} parent=181 // loop_header_branch
                  %680 = sbr.rel (%p678) target = $region189
                $region186: #{tpu_custom_call.1} parent=181 // loop_body
                  _
                $region187: #{tpu_custom_call.1} parent=181 // loop_footer
                  %s681 = sadd.s32 1, %s677
                $region188: #{tpu_custom_call.1} parent=181 // loop_footer_branch
                  %676 = sbr.rel target = $region184
                $region189: #{tpu_custom_call.1} parent=181 // loop_exit
                  _
                %s685 = ssub.s32 16, 1
                loop: start=0, step=1, limit=1
                $region190: #{tpu_custom_call.1} parent=181 // loop_pre_header
                  _
                $region191: #{tpu_custom_call.1} parent=181 // loop_header
                  %s687 = sphi 0, %s691
                  %p688 = scmp.ge.s32.totalorder %s687, 1
                  %s692 = sphi %s649, %s649
                  %s693 = sphi %s647, %s647
                $region192: #{tpu_custom_call.1} parent=181 // loop_header_branch
                  %690 = sbr.rel (%p688) target = $region196
                $region193: #{tpu_custom_call.1} parent=181 // loop_body
                  %v694 = vld [vmem:[%s692] sm:%s685]
                  %695 = vst [vmem:[%s693] sm:%s685] %v694
                  %v696 = vld [vmem:[%s692 + $0x8] sm:%s685]
                  %697 = vst [vmem:[%s693 + $0x4] sm:%s685] %v696
                  %v698 = vld [vmem:[%s692 + $0x10] sm:%s685]
                  %699 = vst [vmem:[%s693 + $0x8] sm:%s685] %v698
                  %v700 = vld [vmem:[%s692 + $0x18] sm:%s685]
                  %701 = vst [vmem:[%s693 + $0xc] sm:%s685] %v700
                $region194: #{tpu_custom_call.1} parent=181 // loop_footer
                  %s691 = sadd.s32 1, %s687
                $region195: #{tpu_custom_call.1} parent=181 // loop_footer_branch
                  %686 = sbr.rel target = $region191
                $region196: #{tpu_custom_call.1} parent=181 // loop_exit
                  _
              $region182: #{tpu_custom_call.1} parent=166 // pred_fallthru
                _
            $region167: #{tpu_custom_call.1} parent=162 // pred_fallthru
              _
            // Predicated region
            $region168: #{tpu_custom_call.1} parent=162 // pred_check
              _
            $region169: #{tpu_custom_call.1} parent=162 // pred_check_branch
              %655 = sbr.rel (0) target = $region171
            $region170: #{tpu_custom_call.1} parent=162 // pred_region
              %s657 = ssub.s32 16, 1
              loop: start=0, step=1, limit=1
              $region172: #{tpu_custom_call.1} parent=170 // loop_pre_header
                _
              $region173: #{tpu_custom_call.1} parent=170 // loop_header
                %s659 = sphi 0, %s663
                %p660 = scmp.ge.s32.totalorder %s659, 1
                %s664 = sphi %s649, %s649
                %s665 = sphi %s647, %s647
              $region174: #{tpu_custom_call.1} parent=170 // loop_header_branch
                %662 = sbr.rel (%p660) target = $region178
              $region175: #{tpu_custom_call.1} parent=170 // loop_body
                %v666 = vld [vmem:[%s664] sm:%s657]
                %667 = vst [vmem:[%s665] sm:%s657] %v666
                %v668 = vld [vmem:[%s664 + $0x8] sm:%s657]
                %669 = vst [vmem:[%s665 + $0x4] sm:%s657] %v668
                %v670 = vld [vmem:[%s664 + $0x10] sm:%s657]
                %671 = vst [vmem:[%s665 + $0x8] sm:%s657] %v670
                %v672 = vld [vmem:[%s664 + $0x18] sm:%s657]
                %673 = vst [vmem:[%s665 + $0xc] sm:%s657] %v672
              $region176: #{tpu_custom_call.1} parent=170 // loop_footer
                %s663 = sadd.s32 1, %s659
              $region177: #{tpu_custom_call.1} parent=170 // loop_footer_branch
                %658 = sbr.rel target = $region173
              $region178: #{tpu_custom_call.1} parent=170 // loop_exit
                _
            $region171: #{tpu_custom_call.1} parent=162 // pred_fallthru
              _
          $region163: #{tpu_custom_call.1} parent=158 // pred_fallthru
            _
          %702 = vnop
        $region159: #{tpu_custom_call.1} parent=23 // pred_fallthru
          _
        // Predicated region
        $region197: #{tpu_custom_call.1} parent=23 // pred_check
          %p703 = pneg %p249
        $region198: #{tpu_custom_call.1} parent=23 // pred_check_branch
          %705 = sbr.rel (%p703) target = $region200
        $region199: #{tpu_custom_call.1} parent=23 // pred_region
          %s706 = smul.u32 16, %s27
          %p707 = scmp.lt.s32.totalorder %s706, 31
          %s708 = scalar_select %p707, %s706, 31
          %s709 = smul.addr %s708, 4
          %s710 = scalar_lea.vmem %s8, %s709
          %s711 = smul.u32 16, %s27
        $region200: #{tpu_custom_call.1} parent=23 // pred_fallthru
          _
        // Predicated region
        $region201: #{tpu_custom_call.1} parent=23 // pred_check
          %p712 = pneg %p275
        $region202: #{tpu_custom_call.1} parent=23 // pred_check_branch
          %714 = sbr.rel (%p712) target = $region204
        $region203: #{tpu_custom_call.1} parent=23 // pred_region
          %s715 = smul.u32 16, %s27
          %p716 = scmp.lt.s32.totalorder %s715, 31
          %s717 = scalar_select %p716, %s715, 31
          %s718 = smul.addr %s717, 4
          %s719 = scalar_lea.vmem %s9, %s718
          %s720 = smul.u32 16, %s27
        $region204: #{tpu_custom_call.1} parent=23 // pred_fallthru
          _
      $region24: #{tpu_custom_call.1} parent=5 // pred_fallthru
        _
      %p721 = scmp.le.s32.totalorder 1, %s19
      %p722 = scmp.lt.s32.totalorder %s19, 5
      %p723 = pnand %p721, %p722
      %p724 = pneg %p723
      // Predicated region
      $region205: #{tpu_custom_call.1} parent=5 // pred_check
        _
      $region206: #{tpu_custom_call.1} parent=5 // pred_check_branch
        %726 = sbr.rel (%p723) target = $region208
      $region207: #{tpu_custom_call.1} parent=5 // pred_region
        %s727 = ssub.s32 %s19, 1
        %s728 = sand.u32 %s138, 1
        %s729 = sand.u32 %s138, 1
        %s730 = smul.addr %s729, 68
        %s731 = scalar_lea.vmem [#allocation5], %s730
        // Predicated region
        $region209: #{tpu_custom_call.1} parent=207 // pred_check
          %p732 = pneg %p151
        $region210: #{tpu_custom_call.1} parent=207 // pred_check_branch
          %734 = sbr.rel (%p732) target = $region212
        $region211: #{tpu_custom_call.1} parent=207 // pred_region
          _
        $region212: #{tpu_custom_call.1} parent=207 // pred_fallthru
          _
        %s735 = sand.u32 %s164, 1
        %s736 = sand.u32 %s164, 1
        %s737 = smul.addr %s736, 68
        %s738 = scalar_lea.vmem [#allocation6], %s737
        // Predicated region
        $region213: #{tpu_custom_call.1} parent=207 // pred_check
          %p739 = pneg %p177
        $region214: #{tpu_custom_call.1} parent=207 // pred_check_branch
          %741 = sbr.rel (%p739) target = $region216
        $region215: #{tpu_custom_call.1} parent=207 // pred_region
          _
        $region216: #{tpu_custom_call.1} parent=207 // pred_fallthru
          _
        %s742 = sand.u32 %s190, 1
        %s743 = sand.u32 %s190, 1
        %s744 = smul.addr %s743, 16
        %s745 = scalar_lea.vmem [#allocation7], %s744
        // Predicated region
        $region217: #{tpu_custom_call.1} parent=207 // pred_check
          %p746 = pneg %p203
        $region218: #{tpu_custom_call.1} parent=207 // pred_check_branch
          %748 = sbr.rel (%p746) target = $region220
        $region219: #{tpu_custom_call.1} parent=207 // pred_region
          _
        $region220: #{tpu_custom_call.1} parent=207 // pred_fallthru
          _
        %s749 = sand.u32 %s216, 1
        %s750 = sand.u32 %s216, 1
        %s751 = smul.addr %s750, 16
        %s752 = scalar_lea.vmem [#allocation8], %s751
        // Predicated region
        $region221: #{tpu_custom_call.1} parent=207 // pred_check
          %p753 = pneg %p229
        $region222: #{tpu_custom_call.1} parent=207 // pred_check_branch
          %755 = sbr.rel (%p753) target = $region224
        $region223: #{tpu_custom_call.1} parent=207 // pred_region
          _
        $region224: #{tpu_custom_call.1} parent=207 // pred_fallthru
          _
        %s756 = smul.u32 16, %s28
        %p757 = scmp.lt.s32.totalorder %s756, 31
        %s758 = scalar_select %p757, %s756, 31
        %s759 = smul.addr %s758, 2
        %s760 = smul.addr %s759, 4
        %s761 = scalar_lea.vmem %s0, %s760
        %p762 = pneg %p57
        %p763 = pneg %p54
        %s764 = smul.u32 16, %s28
        %p765 = scmp.lt.s32.totalorder %s764, 31
        %s766 = scalar_select %p765, %s764, 31
        %s767 = smul.addr %s766, 8
        %s768 = scalar_lea.vmem %s1, %s767
        %p769 = pneg %p83
        %p770 = pneg %p80
        %p771 = pneg %p104
        %p772 = pneg %p101
        %p773 = pneg %p125
        %p774 = pneg %p122
        %s775 = sand.u32 %s138, 1
        %s776 = sand.u32 %s138, 1
        %s777 = smul.addr %s776, 68
        %s778 = scalar_lea.vmem [#allocation5], %s777
        %p779 = pneg %p151
        %p780 = pneg %p148
        %s781 = sand.u32 %s164, 1
        %s782 = sand.u32 %s164, 1
        %s783 = smul.addr %s782, 68
        %s784 = scalar_lea.vmem [#allocation6], %s783
        %p785 = pneg %p177
        %p786 = pneg %p174
        %s787 = sand.u32 %s190, 1
        %s788 = sand.u32 %s190, 1
        %s789 = smul.addr %s788, 16
        %s790 = scalar_lea.vmem [#allocation7], %s789
        %p791 = pneg %p203
        %p792 = pneg %p200
        %s793 = sand.u32 %s216, 1
        %s794 = sand.u32 %s216, 1
        %s795 = smul.addr %s794, 16
        %s796 = scalar_lea.vmem [#allocation8], %s795
        %p797 = pneg %p229
        %p798 = pneg %p226
        %s799 = smul.u32 16, %s29
        %p800 = scmp.lt.s32.totalorder %s799, 31
        %s801 = scalar_select %p800, %s799, 31
        %s802 = smul.addr %s801, 4
        %s803 = scalar_lea.vmem %s8, %s802
        %p804 = pneg %p255
        %p805 = pneg %p252
        %s806 = smul.u32 16, %s29
        %p807 = scmp.lt.s32.totalorder %s806, 31
        %s808 = scalar_select %p807, %s806, 31
        %s809 = smul.addr %s808, 4
        %s810 = scalar_lea.vmem %s9, %s809
        %p811 = pneg %p281
        %p812 = pneg %p278
        %p813 = pneg %p307
        %p814 = pneg %p304
        %s815 = sand.u32 %s294, 1
        %s816 = scalar_lea.sflag [#allocation10], %s815
        %s817 = sand.u32 %s294, 1
        %s818 = smul.addr %s817, 128
        %s819 = scalar_lea.vmem [#allocation9], %s818
        %s820 = smul.u32 16, %s28
        %p821 = scmp.lt.s32.totalorder %s820, 31
        %s822 = scalar_select %p821, %s820, 31
        %s823 = smul.addr %s822, 2
        %s824 = smul.addr %s823, 4
        %s825 = scalar_lea.vmem %s0, %s824
        %s826 = smul.u32 16, %s28
        %s827 = smul.u32 16, %s28
        %p828 = scmp.lt.s32.totalorder %s827, 31
        %s829 = scalar_select %p828, %s827, 31
        %s830 = smul.addr %s829, 8
        %s831 = scalar_lea.vmem %s1, %s830
        %s832 = smul.u32 16, %s28
        %s833 = smul.u32 16, %s29
        %p834 = scmp.lt.s32.totalorder %s833, 31
        %s835 = scalar_select %p834, %s833, 31
        %s836 = smul.addr %s835, 4
        %s837 = scalar_lea.vmem %s8, %s836
        %s838 = smul.u32 16, %s29
        %s839 = smul.u32 16, %s29
        %p840 = scmp.lt.s32.totalorder %s839, 31
        %s841 = scalar_select %p840, %s839, 31
        %s842 = smul.addr %s841, 4
        %s843 = scalar_lea.vmem %s9, %s842
        %s844 = smul.u32 16, %s29
        %s845 = smul.u32 16, %s28
        %v847 = vld [vmem:[%s825] sm:$0xff]
        %v848 = vld [vmem:[%s825 + $0x8] sm:$0xff]
        %v849 = vld [vmem:[%s825 + $0x10] sm:$0xff]
        %v850 = vld [vmem:[%s825 + $0x18] sm:$0xff]
        %v851 = vld [vmem:[%s825 + $0x20] sm:$0xff]
        %v852 = vld [vmem:[%s825 + $0x28] sm:$0xff]
        %v853 = vld [vmem:[%s825 + $0x30] sm:$0xff]
        %v854 = vld [vmem:[%s825 + $0x38] sm:$0xff]
        %v855 = vld [vmem:[%s825 + $0x40] sm:$0xff]
        %v856 = vld [vmem:[%s825 + $0x48] sm:$0xff]
        %v857 = vld [vmem:[%s825 + $0x50] sm:$0xff]
        %v858 = vld [vmem:[%s825 + $0x58] sm:$0xff]
        %v859 = vld [vmem:[%s825 + $0x60] sm:$0xff]
        %v860 = vld [vmem:[%s825 + $0x68] sm:$0xff]
        %v861 = vld [vmem:[%s825 + $0x70] sm:$0xff]
        %v862 = vld [vmem:[%s825 + $0x78] sm:$0xff]
        %p863 = scmp.eq.s32.totalorder %s29, 0
        // Predicated region
        $region225: #{tpu_custom_call.1} parent=207 // pred_check
          %p864 = pneg %p863
        $region226: #{tpu_custom_call.1} parent=207 // pred_check_branch
          %866 = sbr.rel (%p864) target = $region228
        $region227: #{tpu_custom_call.1} parent=207 // pred_region
          %867 = vst [vmem:[#allocation2] sm:$0xff] 0.0
          %868 = vst [vmem:[#allocation2 + $0x8] sm:$0xff] 0.0
          %869 = vst [vmem:[#allocation2 + $0x10] sm:$0xff] 0.0
          %870 = vst [vmem:[#allocation2 + $0x18] sm:$0xff] 0.0
          %871 = vst [vmem:[#allocation2 + $0x20] sm:$0xff] 0.0
          %872 = vst [vmem:[#allocation2 + $0x28] sm:$0xff] 0.0
          %873 = vst [vmem:[#allocation2 + $0x30] sm:$0xff] 0.0
          %874 = vst [vmem:[#allocation2 + $0x38] sm:$0xff] 0.0
          %875 = vst [vmem:[#allocation2 + $0x40] sm:$0xff] 0.0
          %876 = vst [vmem:[#allocation2 + $0x48] sm:$0xff] 0.0
          %877 = vst [vmem:[#allocation2 + $0x50] sm:$0xff] 0.0
          %878 = vst [vmem:[#allocation2 + $0x58] sm:$0xff] 0.0
          %879 = vst [vmem:[#allocation2 + $0x60] sm:$0xff] 0.0
          %880 = vst [vmem:[#allocation2 + $0x68] sm:$0xff] 0.0
          %881 = vst [vmem:[#allocation2 + $0x70] sm:$0xff] 0.0
          %882 = vst [vmem:[#allocation2 + $0x78] sm:$0xff] 0.0
          %vm883 = vcmask 261120
          %884 = vst.msk [vmem:[#allocation3] sm:$0xff] %vm883, 0.0
          %885 = vst.msk [vmem:[#allocation3 + $0x8] sm:$0xff] %vm883, 0.0
          %886 = vst.msk [vmem:[#allocation3 + $0x10] sm:$0xff] %vm883, 0.0
          %887 = vst.msk [vmem:[#allocation3 + $0x18] sm:$0xff] %vm883, 0.0
          %888 = vst.msk [vmem:[#allocation3 + $0x20] sm:$0xff] %vm883, 0.0
          %889 = vst.msk [vmem:[#allocation3 + $0x28] sm:$0xff] %vm883, 0.0
          %890 = vst.msk [vmem:[#allocation3 + $0x30] sm:$0xff] %vm883, 0.0
          %891 = vst.msk [vmem:[#allocation3 + $0x38] sm:$0xff] %vm883, 0.0
          %892 = vst.msk [vmem:[#allocation3 + $0x40] sm:$0xff] %vm883, 0.0
          %893 = vst.msk [vmem:[#allocation3 + $0x48] sm:$0xff] %vm883, 0.0
          %894 = vst.msk [vmem:[#allocation3 + $0x50] sm:$0xff] %vm883, 0.0
          %895 = vst.msk [vmem:[#allocation3 + $0x58] sm:$0xff] %vm883, 0.0
          %896 = vst.msk [vmem:[#allocation3 + $0x60] sm:$0xff] %vm883, 0.0
          %897 = vst.msk [vmem:[#allocation3 + $0x68] sm:$0xff] %vm883, 0.0
          %898 = vst.msk [vmem:[#allocation3 + $0x70] sm:$0xff] %vm883, 0.0
          %899 = vst.msk [vmem:[#allocation3 + $0x78] sm:$0xff] %vm883, 0.0
          %v900 = vld [vmem:[%s831] sm:$0xff]
          %v901 = vld [vmem:[%s831 + $0x8] sm:$0xff]
          %v902 = vld [vmem:[%s831 + $0x10] sm:$0xff]
          %v903 = vld [vmem:[%s831 + $0x18] sm:$0xff]
          %v904 = vld [vmem:[%s831 + $0x20] sm:$0xff]
          %v905 = vld [vmem:[%s831 + $0x28] sm:$0xff]
          %v906 = vld [vmem:[%s831 + $0x30] sm:$0xff]
          %v907 = vld [vmem:[%s831 + $0x38] sm:$0xff]
          %v908 = vld [vmem:[%s831 + $0x40] sm:$0xff]
          %v909 = vld [vmem:[%s831 + $0x48] sm:$0xff]
          %v910 = vld [vmem:[%s831 + $0x50] sm:$0xff]
          %v911 = vld [vmem:[%s831 + $0x58] sm:$0xff]
          %v912 = vld [vmem:[%s831 + $0x60] sm:$0xff]
          %v913 = vld [vmem:[%s831 + $0x68] sm:$0xff]
          %v914 = vld [vmem:[%s831 + $0x70] sm:$0xff]
          %v915 = vld [vmem:[%s831 + $0x78] sm:$0xff]
          %v916 = vld [vmem:[%s2] sm:$0xf]
          %v917 = vld [vmem:[%s2 + $0x4] sm:$0xf]
          %v918 = vld [vmem:[%s2 + $0x8] sm:$0xf]
          %v919 = vld [vmem:[%s2 + $0xc] sm:$0xf]
          %v920 = vld [vmem:[%s2 + $0x10] sm:$0xf]
          %v921 = vld [vmem:[%s2 + $0x14] sm:$0xf]
          %v922 = vld [vmem:[%s2 + $0x18] sm:$0xf]
          %v923 = vld [vmem:[%s2 + $0x1c] sm:$0xf]
          %v924 = vld [vmem:[%s2 + $0x20] sm:$0xf]
          %v925 = vld [vmem:[%s2 + $0x24] sm:$0xf]
          %v926 = vld [vmem:[%s2 + $0x28] sm:$0xf]
          %v927 = vld [vmem:[%s2 + $0x2c] sm:$0xf]
          %v928 = vld [vmem:[%s2 + $0x30] sm:$0xf]
          %v929 = vld [vmem:[%s2 + $0x34] sm:$0xf]
          %v930 = vld [vmem:[%s2 + $0x38] sm:$0xf]
          %v931 = vld [vmem:[%s2 + $0x3c] sm:$0xf]
          %v932 = vld [vmem:[%s2 + $0x40] sm:$0x3]
          %v949 = vunpack.c.l.b16 %v847
          %v950 = vunpack.c.h.b16 %v847
          %v951 = vunpack.c.l.b16 %v848
          %v952 = vunpack.c.h.b16 %v848
          %v953 = vunpack.c.l.b16 %v849
          %v954 = vunpack.c.h.b16 %v849
          %v955 = vunpack.c.l.b16 %v850
          %v956 = vunpack.c.h.b16 %v850
          %v957 = vunpack.c.l.b16 %v851
          %v958 = vunpack.c.h.b16 %v851
          %v959 = vunpack.c.l.b16 %v852
          %v960 = vunpack.c.h.b16 %v852
          %v961 = vunpack.c.l.b16 %v853
          %v962 = vunpack.c.h.b16 %v853
          %v963 = vunpack.c.l.b16 %v854
          %v964 = vunpack.c.h.b16 %v854
          %v965 = vunpack.c.l.b16 %v855
          %v966 = vunpack.c.h.b16 %v855
          %v967 = vunpack.c.l.b16 %v856
          %v968 = vunpack.c.h.b16 %v856
          %v969 = vunpack.c.l.b16 %v857
          %v970 = vunpack.c.h.b16 %v857
          %v971 = vunpack.c.l.b16 %v858
          %v972 = vunpack.c.h.b16 %v858
          %v973 = vunpack.c.l.b16 %v859
          %v974 = vunpack.c.h.b16 %v859
          %v975 = vunpack.c.l.b16 %v860
          %v976 = vunpack.c.h.b16 %v860
          %v977 = vunpack.c.l.b16 %v861
          %v978 = vunpack.c.h.b16 %v861
          %v979 = vunpack.c.l.b16 %v862
          %v980 = vunpack.c.h.b16 %v862
          %v981 = vpack.c.b16 %v951, %v949
          %v982 = vpack.c.b16 %v952, %v950
          %v983 = vpack.c.b16 %v955, %v953
          %v984 = vpack.c.b16 %v956, %v954
          %v985 = vpack.c.b16 %v959, %v957
          %v986 = vpack.c.b16 %v960, %v958
          %v987 = vpack.c.b16 %v963, %v961
          %v988 = vpack.c.b16 %v964, %v962
          %v989 = vpack.c.b16 %v967, %v965
          %v990 = vpack.c.b16 %v968, %v966
          %v991 = vpack.c.b16 %v971, %v969
          %v992 = vpack.c.b16 %v972, %v970
          %v993 = vpack.c.b16 %v975, %v973
          %v994 = vpack.c.b16 %v976, %v974
          %v995 = vpack.c.b16 %v979, %v977
          %v996 = vpack.c.b16 %v980, %v978
          %v1022 = vunpack.c.l.b16 %v916
          %v1023 = vunpack.c.l.b16 %v917
          %v1024 = vunpack.c.l.b16 %v918
          %v1025 = vunpack.c.l.b16 %v919
          %v1026 = vunpack.c.l.b16 %v920
          %v1027 = vunpack.c.l.b16 %v921
          %v1028 = vunpack.c.l.b16 %v922
          %v1029 = vunpack.c.l.b16 %v923
          %v1030 = vunpack.c.l.b16 %v924
          %v1031 = vunpack.c.l.b16 %v925
          %v1032 = vunpack.c.l.b16 %v926
          %v1033 = vunpack.c.l.b16 %v927
          %v1034 = vunpack.c.l.b16 %v928
          %v1035 = vunpack.c.l.b16 %v929
          %v1036 = vunpack.c.l.b16 %v930
          %v1037 = vunpack.c.l.b16 %v931
          %v1038 = vunpack.c.l.b16 %v932
          %v1039 = vpack.c.b16 %v1023, %v1022
          %v1040 = vpack.c.b16 %v1025, %v1024
          %v1041 = vpack.c.b16 %v1027, %v1026
          %v1042 = vpack.c.b16 %v1029, %v1028
          %v1043 = vpack.c.b16 %v1031, %v1030
          %v1044 = vpack.c.b16 %v1033, %v1032
          %v1045 = vpack.c.b16 %v1035, %v1034
          %v1046 = vpack.c.b16 %v1037, %v1036
          %v1047 = vpack.c.b16 %v1038, %v1038
          %vm1056 = vcmask 31744
          %v1058 = vsel %vm1056, %v982, 0
          %v1061 = vsel %vm1056, %v984, 0
          %v1064 = vsel %vm1056, %v986, 0
          %v1067 = vsel %vm1056, %v988, 0
          %v1070 = vsel %vm1056, %v990, 0
          %v1073 = vsel %vm1056, %v992, 0
          %v1076 = vsel %vm1056, %v994, 0
          %v1079 = vsel %vm1056, %v996, 0
          %vm1081 = vcmask 1041408
          %v1083 = vsel %vm1081, %v1047, 0
          %1085 = vmatprep.subr.bf16.mxu0 0
          %1086 = vmatpush1.bf16.msra.mxu0 %v1046
          %1087 = vmatprep.subr.bf16.mxu0 0
          %1088 = vmatpush1.bf16.msra.mxu0 %v1045
          %1089 = vmatprep.subr.bf16.mxu0 0
          %1090 = vmatpush1.bf16.msra.mxu0 %v1044
          %1091 = vmatprep.subr.bf16.mxu0 0
          %1092 = vmatpush1.bf16.msra.mxu0 %v1043
          %1093 = vmatprep.subr.bf16.mxu0 0
          %1094 = vmatpush1.bf16.msra.mxu0 %v1042
          %1095 = vmatprep.subr.bf16.mxu0 0
          %1096 = vmatpush1.bf16.msra.mxu0 %v1041
          %1097 = vmatprep.subr.bf16.mxu0 0
          %1098 = vmatpush1.bf16.msra.mxu0 %v1040
          %1099 = vmatprep.subr.bf16.mxu0 0
          %1100 = vmatpush1.bf16.msra.mxu0 %v1039
          %1101 = vmatprep.subr.bf16.mxu0 0
          %1102 = vmatpush2.bf16.msra.mxu0 0
          %1103 = vmatprep.subr.bf16.mxu0 0
          %1104 = vmatpush2.bf16.msra.mxu0 0
          %1105 = vmatprep.subr.bf16.mxu0 0
          %1106 = vmatpush2.bf16.msra.mxu0 0
          %1107 = vmatprep.subr.bf16.mxu0 0
          %1108 = vmatpush2.bf16.msra.mxu0 0
          %1109 = vmatprep.subr.bf16.mxu0 0
          %1110 = vmatpush2.bf16.msra.mxu0 0
          %1111 = vmatprep.subr.bf16.mxu0 0
          %1112 = vmatpush2.bf16.msra.mxu0 0
          %1113 = vmatprep.subr.bf16.mxu0 0
          %1114 = vmatpush2.bf16.msra.mxu0 0
          %1115 = vmatprep.subr.bf16.mxu0 0
          %1116 = vmatpush2.bf16.msra.mxu0 %v1083
          %1117 = vmatprep.mubr.bf16.mxu0 %v1058
          %1118 = vmatmul.mubr.bf16.gmra.mxu0 %v981
          %v1119 = vpop.f32.mrf.mxu0
          %v1120 = vadd.f32 0.0, %v1119
          %v1121 = vpop.f32.mrf.mxu0
          %v1122 = vpop.f32.mrf.mxu0
          %v1123 = vadd.f32 0.0, %v1122
          %v1124 = vpop.f32.mrf.mxu0
          %1125 = vmatprep.mubr.bf16.mxu0 %v1061
          %1126 = vmatmul.mubr.bf16.gmra.mxu0 %v983
          %v1127 = vpop.f32.mrf.mxu0
          %v1128 = vadd.f32 0.0, %v1127
          %v1129 = vpop.f32.mrf.mxu0
          %v1130 = vpop.f32.mrf.mxu0
          %v1131 = vadd.f32 0.0, %v1130
          %v1132 = vpop.f32.mrf.mxu0
          %1133 = vmatprep.mubr.bf16.mxu0 %v1064
          %1134 = vmatmul.mubr.bf16.gmra.mxu0 %v985
          %v1135 = vpop.f32.mrf.mxu0
          %v1136 = vadd.f32 0.0, %v1135
          %v1137 = vpop.f32.mrf.mxu0
          %v1138 = vpop.f32.mrf.mxu0
          %v1139 = vadd.f32 0.0, %v1138
          %v1140 = vpop.f32.mrf.mxu0
          %1141 = vmatprep.mubr.bf16.mxu0 %v1067
          %1142 = vmatmul.mubr.bf16.gmra.mxu0 %v987
          %v1143 = vpop.f32.mrf.mxu0
          %v1144 = vadd.f32 0.0, %v1143
          %v1145 = vpop.f32.mrf.mxu0
          %v1146 = vpop.f32.mrf.mxu0
          %v1147 = vadd.f32 0.0, %v1146
          %v1148 = vpop.f32.mrf.mxu0
          %1149 = vmatprep.mubr.bf16.mxu0 %v1070
          %1150 = vmatmul.mubr.bf16.gmra.mxu0 %v989
          %v1151 = vpop.f32.mrf.mxu0
          %v1152 = vadd.f32 0.0, %v1151
          %v1153 = vpop.f32.mrf.mxu0
          %v1154 = vpop.f32.mrf.mxu0
          %v1155 = vadd.f32 0.0, %v1154
          %v1156 = vpop.f32.mrf.mxu0
          %1157 = vmatprep.mubr.bf16.mxu0 %v1073
          %1158 = vmatmul.mubr.bf16.gmra.mxu0 %v991
          %v1159 = vpop.f32.mrf.mxu0
          %v1160 = vadd.f32 0.0, %v1159
          %v1161 = vpop.f32.mrf.mxu0
          %v1162 = vpop.f32.mrf.mxu0
          %v1163 = vadd.f32 0.0, %v1162
          %v1164 = vpop.f32.mrf.mxu0
          %1165 = vmatprep.mubr.bf16.mxu0 %v1076
          %1166 = vmatmul.mubr.bf16.gmra.mxu0 %v993
          %v1167 = vpop.f32.mrf.mxu0
          %v1168 = vadd.f32 0.0, %v1167
          %v1169 = vpop.f32.mrf.mxu0
          %v1170 = vpop.f32.mrf.mxu0
          %v1171 = vadd.f32 0.0, %v1170
          %v1172 = vpop.f32.mrf.mxu0
          %1173 = vmatprep.mubr.bf16.mxu0 %v1079
          %1174 = vmatmul.mubr.bf16.gmra.mxu0 %v995
          %v1175 = vpop.f32.mrf.mxu0
          %v1176 = vadd.f32 0.0, %v1175
          %v1177 = vpop.f32.mrf.mxu0
          %v1178 = vpop.f32.mrf.mxu0
          %v1179 = vadd.f32 0.0, %v1178
          %v1180 = vpop.f32.mrf.mxu0
          %1181 = vdwg.mxu0
          %1198 = vrot.lane.b32.xlu0 %v900, 32
          %v1199 = vpop.permute.xlu0 %1198
          %1200 = vrot.lane.b32.xlu0 %v901, 32
          %v1201 = vpop.permute.xlu0 %1200
          %1202 = vrot.lane.b32.xlu0 %v902, 32
          %v1203 = vpop.permute.xlu0 %1202
          %1204 = vrot.lane.b32.xlu0 %v903, 32
          %v1205 = vpop.permute.xlu0 %1204
          %1206 = vrot.lane.b32.xlu0 %v904, 32
          %v1207 = vpop.permute.xlu0 %1206
          %1208 = vrot.lane.b32.xlu0 %v905, 32
          %v1209 = vpop.permute.xlu0 %1208
          %1210 = vrot.lane.b32.xlu0 %v906, 32
          %v1211 = vpop.permute.xlu0 %1210
          %1212 = vrot.lane.b32.xlu0 %v907, 32
          %v1213 = vpop.permute.xlu0 %1212
          %1214 = vrot.lane.b32.xlu0 %v908, 32
          %v1215 = vpop.permute.xlu0 %1214
          %1216 = vrot.lane.b32.xlu0 %v909, 32
          %v1217 = vpop.permute.xlu0 %1216
          %1218 = vrot.lane.b32.xlu0 %v910, 32
          %v1219 = vpop.permute.xlu0 %1218
          %1220 = vrot.lane.b32.xlu0 %v911, 32
          %v1221 = vpop.permute.xlu0 %1220
          %1222 = vrot.lane.b32.xlu0 %v912, 32
          %v1223 = vpop.permute.xlu0 %1222
          %1224 = vrot.lane.b32.xlu0 %v913, 32
          %v1225 = vpop.permute.xlu0 %1224
          %1226 = vrot.lane.b32.xlu0 %v914, 32
          %v1227 = vpop.permute.xlu0 %1226
          %1228 = vrot.lane.b32.xlu0 %v915, 32
          %v1229 = vpop.permute.xlu0 %1228
          %v1246 = vsel %vm883, %v900, %v1199
          %v1247 = vsel %vm883, %v901, %v1201
          %v1248 = vsel %vm883, %v902, %v1203
          %v1249 = vsel %vm883, %v903, %v1205
          %v1250 = vsel %vm883, %v904, %v1207
          %v1251 = vsel %vm883, %v905, %v1209
          %v1252 = vsel %vm883, %v906, %v1211
          %v1253 = vsel %vm883, %v907, %v1213
          %v1254 = vsel %vm883, %v908, %v1215
          %v1255 = vsel %vm883, %v909, %v1217
          %v1256 = vsel %vm883, %v910, %v1219
          %v1257 = vsel %vm883, %v911, %v1221
          %v1258 = vsel %vm883, %v912, %v1223
          %v1259 = vsel %vm883, %v913, %v1225
          %v1260 = vsel %vm883, %v914, %v1227
          %v1261 = vsel %vm883, %v915, %v1229
          %v1262 = vmul.f32 %v1120, %v1246
          %v1263 = vmul.f32 %v1123, %v1247
          %v1264 = vmul.f32 %v1128, %v1248
          %v1265 = vmul.f32 %v1131, %v1249
          %v1266 = vmul.f32 %v1136, %v1250
          %v1267 = vmul.f32 %v1139, %v1251
          %v1268 = vmul.f32 %v1144, %v1252
          %v1269 = vmul.f32 %v1147, %v1253
          %v1270 = vmul.f32 %v1152, %v1254
          %v1271 = vmul.f32 %v1155, %v1255
          %v1272 = vmul.f32 %v1160, %v1256
          %v1273 = vmul.f32 %v1163, %v1257
          %v1274 = vmul.f32 %v1168, %v1258
          %v1275 = vmul.f32 %v1171, %v1259
          %v1276 = vmul.f32 %v1176, %v1260
          %v1277 = vmul.f32 %v1179, %v1261
          %vm1278 = vcmask 523264
          %1279 = vst.msk [vmem:[#allocation4] sm:$0xff] %vm1278, %v1262
          %1280 = vst.msk [vmem:[#allocation4 + $0x8] sm:$0xff] %vm1278, %v1263
          %1281 = vst.msk [vmem:[#allocation4 + $0x10] sm:$0xff] %vm1278, %v1264
          %1282 = vst.msk [vmem:[#allocation4 + $0x18] sm:$0xff] %vm1278, %v1265
          %1283 = vst.msk [vmem:[#allocation4 + $0x20] sm:$0xff] %vm1278, %v1266
          %1284 = vst.msk [vmem:[#allocation4 + $0x28] sm:$0xff] %vm1278, %v1267
          %1285 = vst.msk [vmem:[#allocation4 + $0x30] sm:$0xff] %vm1278, %v1268
          %1286 = vst.msk [vmem:[#allocation4 + $0x38] sm:$0xff] %vm1278, %v1269
          %1287 = vst.msk [vmem:[#allocation4 + $0x40] sm:$0xff] %vm1278, %v1270
          %1288 = vst.msk [vmem:[#allocation4 + $0x48] sm:$0xff] %vm1278, %v1271
          %1289 = vst.msk [vmem:[#allocation4 + $0x50] sm:$0xff] %vm1278, %v1272
          %1290 = vst.msk [vmem:[#allocation4 + $0x58] sm:$0xff] %vm1278, %v1273
          %1291 = vst.msk [vmem:[#allocation4 + $0x60] sm:$0xff] %vm1278, %v1274
          %1292 = vst.msk [vmem:[#allocation4 + $0x68] sm:$0xff] %vm1278, %v1275
          %1293 = vst.msk [vmem:[#allocation4 + $0x70] sm:$0xff] %vm1278, %v1276
          %1294 = vst.msk [vmem:[#allocation4 + $0x78] sm:$0xff] %vm1278, %v1277
        $region228: #{tpu_custom_call.1} parent=207 // pred_fallthru
          _
        %v1295 = vld [vmem:[#allocation4] sm:$0xff]
        %v1296 = vld [vmem:[#allocation4 + $0x8] sm:$0xff]
        %v1297 = vld [vmem:[#allocation4 + $0x10] sm:$0xff]
        %v1298 = vld [vmem:[#allocation4 + $0x18] sm:$0xff]
        %v1299 = vld [vmem:[#allocation4 + $0x20] sm:$0xff]
        %v1300 = vld [vmem:[#allocation4 + $0x28] sm:$0xff]
        %v1301 = vld [vmem:[#allocation4 + $0x30] sm:$0xff]
        %v1302 = vld [vmem:[#allocation4 + $0x38] sm:$0xff]
        %v1303 = vld [vmem:[#allocation4 + $0x40] sm:$0xff]
        %v1304 = vld [vmem:[#allocation4 + $0x48] sm:$0xff]
        %v1305 = vld [vmem:[#allocation4 + $0x50] sm:$0xff]
        %v1306 = vld [vmem:[#allocation4 + $0x58] sm:$0xff]
        %v1307 = vld [vmem:[#allocation4 + $0x60] sm:$0xff]
        %v1308 = vld [vmem:[#allocation4 + $0x68] sm:$0xff]
        %v1309 = vld [vmem:[#allocation4 + $0x70] sm:$0xff]
        %v1310 = vld [vmem:[#allocation4 + $0x78] sm:$0xff]
        %v1311 = vpack.c.bf16 %v1296, %v1295
        %v1312 = vpack.c.bf16 %v1298, %v1297
        %v1313 = vpack.c.bf16 %v1300, %v1299
        %v1314 = vpack.c.bf16 %v1302, %v1301
        %v1315 = vpack.c.bf16 %v1304, %v1303
        %v1316 = vpack.c.bf16 %v1306, %v1305
        %v1317 = vpack.c.bf16 %v1308, %v1307
        %v1318 = vpack.c.bf16 %v1310, %v1309
        %v1319 = vld [vmem:[%s731] sm:$0xf]
        %v1320 = vld [vmem:[%s731 + $0x4] sm:$0xf]
        %v1321 = vld [vmem:[%s731 + $0x8] sm:$0xf]
        %v1322 = vld [vmem:[%s731 + $0xc] sm:$0xf]
        %v1323 = vld [vmem:[%s731 + $0x10] sm:$0xf]
        %v1324 = vld [vmem:[%s731 + $0x14] sm:$0xf]
        %v1325 = vld [vmem:[%s731 + $0x18] sm:$0xf]
        %v1326 = vld [vmem:[%s731 + $0x1c] sm:$0xf]
        %v1327 = vld [vmem:[%s731 + $0x20] sm:$0xf]
        %v1328 = vld [vmem:[%s731 + $0x24] sm:$0xf]
        %v1329 = vld [vmem:[%s731 + $0x28] sm:$0xf]
        %v1330 = vld [vmem:[%s731 + $0x2c] sm:$0xf]
        %v1331 = vld [vmem:[%s731 + $0x30] sm:$0xf]
        %v1332 = vld [vmem:[%s731 + $0x34] sm:$0xf]
        %v1333 = vld [vmem:[%s731 + $0x38] sm:$0xf]
        %v1334 = vld [vmem:[%s731 + $0x3c] sm:$0xf]
        %v1335 = vld [vmem:[%s731 + $0x40] sm:$0x3]
        %v1336 = vld [vmem:[%s745] sm:$0xf]
        %v1337 = vld [vmem:[%s745 + $0x4] sm:$0xf]
        %v1338 = vld [vmem:[%s745 + $0x8] sm:$0xf]
        %v1339 = vld [vmem:[%s745 + $0xc] sm:$0xf]
        %v1344 = vunpack.c.l.b16 %v1336
        %v1345 = vunpack.c.l.b16 %v1337
        %v1346 = vunpack.c.l.b16 %v1338
        %v1347 = vunpack.c.l.b16 %v1339
        %v1348 = vpack.c.b16 %v1345, %v1344
        %v1349 = vpack.c.b16 %v1347, %v1346
        %vm1352 = vcmask 261120
        %v1354 = vsel %vm1352, %v1311, 0
        %v1357 = vsel %vm1352, %v1312, 0
        %v1360 = vsel %vm1352, %v1313, 0
        %v1363 = vsel %vm1352, %v1314, 0
        %v1366 = vsel %vm1352, %v1315, 0
        %v1369 = vsel %vm1352, %v1316, 0
        %v1372 = vsel %vm1352, %v1317, 0
        %v1375 = vsel %vm1352, %v1318, 0
        %1377 = vmatprep.subr.bf16.mxu0 0
        %1378 = vmatpush1.bf16.msra.mxu0 0
        %1379 = vmatprep.subr.bf16.mxu0 0
        %1380 = vmatpush1.bf16.msra.mxu0 0
        %1381 = vmatprep.subr.bf16.mxu0 0
        %1382 = vmatpush1.bf16.msra.mxu0 0
        %1383 = vmatprep.subr.bf16.mxu0 0
        %1384 = vmatpush1.bf16.msra.mxu0 0
        %1385 = vmatprep.subr.bf16.mxu0 0
        %1386 = vmatpush1.bf16.msra.mxu0 0
        %1387 = vmatprep.subr.bf16.mxu0 0
        %1388 = vmatpush1.bf16.msra.mxu0 0
        %1389 = vmatprep.subr.bf16.mxu0 0
        %1390 = vmatpush1.bf16.msra.mxu0 %v1349
        %1391 = vmatprep.subr.bf16.mxu0 0
        %1392 = vmatpush1.bf16.msra.mxu0 %v1348
        %1393 = vmatprep.subr.bf16.mxu0 0
        %1394 = vmatpush2.bf16.msra.mxu0 0
        %1395 = vmatprep.subr.bf16.mxu0 0
        %1396 = vmatpush2.bf16.msra.mxu0 0
        %1397 = vmatprep.subr.bf16.mxu0 0
        %1398 = vmatpush2.bf16.msra.mxu0 0
        %1399 = vmatprep.subr.bf16.mxu0 0
        %1400 = vmatpush2.bf16.msra.mxu0 0
        %1401 = vmatprep.subr.bf16.mxu0 0
        %1402 = vmatpush2.bf16.msra.mxu0 0
        %1403 = vmatprep.subr.bf16.mxu0 0
        %1404 = vmatpush2.bf16.msra.mxu0 0
        %1405 = vmatprep.subr.bf16.mxu0 0
        %1406 = vmatpush2.bf16.msra.mxu0 0
        %1407 = vmatprep.subr.bf16.mxu0 0
        %1408 = vmatpush2.bf16.msra.mxu0 0
        %1409 = vmatprep.mubr.bf16.mxu0 0
        %1410 = vmatmul.mubr.bf16.gmra.mxu0 %v1354
        %v1411 = vpop.f32.mrf.mxu0
        %v1412 = vadd.f32 0.0, %v1411
        %v1413 = vpop.f32.mrf.mxu0
        %v1414 = vpop.f32.mrf.mxu0
        %v1415 = vadd.f32 0.0, %v1414
        %v1416 = vpop.f32.mrf.mxu0
        %1417 = vmatprep.mubr.bf16.mxu0 0
        %1418 = vmatmul.mubr.bf16.gmra.mxu0 %v1357
        %v1419 = vpop.f32.mrf.mxu0
        %v1420 = vadd.f32 0.0, %v1419
        %v1421 = vpop.f32.mrf.mxu0
        %v1422 = vpop.f32.mrf.mxu0
        %v1423 = vadd.f32 0.0, %v1422
        %v1424 = vpop.f32.mrf.mxu0
        %1425 = vmatprep.mubr.bf16.mxu0 0
        %1426 = vmatmul.mubr.bf16.gmra.mxu0 %v1360
        %v1427 = vpop.f32.mrf.mxu0
        %v1428 = vadd.f32 0.0, %v1427
        %v1429 = vpop.f32.mrf.mxu0
        %v1430 = vpop.f32.mrf.mxu0
        %v1431 = vadd.f32 0.0, %v1430
        %v1432 = vpop.f32.mrf.mxu0
        %1433 = vmatprep.mubr.bf16.mxu0 0
        %1434 = vmatmul.mubr.bf16.gmra.mxu0 %v1363
        %v1435 = vpop.f32.mrf.mxu0
        %v1436 = vadd.f32 0.0, %v1435
        %v1437 = vpop.f32.mrf.mxu0
        %v1438 = vpop.f32.mrf.mxu0
        %v1439 = vadd.f32 0.0, %v1438
        %v1440 = vpop.f32.mrf.mxu0
        %1441 = vmatprep.mubr.bf16.mxu0 0
        %1442 = vmatmul.mubr.bf16.gmra.mxu0 %v1366
        %v1443 = vpop.f32.mrf.mxu0
        %v1444 = vadd.f32 0.0, %v1443
        %v1445 = vpop.f32.mrf.mxu0
        %v1446 = vpop.f32.mrf.mxu0
        %v1447 = vadd.f32 0.0, %v1446
        %v1448 = vpop.f32.mrf.mxu0
        %1449 = vmatprep.mubr.bf16.mxu0 0
        %1450 = vmatmul.mubr.bf16.gmra.mxu0 %v1369
        %v1451 = vpop.f32.mrf.mxu0
        %v1452 = vadd.f32 0.0, %v1451
        %v1453 = vpop.f32.mrf.mxu0
        %v1454 = vpop.f32.mrf.mxu0
        %v1455 = vadd.f32 0.0, %v1454
        %v1456 = vpop.f32.mrf.mxu0
        %1457 = vmatprep.mubr.bf16.mxu0 0
        %1458 = vmatmul.mubr.bf16.gmra.mxu0 %v1372
        %v1459 = vpop.f32.mrf.mxu0
        %v1460 = vadd.f32 0.0, %v1459
        %v1461 = vpop.f32.mrf.mxu0
        %v1462 = vpop.f32.mrf.mxu0
        %v1463 = vadd.f32 0.0, %v1462
        %v1464 = vpop.f32.mrf.mxu0
        %1465 = vmatprep.mubr.bf16.mxu0 0
        %1466 = vmatmul.mubr.bf16.gmra.mxu0 %v1375
        %v1467 = vpop.f32.mrf.mxu0
        %v1468 = vadd.f32 0.0, %v1467
        %v1469 = vpop.f32.mrf.mxu0
        %v1470 = vpop.f32.mrf.mxu0
        %v1471 = vadd.f32 0.0, %v1470
        %v1472 = vpop.f32.mrf.mxu0
        %1473 = vdwg.mxu0
        %v1490 = vunpack.c.l.b16 %v847
        %v1491 = vunpack.c.h.b16 %v847
        %v1492 = vunpack.c.l.b16 %v848
        %v1493 = vunpack.c.h.b16 %v848
        %v1494 = vunpack.c.l.b16 %v849
        %v1495 = vunpack.c.h.b16 %v849
        %v1496 = vunpack.c.l.b16 %v850
        %v1497 = vunpack.c.h.b16 %v850
        %v1498 = vunpack.c.l.b16 %v851
        %v1499 = vunpack.c.h.b16 %v851
        %v1500 = vunpack.c.l.b16 %v852
        %v1501 = vunpack.c.h.b16 %v852
        %v1502 = vunpack.c.l.b16 %v853
        %v1503 = vunpack.c.h.b16 %v853
        %v1504 = vunpack.c.l.b16 %v854
        %v1505 = vunpack.c.h.b16 %v854
        %v1506 = vunpack.c.l.b16 %v855
        %v1507 = vunpack.c.h.b16 %v855
        %v1508 = vunpack.c.l.b16 %v856
        %v1509 = vunpack.c.h.b16 %v856
        %v1510 = vunpack.c.l.b16 %v857
        %v1511 = vunpack.c.h.b16 %v857
        %v1512 = vunpack.c.l.b16 %v858
        %v1513 = vunpack.c.h.b16 %v858
        %v1514 = vunpack.c.l.b16 %v859
        %v1515 = vunpack.c.h.b16 %v859
        %v1516 = vunpack.c.l.b16 %v860
        %v1517 = vunpack.c.h.b16 %v860
        %v1518 = vunpack.c.l.b16 %v861
        %v1519 = vunpack.c.h.b16 %v861
        %v1520 = vunpack.c.l.b16 %v862
        %v1521 = vunpack.c.h.b16 %v862
        %v1522 = vpack.c.b16 %v1492, %v1490
        %v1523 = vpack.c.b16 %v1493, %v1491
        %v1524 = vpack.c.b16 %v1496, %v1494
        %v1525 = vpack.c.b16 %v1497, %v1495
        %v1526 = vpack.c.b16 %v1500, %v1498
        %v1527 = vpack.c.b16 %v1501, %v1499
        %v1528 = vpack.c.b16 %v1504, %v1502
        %v1529 = vpack.c.b16 %v1505, %v1503
        %v1530 = vpack.c.b16 %v1508, %v1506
        %v1531 = vpack.c.b16 %v1509, %v1507
        %v1532 = vpack.c.b16 %v1512, %v1510
        %v1533 = vpack.c.b16 %v1513, %v1511
        %v1534 = vpack.c.b16 %v1516, %v1514
        %v1535 = vpack.c.b16 %v1517, %v1515
        %v1536 = vpack.c.b16 %v1520, %v1518
        %v1537 = vpack.c.b16 %v1521, %v1519
        %v1563 = vunpack.c.l.b16 %v1319
        %v1564 = vunpack.c.l.b16 %v1320
        %v1565 = vunpack.c.l.b16 %v1321
        %v1566 = vunpack.c.l.b16 %v1322
        %v1567 = vunpack.c.l.b16 %v1323
        %v1568 = vunpack.c.l.b16 %v1324
        %v1569 = vunpack.c.l.b16 %v1325
        %v1570 = vunpack.c.l.b16 %v1326
        %v1571 = vunpack.c.l.b16 %v1327
        %v1572 = vunpack.c.l.b16 %v1328
        %v1573 = vunpack.c.l.b16 %v1329
        %v1574 = vunpack.c.l.b16 %v1330
        %v1575 = vunpack.c.l.b16 %v1331
        %v1576 = vunpack.c.l.b16 %v1332
        %v1577 = vunpack.c.l.b16 %v1333
        %v1578 = vunpack.c.l.b16 %v1334
        %v1579 = vunpack.c.l.b16 %v1335
        %v1580 = vpack.c.b16 %v1564, %v1563
        %v1581 = vpack.c.b16 %v1566, %v1565
        %v1582 = vpack.c.b16 %v1568, %v1567
        %v1583 = vpack.c.b16 %v1570, %v1569
        %v1584 = vpack.c.b16 %v1572, %v1571
        %v1585 = vpack.c.b16 %v1574, %v1573
        %v1586 = vpack.c.b16 %v1576, %v1575
        %v1587 = vpack.c.b16 %v1578, %v1577
        %v1588 = vpack.c.b16 %v1579, %v1579
        %vm1597 = vcmask 31744
        %v1599 = vsel %vm1597, %v1523, 0
        %v1602 = vsel %vm1597, %v1525, 0
        %v1605 = vsel %vm1597, %v1527, 0
        %v1608 = vsel %vm1597, %v1529, 0
        %v1611 = vsel %vm1597, %v1531, 0
        %v1614 = vsel %vm1597, %v1533, 0
        %v1617 = vsel %vm1597, %v1535, 0
        %v1620 = vsel %vm1597, %v1537, 0
        %vm1622 = vcmask 1041408
        %v1624 = vsel %vm1622, %v1588, 0
        %1626 = vmatprep.subr.bf16.mxu0 0
        %1627 = vmatpush1.bf16.msra.mxu0 %v1587
        %1628 = vmatprep.subr.bf16.mxu0 0
        %1629 = vmatpush1.bf16.msra.mxu0 %v1586
        %1630 = vmatprep.subr.bf16.mxu0 0
        %1631 = vmatpush1.bf16.msra.mxu0 %v1585
        %1632 = vmatprep.subr.bf16.mxu0 0
        %1633 = vmatpush1.bf16.msra.mxu0 %v1584
        %1634 = vmatprep.subr.bf16.mxu0 0
        %1635 = vmatpush1.bf16.msra.mxu0 %v1583
        %1636 = vmatprep.subr.bf16.mxu0 0
        %1637 = vmatpush1.bf16.msra.mxu0 %v1582
        %1638 = vmatprep.subr.bf16.mxu0 0
        %1639 = vmatpush1.bf16.msra.mxu0 %v1581
        %1640 = vmatprep.subr.bf16.mxu0 0
        %1641 = vmatpush1.bf16.msra.mxu0 %v1580
        %1642 = vmatprep.subr.bf16.mxu0 0
        %1643 = vmatpush2.bf16.msra.mxu0 0
        %1644 = vmatprep.subr.bf16.mxu0 0
        %1645 = vmatpush2.bf16.msra.mxu0 0
        %1646 = vmatprep.subr.bf16.mxu0 0
        %1647 = vmatpush2.bf16.msra.mxu0 0
        %1648 = vmatprep.subr.bf16.mxu0 0
        %1649 = vmatpush2.bf16.msra.mxu0 0
        %1650 = vmatprep.subr.bf16.mxu0 0
        %1651 = vmatpush2.bf16.msra.mxu0 0
        %1652 = vmatprep.subr.bf16.mxu0 0
        %1653 = vmatpush2.bf16.msra.mxu0 0
        %1654 = vmatprep.subr.bf16.mxu0 0
        %1655 = vmatpush2.bf16.msra.mxu0 0
        %1656 = vmatprep.subr.bf16.mxu0 0
        %1657 = vmatpush2.bf16.msra.mxu0 %v1624
        %1658 = vmatprep.mubr.bf16.mxu0 %v1599
        %1659 = vmatmul.mubr.bf16.gmra.mxu0 %v1522
        %v1660 = vpop.f32.mrf.mxu0
        %v1661 = vadd.f32 %v1412, %v1660
        %v1662 = vpop.f32.mrf.mxu0
        %v1663 = vpop.f32.mrf.mxu0
        %v1664 = vadd.f32 %v1415, %v1663
        %v1665 = vpop.f32.mrf.mxu0
        %1666 = vmatprep.mubr.bf16.mxu0 %v1602
        %1667 = vmatmul.mubr.bf16.gmra.mxu0 %v1524
        %v1668 = vpop.f32.mrf.mxu0
        %v1669 = vadd.f32 %v1420, %v1668
        %v1670 = vpop.f32.mrf.mxu0
        %v1671 = vpop.f32.mrf.mxu0
        %v1672 = vadd.f32 %v1423, %v1671
        %v1673 = vpop.f32.mrf.mxu0
        %1674 = vmatprep.mubr.bf16.mxu0 %v1605
        %1675 = vmatmul.mubr.bf16.gmra.mxu0 %v1526
        %v1676 = vpop.f32.mrf.mxu0
        %v1677 = vadd.f32 %v1428, %v1676
        %v1678 = vpop.f32.mrf.mxu0
        %v1679 = vpop.f32.mrf.mxu0
        %v1680 = vadd.f32 %v1431, %v1679
        %v1681 = vpop.f32.mrf.mxu0
        %1682 = vmatprep.mubr.bf16.mxu0 %v1608
        %1683 = vmatmul.mubr.bf16.gmra.mxu0 %v1528
        %v1684 = vpop.f32.mrf.mxu0
        %v1685 = vadd.f32 %v1436, %v1684
        %v1686 = vpop.f32.mrf.mxu0
        %v1687 = vpop.f32.mrf.mxu0
        %v1688 = vadd.f32 %v1439, %v1687
        %v1689 = vpop.f32.mrf.mxu0
        %1690 = vmatprep.mubr.bf16.mxu0 %v1611
        %1691 = vmatmul.mubr.bf16.gmra.mxu0 %v1530
        %v1692 = vpop.f32.mrf.mxu0
        %v1693 = vadd.f32 %v1444, %v1692
        %v1694 = vpop.f32.mrf.mxu0
        %v1695 = vpop.f32.mrf.mxu0
        %v1696 = vadd.f32 %v1447, %v1695
        %v1697 = vpop.f32.mrf.mxu0
        %1698 = vmatprep.mubr.bf16.mxu0 %v1614
        %1699 = vmatmul.mubr.bf16.gmra.mxu0 %v1532
        %v1700 = vpop.f32.mrf.mxu0
        %v1701 = vadd.f32 %v1452, %v1700
        %v1702 = vpop.f32.mrf.mxu0
        %v1703 = vpop.f32.mrf.mxu0
        %v1704 = vadd.f32 %v1455, %v1703
        %v1705 = vpop.f32.mrf.mxu0
        %1706 = vmatprep.mubr.bf16.mxu0 %v1617
        %1707 = vmatmul.mubr.bf16.gmra.mxu0 %v1534
        %v1708 = vpop.f32.mrf.mxu0
        %v1709 = vadd.f32 %v1460, %v1708
        %v1710 = vpop.f32.mrf.mxu0
        %v1711 = vpop.f32.mrf.mxu0
        %v1712 = vadd.f32 %v1463, %v1711
        %v1713 = vpop.f32.mrf.mxu0
        %1714 = vmatprep.mubr.bf16.mxu0 %v1620
        %1715 = vmatmul.mubr.bf16.gmra.mxu0 %v1536
        %v1716 = vpop.f32.mrf.mxu0
        %v1717 = vadd.f32 %v1468, %v1716
        %v1718 = vpop.f32.mrf.mxu0
        %v1719 = vpop.f32.mrf.mxu0
        %v1720 = vadd.f32 %v1471, %v1719
        %v1721 = vpop.f32.mrf.mxu0
        %1722 = vdwg.mxu0
        %v1723 = vld [vmem:[%s738] sm:$0xf]
        %v1724 = vld [vmem:[%s738 + $0x4] sm:$0xf]
        %v1725 = vld [vmem:[%s738 + $0x8] sm:$0xf]
        %v1726 = vld [vmem:[%s738 + $0xc] sm:$0xf]
        %v1727 = vld [vmem:[%s738 + $0x10] sm:$0xf]
        %v1728 = vld [vmem:[%s738 + $0x14] sm:$0xf]
        %v1729 = vld [vmem:[%s738 + $0x18] sm:$0xf]
        %v1730 = vld [vmem:[%s738 + $0x1c] sm:$0xf]
        %v1731 = vld [vmem:[%s738 + $0x20] sm:$0xf]
        %v1732 = vld [vmem:[%s738 + $0x24] sm:$0xf]
        %v1733 = vld [vmem:[%s738 + $0x28] sm:$0xf]
        %v1734 = vld [vmem:[%s738 + $0x2c] sm:$0xf]
        %v1735 = vld [vmem:[%s738 + $0x30] sm:$0xf]
        %v1736 = vld [vmem:[%s738 + $0x34] sm:$0xf]
        %v1737 = vld [vmem:[%s738 + $0x38] sm:$0xf]
        %v1738 = vld [vmem:[%s738 + $0x3c] sm:$0xf]
        %v1739 = vld [vmem:[%s738 + $0x40] sm:$0x3]
        %v1740 = vld [vmem:[%s752] sm:$0xf]
        %v1741 = vld [vmem:[%s752 + $0x4] sm:$0xf]
        %v1742 = vld [vmem:[%s752 + $0x8] sm:$0xf]
        %v1743 = vld [vmem:[%s752 + $0xc] sm:$0xf]
        %1752 = vrot.lane.b32.xlu0 %v1311, 96
        %v1753 = vpop.permute.xlu0 %1752
        %1754 = vrot.lane.b32.xlu0 %v1312, 96
        %v1755 = vpop.permute.xlu0 %1754
        %1756 = vrot.lane.b32.xlu0 %v1313, 96
        %v1757 = vpop.permute.xlu0 %1756
        %1758 = vrot.lane.b32.xlu0 %v1314, 96
        %v1759 = vpop.permute.xlu0 %1758
        %1760 = vrot.lane.b32.xlu0 %v1315, 96
        %v1761 = vpop.permute.xlu0 %1760
        %1762 = vrot.lane.b32.xlu0 %v1316, 96
        %v1763 = vpop.permute.xlu0 %1762
        %1764 = vrot.lane.b32.xlu0 %v1317, 96
        %v1765 = vpop.permute.xlu0 %1764
        %1766 = vrot.lane.b32.xlu0 %v1318, 96
        %v1767 = vpop.permute.xlu0 %1766
        %v1772 = vunpack.c.l.b16 %v1740
        %v1773 = vunpack.c.l.b16 %v1741
        %v1774 = vunpack.c.l.b16 %v1742
        %v1775 = vunpack.c.l.b16 %v1743
        %v1776 = vpack.c.b16 %v1773, %v1772
        %v1777 = vpack.c.b16 %v1775, %v1774
        %v1781 = vsel %vm1352, %v1753, 0
        %v1784 = vsel %vm1352, %v1755, 0
        %v1787 = vsel %vm1352, %v1757, 0
        %v1790 = vsel %vm1352, %v1759, 0
        %v1793 = vsel %vm1352, %v1761, 0
        %v1796 = vsel %vm1352, %v1763, 0
        %v1799 = vsel %vm1352, %v1765, 0
        %v1802 = vsel %vm1352, %v1767, 0
        %1804 = vmatprep.subr.bf16.mxu0 0
        %1805 = vmatpush1.bf16.msra.mxu0 0
        %1806 = vmatprep.subr.bf16.mxu0 0
        %1807 = vmatpush1.bf16.msra.mxu0 0
        %1808 = vmatprep.subr.bf16.mxu0 0
        %1809 = vmatpush1.bf16.msra.mxu0 0
        %1810 = vmatprep.subr.bf16.mxu0 0
        %1811 = vmatpush1.bf16.msra.mxu0 0
        %1812 = vmatprep.subr.bf16.mxu0 0
        %1813 = vmatpush1.bf16.msra.mxu0 0
        %1814 = vmatprep.subr.bf16.mxu0 0
        %1815 = vmatpush1.bf16.msra.mxu0 0
        %1816 = vmatprep.subr.bf16.mxu0 0
        %1817 = vmatpush1.bf16.msra.mxu0 %v1777
        %1818 = vmatprep.subr.bf16.mxu0 0
        %1819 = vmatpush1.bf16.msra.mxu0 %v1776
        %1820 = vmatprep.subr.bf16.mxu0 0
        %1821 = vmatpush2.bf16.msra.mxu0 0
        %1822 = vmatprep.subr.bf16.mxu0 0
        %1823 = vmatpush2.bf16.msra.mxu0 0
        %1824 = vmatprep.subr.bf16.mxu0 0
        %1825 = vmatpush2.bf16.msra.mxu0 0
        %1826 = vmatprep.subr.bf16.mxu0 0
        %1827 = vmatpush2.bf16.msra.mxu0 0
        %1828 = vmatprep.subr.bf16.mxu0 0
        %1829 = vmatpush2.bf16.msra.mxu0 0
        %1830 = vmatprep.subr.bf16.mxu0 0
        %1831 = vmatpush2.bf16.msra.mxu0 0
        %1832 = vmatprep.subr.bf16.mxu0 0
        %1833 = vmatpush2.bf16.msra.mxu0 0
        %1834 = vmatprep.subr.bf16.mxu0 0
        %1835 = vmatpush2.bf16.msra.mxu0 0
        %1836 = vmatprep.mubr.bf16.mxu0 0
        %1837 = vmatmul.mubr.bf16.gmra.mxu0 %v1781
        %v1838 = vpop.f32.mrf.mxu0
        %v1839 = vadd.f32 0.0, %v1838
        %v1840 = vpop.f32.mrf.mxu0
        %v1841 = vpop.f32.mrf.mxu0
        %v1842 = vadd.f32 0.0, %v1841
        %v1843 = vpop.f32.mrf.mxu0
        %1844 = vmatprep.mubr.bf16.mxu0 0
        %1845 = vmatmul.mubr.bf16.gmra.mxu0 %v1784
        %v1846 = vpop.f32.mrf.mxu0
        %v1847 = vadd.f32 0.0, %v1846
        %v1848 = vpop.f32.mrf.mxu0
        %v1849 = vpop.f32.mrf.mxu0
        %v1850 = vadd.f32 0.0, %v1849
        %v1851 = vpop.f32.mrf.mxu0
        %1852 = vmatprep.mubr.bf16.mxu0 0
        %1853 = vmatmul.mubr.bf16.gmra.mxu0 %v1787
        %v1854 = vpop.f32.mrf.mxu0
        %v1855 = vadd.f32 0.0, %v1854
        %v1856 = vpop.f32.mrf.mxu0
        %v1857 = vpop.f32.mrf.mxu0
        %v1858 = vadd.f32 0.0, %v1857
        %v1859 = vpop.f32.mrf.mxu0
        %1860 = vmatprep.mubr.bf16.mxu0 0
        %1861 = vmatmul.mubr.bf16.gmra.mxu0 %v1790
        %v1862 = vpop.f32.mrf.mxu0
        %v1863 = vadd.f32 0.0, %v1862
        %v1864 = vpop.f32.mrf.mxu0
        %v1865 = vpop.f32.mrf.mxu0
        %v1866 = vadd.f32 0.0, %v1865
        %v1867 = vpop.f32.mrf.mxu0
        %1868 = vmatprep.mubr.bf16.mxu0 0
        %1869 = vmatmul.mubr.bf16.gmra.mxu0 %v1793
        %v1870 = vpop.f32.mrf.mxu0
        %v1871 = vadd.f32 0.0, %v1870
        %v1872 = vpop.f32.mrf.mxu0
        %v1873 = vpop.f32.mrf.mxu0
        %v1874 = vadd.f32 0.0, %v1873
        %v1875 = vpop.f32.mrf.mxu0
        %1876 = vmatprep.mubr.bf16.mxu0 0
        %1877 = vmatmul.mubr.bf16.gmra.mxu0 %v1796
        %v1878 = vpop.f32.mrf.mxu0
        %v1879 = vadd.f32 0.0, %v1878
        %v1880 = vpop.f32.mrf.mxu0
        %v1881 = vpop.f32.mrf.mxu0
        %v1882 = vadd.f32 0.0, %v1881
        %v1883 = vpop.f32.mrf.mxu0
        %1884 = vmatprep.mubr.bf16.mxu0 0
        %1885 = vmatmul.mubr.bf16.gmra.mxu0 %v1799
        %v1886 = vpop.f32.mrf.mxu0
        %v1887 = vadd.f32 0.0, %v1886
        %v1888 = vpop.f32.mrf.mxu0
        %v1889 = vpop.f32.mrf.mxu0
        %v1890 = vadd.f32 0.0, %v1889
        %v1891 = vpop.f32.mrf.mxu0
        %1892 = vmatprep.mubr.bf16.mxu0 0
        %1893 = vmatmul.mubr.bf16.gmra.mxu0 %v1802
        %v1894 = vpop.f32.mrf.mxu0
        %v1895 = vadd.f32 0.0, %v1894
        %v1896 = vpop.f32.mrf.mxu0
        %v1897 = vpop.f32.mrf.mxu0
        %v1898 = vadd.f32 0.0, %v1897
        %v1899 = vpop.f32.mrf.mxu0
        %1900 = vdwg.mxu0
        %v1918 = vunpack.c.l.b16 %v1723
        %v1919 = vunpack.c.l.b16 %v1724
        %v1920 = vunpack.c.l.b16 %v1725
        %v1921 = vunpack.c.l.b16 %v1726
        %v1922 = vunpack.c.l.b16 %v1727
        %v1923 = vunpack.c.l.b16 %v1728
        %v1924 = vunpack.c.l.b16 %v1729
        %v1925 = vunpack.c.l.b16 %v1730
        %v1926 = vunpack.c.l.b16 %v1731
        %v1927 = vunpack.c.l.b16 %v1732
        %v1928 = vunpack.c.l.b16 %v1733
        %v1929 = vunpack.c.l.b16 %v1734
        %v1930 = vunpack.c.l.b16 %v1735
        %v1931 = vunpack.c.l.b16 %v1736
        %v1932 = vunpack.c.l.b16 %v1737
        %v1933 = vunpack.c.l.b16 %v1738
        %v1934 = vunpack.c.l.b16 %v1739
        %v1935 = vpack.c.b16 %v1919, %v1918
        %v1936 = vpack.c.b16 %v1921, %v1920
        %v1937 = vpack.c.b16 %v1923, %v1922
        %v1938 = vpack.c.b16 %v1925, %v1924
        %v1939 = vpack.c.b16 %v1927, %v1926
        %v1940 = vpack.c.b16 %v1929, %v1928
        %v1941 = vpack.c.b16 %v1931, %v1930
        %v1942 = vpack.c.b16 %v1933, %v1932
        %v1943 = vpack.c.b16 %v1934, %v1934
        %v1953 = vsel %vm1622, %v1943, 0
        %1955 = vmatprep.subr.bf16.mxu0 0
        %1956 = vmatpush1.bf16.msra.mxu0 %v1942
        %1957 = vmatprep.subr.bf16.mxu0 0
        %1958 = vmatpush1.bf16.msra.mxu0 %v1941
        %1959 = vmatprep.subr.bf16.mxu0 0
        %1960 = vmatpush1.bf16.msra.mxu0 %v1940
        %1961 = vmatprep.subr.bf16.mxu0 0
        %1962 = vmatpush1.bf16.msra.mxu0 %v1939
        %1963 = vmatprep.subr.bf16.mxu0 0
        %1964 = vmatpush1.bf16.msra.mxu0 %v1938
        %1965 = vmatprep.subr.bf16.mxu0 0
        %1966 = vmatpush1.bf16.msra.mxu0 %v1937
        %1967 = vmatprep.subr.bf16.mxu0 0
        %1968 = vmatpush1.bf16.msra.mxu0 %v1936
        %1969 = vmatprep.subr.bf16.mxu0 0
        %1970 = vmatpush1.bf16.msra.mxu0 %v1935
        %1971 = vmatprep.subr.bf16.mxu0 0
        %1972 = vmatpush2.bf16.msra.mxu0 0
        %1973 = vmatprep.subr.bf16.mxu0 0
        %1974 = vmatpush2.bf16.msra.mxu0 0
        %1975 = vmatprep.subr.bf16.mxu0 0
        %1976 = vmatpush2.bf16.msra.mxu0 0
        %1977 = vmatprep.subr.bf16.mxu0 0
        %1978 = vmatpush2.bf16.msra.mxu0 0
        %1979 = vmatprep.subr.bf16.mxu0 0
        %1980 = vmatpush2.bf16.msra.mxu0 0
        %1981 = vmatprep.subr.bf16.mxu0 0
        %1982 = vmatpush2.bf16.msra.mxu0 0
        %1983 = vmatprep.subr.bf16.mxu0 0
        %1984 = vmatpush2.bf16.msra.mxu0 0
        %1985 = vmatprep.subr.bf16.mxu0 0
        %1986 = vmatpush2.bf16.msra.mxu0 %v1953
        %1987 = vmatprep.mubr.bf16.mxu0 %v1599
        %1988 = vmatmul.mubr.bf16.gmra.mxu0 %v1522
        %v1989 = vpop.f32.mrf.mxu0
        %v1990 = vadd.f32 %v1839, %v1989
        %v1991 = vpop.f32.mrf.mxu0
        %v1992 = vpop.f32.mrf.mxu0
        %v1993 = vadd.f32 %v1842, %v1992
        %v1994 = vpop.f32.mrf.mxu0
        %1995 = vmatprep.mubr.bf16.mxu0 %v1602
        %1996 = vmatmul.mubr.bf16.gmra.mxu0 %v1524
        %v1997 = vpop.f32.mrf.mxu0
        %v1998 = vadd.f32 %v1847, %v1997
        %v1999 = vpop.f32.mrf.mxu0
        %v2000 = vpop.f32.mrf.mxu0
        %v2001 = vadd.f32 %v1850, %v2000
        %v2002 = vpop.f32.mrf.mxu0
        %2003 = vmatprep.mubr.bf16.mxu0 %v1605
        %2004 = vmatmul.mubr.bf16.gmra.mxu0 %v1526
        %v2005 = vpop.f32.mrf.mxu0
        %v2006 = vadd.f32 %v1855, %v2005
        %v2007 = vpop.f32.mrf.mxu0
        %v2008 = vpop.f32.mrf.mxu0
        %v2009 = vadd.f32 %v1858, %v2008
        %v2010 = vpop.f32.mrf.mxu0
        %2011 = vmatprep.mubr.bf16.mxu0 %v1608
        %2012 = vmatmul.mubr.bf16.gmra.mxu0 %v1528
        %v2013 = vpop.f32.mrf.mxu0
        %v2014 = vadd.f32 %v1863, %v2013
        %v2015 = vpop.f32.mrf.mxu0
        %v2016 = vpop.f32.mrf.mxu0
        %v2017 = vadd.f32 %v1866, %v2016
        %v2018 = vpop.f32.mrf.mxu0
        %2019 = vmatprep.mubr.bf16.mxu0 %v1611
        %2020 = vmatmul.mubr.bf16.gmra.mxu0 %v1530
        %v2021 = vpop.f32.mrf.mxu0
        %v2022 = vadd.f32 %v1871, %v2021
        %v2023 = vpop.f32.mrf.mxu0
        %v2024 = vpop.f32.mrf.mxu0
        %v2025 = vadd.f32 %v1874, %v2024
        %v2026 = vpop.f32.mrf.mxu0
        %2027 = vmatprep.mubr.bf16.mxu0 %v1614
        %2028 = vmatmul.mubr.bf16.gmra.mxu0 %v1532
        %v2029 = vpop.f32.mrf.mxu0
        %v2030 = vadd.f32 %v1879, %v2029
        %v2031 = vpop.f32.mrf.mxu0
        %v2032 = vpop.f32.mrf.mxu0
        %v2033 = vadd.f32 %v1882, %v2032
        %v2034 = vpop.f32.mrf.mxu0
        %2035 = vmatprep.mubr.bf16.mxu0 %v1617
        %2036 = vmatmul.mubr.bf16.gmra.mxu0 %v1534
        %v2037 = vpop.f32.mrf.mxu0
        %v2038 = vadd.f32 %v1887, %v2037
        %v2039 = vpop.f32.mrf.mxu0
        %v2040 = vpop.f32.mrf.mxu0
        %v2041 = vadd.f32 %v1890, %v2040
        %v2042 = vpop.f32.mrf.mxu0
        %2043 = vmatprep.mubr.bf16.mxu0 %v1620
        %2044 = vmatmul.mubr.bf16.gmra.mxu0 %v1536
        %v2045 = vpop.f32.mrf.mxu0
        %v2046 = vadd.f32 %v1895, %v2045
        %v2047 = vpop.f32.mrf.mxu0
        %v2048 = vpop.f32.mrf.mxu0
        %v2049 = vadd.f32 %v1898, %v2048
        %v2050 = vpop.f32.mrf.mxu0
        %2051 = vdwg.mxu0
        %v2052 = vxor.u32 %v1661, 2147483648
        %v2053 = vxor.u32 %v1664, 2147483648
        %v2054 = vxor.u32 %v1669, 2147483648
        %v2055 = vxor.u32 %v1672, 2147483648
        %v2056 = vxor.u32 %v1677, 2147483648
        %v2057 = vxor.u32 %v1680, 2147483648
        %v2058 = vxor.u32 %v1685, 2147483648
        %v2059 = vxor.u32 %v1688, 2147483648
        %v2060 = vxor.u32 %v1693, 2147483648
        %v2061 = vxor.u32 %v1696, 2147483648
        %v2062 = vxor.u32 %v1701, 2147483648
        %v2063 = vxor.u32 %v1704, 2147483648
        %v2064 = vxor.u32 %v1709, 2147483648
        %v2065 = vxor.u32 %v1712, 2147483648
        %v2066 = vxor.u32 %v1717, 2147483648
        %v2067 = vxor.u32 %v1720, 2147483648
        %v2068 = vmul.f32 %v2052, 1.442695
        %v2069 = vpow.pop %v2068
        %v2070 = vmul.f32 %v2053, 1.442695
        %v2071 = vpow.pop %v2070
        %v2072 = vmul.f32 %v2054, 1.442695
        %v2073 = vpow.pop %v2072
        %v2074 = vmul.f32 %v2055, 1.442695
        %v2075 = vpow.pop %v2074
        %v2076 = vmul.f32 %v2056, 1.442695
        %v2077 = vpow.pop %v2076
        %v2078 = vmul.f32 %v2057, 1.442695
        %v2079 = vpow.pop %v2078
        %v2080 = vmul.f32 %v2058, 1.442695
        %v2081 = vpow.pop %v2080
        %v2082 = vmul.f32 %v2059, 1.442695
        %v2083 = vpow.pop %v2082
        %v2084 = vmul.f32 %v2060, 1.442695
        %v2085 = vpow.pop %v2084
        %v2086 = vmul.f32 %v2061, 1.442695
        %v2087 = vpow.pop %v2086
        %v2088 = vmul.f32 %v2062, 1.442695
        %v2089 = vpow.pop %v2088
        %v2090 = vmul.f32 %v2063, 1.442695
        %v2091 = vpow.pop %v2090
        %v2092 = vmul.f32 %v2064, 1.442695
        %v2093 = vpow.pop %v2092
        %v2094 = vmul.f32 %v2065, 1.442695
        %v2095 = vpow.pop %v2094
        %v2096 = vmul.f32 %v2066, 1.442695
        %v2097 = vpow.pop %v2096
        %v2098 = vmul.f32 %v2067, 1.442695
        %v2099 = vpow.pop %v2098
        %v2100 = vadd.f32 %v2069, 1.0
        %v2101 = vadd.f32 %v2071, 1.0
        %v2102 = vadd.f32 %v2073, 1.0
        %v2103 = vadd.f32 %v2075, 1.0
        %v2104 = vadd.f32 %v2077, 1.0
        %v2105 = vadd.f32 %v2079, 1.0
        %v2106 = vadd.f32 %v2081, 1.0
        %v2107 = vadd.f32 %v2083, 1.0
        %v2108 = vadd.f32 %v2085, 1.0
        %v2109 = vadd.f32 %v2087, 1.0
        %v2110 = vadd.f32 %v2089, 1.0
        %v2111 = vadd.f32 %v2091, 1.0
        %v2112 = vadd.f32 %v2093, 1.0
        %v2113 = vadd.f32 %v2095, 1.0
        %v2114 = vadd.f32 %v2097, 1.0
        %v2115 = vadd.f32 %v2099, 1.0
        %v2116 = vrcp.pop %v2100
        %v2117 = vmul.f32 1.0, %v2116
        %v2118 = vrcp.pop %v2101
        %v2119 = vmul.f32 1.0, %v2118
        %v2120 = vrcp.pop %v2102
        %v2121 = vmul.f32 1.0, %v2120
        %v2122 = vrcp.pop %v2103
        %v2123 = vmul.f32 1.0, %v2122
        %v2124 = vrcp.pop %v2104
        %v2125 = vmul.f32 1.0, %v2124
        %v2126 = vrcp.pop %v2105
        %v2127 = vmul.f32 1.0, %v2126
        %v2128 = vrcp.pop %v2106
        %v2129 = vmul.f32 1.0, %v2128
        %v2130 = vrcp.pop %v2107
        %v2131 = vmul.f32 1.0, %v2130
        %v2132 = vrcp.pop %v2108
        %v2133 = vmul.f32 1.0, %v2132
        %v2134 = vrcp.pop %v2109
        %v2135 = vmul.f32 1.0, %v2134
        %v2136 = vrcp.pop %v2110
        %v2137 = vmul.f32 1.0, %v2136
        %v2138 = vrcp.pop %v2111
        %v2139 = vmul.f32 1.0, %v2138
        %v2140 = vrcp.pop %v2112
        %v2141 = vmul.f32 1.0, %v2140
        %v2142 = vrcp.pop %v2113
        %v2143 = vmul.f32 1.0, %v2142
        %v2144 = vrcp.pop %v2114
        %v2145 = vmul.f32 1.0, %v2144
        %v2146 = vrcp.pop %v2115
        %v2147 = vmul.f32 1.0, %v2146
        %v2148 = vmul.f32 %v1661, %v2117
        %v2149 = vmul.f32 %v1664, %v2119
        %v2150 = vmul.f32 %v1669, %v2121
        %v2151 = vmul.f32 %v1672, %v2123
        %v2152 = vmul.f32 %v1677, %v2125
        %v2153 = vmul.f32 %v1680, %v2127
        %v2154 = vmul.f32 %v1685, %v2129
        %v2155 = vmul.f32 %v1688, %v2131
        %v2156 = vmul.f32 %v1693, %v2133
        %v2157 = vmul.f32 %v1696, %v2135
        %v2158 = vmul.f32 %v1701, %v2137
        %v2159 = vmul.f32 %v1704, %v2139
        %v2160 = vmul.f32 %v1709, %v2141
        %v2161 = vmul.f32 %v1712, %v2143
        %v2162 = vmul.f32 %v1717, %v2145
        %v2163 = vmul.f32 %v1720, %v2147
        %v2164 = vmul.f32 %v2148, %v1990
        %v2165 = vmul.f32 %v2149, %v1993
        %v2166 = vmul.f32 %v2150, %v1998
        %v2167 = vmul.f32 %v2151, %v2001
        %v2168 = vmul.f32 %v2152, %v2006
        %v2169 = vmul.f32 %v2153, %v2009
        %v2170 = vmul.f32 %v2154, %v2014
        %v2171 = vmul.f32 %v2155, %v2017
        %v2172 = vmul.f32 %v2156, %v2022
        %v2173 = vmul.f32 %v2157, %v2025
        %v2174 = vmul.f32 %v2158, %v2030
        %v2175 = vmul.f32 %v2159, %v2033
        %v2176 = vmul.f32 %v2160, %v2038
        %v2177 = vmul.f32 %v2161, %v2041
        %v2178 = vmul.f32 %v2162, %v2046
        %v2179 = vmul.f32 %v2163, %v2049
        %v2180 = vpack.c.bf16 %v2165, %v2164
        %v2181 = vpack.c.bf16 %v2167, %v2166
        %v2182 = vpack.c.bf16 %v2169, %v2168
        %v2183 = vpack.c.bf16 %v2171, %v2170
        %v2184 = vpack.c.bf16 %v2173, %v2172
        %v2185 = vpack.c.bf16 %v2175, %v2174
        %v2186 = vpack.c.bf16 %v2177, %v2176
        %v2187 = vpack.c.bf16 %v2179, %v2178
        %v2188 = vld [vmem:[#allocation2] sm:$0xff]
        %v2189 = vld [vmem:[#allocation2 + $0x8] sm:$0xff]
        %v2190 = vld [vmem:[#allocation2 + $0x10] sm:$0xff]
        %v2191 = vld [vmem:[#allocation2 + $0x18] sm:$0xff]
        %v2192 = vld [vmem:[#allocation2 + $0x20] sm:$0xff]
        %v2193 = vld [vmem:[#allocation2 + $0x28] sm:$0xff]
        %v2194 = vld [vmem:[#allocation2 + $0x30] sm:$0xff]
        %v2195 = vld [vmem:[#allocation2 + $0x38] sm:$0xff]
        %v2196 = vld [vmem:[#allocation2 + $0x40] sm:$0xff]
        %v2197 = vld [vmem:[#allocation2 + $0x48] sm:$0xff]
        %v2198 = vld [vmem:[#allocation2 + $0x50] sm:$0xff]
        %v2199 = vld [vmem:[#allocation2 + $0x58] sm:$0xff]
        %v2200 = vld [vmem:[#allocation2 + $0x60] sm:$0xff]
        %v2201 = vld [vmem:[#allocation2 + $0x68] sm:$0xff]
        %v2202 = vld [vmem:[#allocation2 + $0x70] sm:$0xff]
        %v2203 = vld [vmem:[#allocation2 + $0x78] sm:$0xff]
        %v2204 = vld [vmem:[%s837] sm:$0xf]
        %v2205 = vld [vmem:[%s837 + $0x4] sm:$0xf]
        %v2206 = vld [vmem:[%s837 + $0x8] sm:$0xf]
        %v2207 = vld [vmem:[%s837 + $0xc] sm:$0xf]
        %v2208 = vld [vmem:[%s837 + $0x10] sm:$0xf]
        %v2209 = vld [vmem:[%s837 + $0x14] sm:$0xf]
        %v2210 = vld [vmem:[%s837 + $0x18] sm:$0xf]
        %v2211 = vld [vmem:[%s837 + $0x1c] sm:$0xf]
        %v2212 = vld [vmem:[%s837 + $0x20] sm:$0xf]
        %v2213 = vld [vmem:[%s837 + $0x24] sm:$0xf]
        %v2214 = vld [vmem:[%s837 + $0x28] sm:$0xf]
        %v2215 = vld [vmem:[%s837 + $0x2c] sm:$0xf]
        %v2216 = vld [vmem:[%s837 + $0x30] sm:$0xf]
        %v2217 = vld [vmem:[%s837 + $0x34] sm:$0xf]
        %v2218 = vld [vmem:[%s837 + $0x38] sm:$0xf]
        %v2219 = vld [vmem:[%s837 + $0x3c] sm:$0xf]
        %v2236 = vunpack.c.l.b16 %v2204
        %v2237 = vunpack.c.l.b16 %v2205
        %v2238 = vunpack.c.l.b16 %v2206
        %v2239 = vunpack.c.l.b16 %v2207
        %v2240 = vunpack.c.l.b16 %v2208
        %v2241 = vunpack.c.l.b16 %v2209
        %v2242 = vunpack.c.l.b16 %v2210
        %v2243 = vunpack.c.l.b16 %v2211
        %v2244 = vunpack.c.l.b16 %v2212
        %v2245 = vunpack.c.l.b16 %v2213
        %v2246 = vunpack.c.l.b16 %v2214
        %v2247 = vunpack.c.l.b16 %v2215
        %v2248 = vunpack.c.l.b16 %v2216
        %v2249 = vunpack.c.l.b16 %v2217
        %v2250 = vunpack.c.l.b16 %v2218
        %v2251 = vunpack.c.l.b16 %v2219
        %v2252 = vpack.c.b16 %v2237, %v2236
        %v2253 = vpack.c.b16 %v2239, %v2238
        %v2254 = vpack.c.b16 %v2241, %v2240
        %v2255 = vpack.c.b16 %v2243, %v2242
        %v2256 = vpack.c.b16 %v2245, %v2244
        %v2257 = vpack.c.b16 %v2247, %v2246
        %v2258 = vpack.c.b16 %v2249, %v2248
        %v2259 = vpack.c.b16 %v2251, %v2250
        %2268 = vmatprep.subr.bf16.mxu0 0
        %2269 = vmatpush1.bf16.msra.mxu0 %v2259
        %2270 = vmatprep.subr.bf16.mxu0 0
        %2271 = vmatpush1.bf16.msra.mxu0 %v2258
        %2272 = vmatprep.subr.bf16.mxu0 0
        %2273 = vmatpush1.bf16.msra.mxu0 %v2257
        %2274 = vmatprep.subr.bf16.mxu0 0
        %2275 = vmatpush1.bf16.msra.mxu0 %v2256
        %2276 = vmatprep.subr.bf16.mxu0 0
        %2277 = vmatpush1.bf16.msra.mxu0 %v2255
        %2278 = vmatprep.subr.bf16.mxu0 0
        %2279 = vmatpush1.bf16.msra.mxu0 %v2254
        %2280 = vmatprep.subr.bf16.mxu0 0
        %2281 = vmatpush1.bf16.msra.mxu0 %v2253
        %2282 = vmatprep.subr.bf16.mxu0 0
        %2283 = vmatpush1.bf16.msra.mxu0 %v2252
        %2284 = vmatprep.subr.bf16.mxu0 0
        %2285 = vmatpush2.bf16.msra.mxu0 0
        %2286 = vmatprep.subr.bf16.mxu0 0
        %2287 = vmatpush2.bf16.msra.mxu0 0
        %2288 = vmatprep.subr.bf16.mxu0 0
        %2289 = vmatpush2.bf16.msra.mxu0 0
        %2290 = vmatprep.subr.bf16.mxu0 0
        %2291 = vmatpush2.bf16.msra.mxu0 0
        %2292 = vmatprep.subr.bf16.mxu0 0
        %2293 = vmatpush2.bf16.msra.mxu0 0
        %2294 = vmatprep.subr.bf16.mxu0 0
        %2295 = vmatpush2.bf16.msra.mxu0 0
        %2296 = vmatprep.subr.bf16.mxu0 0
        %2297 = vmatpush2.bf16.msra.mxu0 0
        %2298 = vmatprep.subr.bf16.mxu0 0
        %2299 = vmatpush2.bf16.msra.mxu0 0
        %2300 = vmatprep.mubr.bf16.mxu0 0
        %2301 = vmatmul.mubr.bf16.gmra.mxu0 %v2180
        %v2302 = vpop.f32.mrf.mxu0
        %v2303 = vadd.f32 0.0, %v2302
        %v2304 = vpop.f32.mrf.mxu0
        %v2305 = vpop.f32.mrf.mxu0
        %v2306 = vadd.f32 0.0, %v2305
        %v2307 = vpop.f32.mrf.mxu0
        %2308 = vmatprep.mubr.bf16.mxu0 0
        %2309 = vmatmul.mubr.bf16.gmra.mxu0 %v2181
        %v2310 = vpop.f32.mrf.mxu0
        %v2311 = vadd.f32 0.0, %v2310
        %v2312 = vpop.f32.mrf.mxu0
        %v2313 = vpop.f32.mrf.mxu0
        %v2314 = vadd.f32 0.0, %v2313
        %v2315 = vpop.f32.mrf.mxu0
        %2316 = vmatprep.mubr.bf16.mxu0 0
        %2317 = vmatmul.mubr.bf16.gmra.mxu0 %v2182
        %v2318 = vpop.f32.mrf.mxu0
        %v2319 = vadd.f32 0.0, %v2318
        %v2320 = vpop.f32.mrf.mxu0
        %v2321 = vpop.f32.mrf.mxu0
        %v2322 = vadd.f32 0.0, %v2321
        %v2323 = vpop.f32.mrf.mxu0
        %2324 = vmatprep.mubr.bf16.mxu0 0
        %2325 = vmatmul.mubr.bf16.gmra.mxu0 %v2183
        %v2326 = vpop.f32.mrf.mxu0
        %v2327 = vadd.f32 0.0, %v2326
        %v2328 = vpop.f32.mrf.mxu0
        %v2329 = vpop.f32.mrf.mxu0
        %v2330 = vadd.f32 0.0, %v2329
        %v2331 = vpop.f32.mrf.mxu0
        %2332 = vmatprep.mubr.bf16.mxu0 0
        %2333 = vmatmul.mubr.bf16.gmra.mxu0 %v2184
        %v2334 = vpop.f32.mrf.mxu0
        %v2335 = vadd.f32 0.0, %v2334
        %v2336 = vpop.f32.mrf.mxu0
        %v2337 = vpop.f32.mrf.mxu0
        %v2338 = vadd.f32 0.0, %v2337
        %v2339 = vpop.f32.mrf.mxu0
        %2340 = vmatprep.mubr.bf16.mxu0 0
        %2341 = vmatmul.mubr.bf16.gmra.mxu0 %v2185
        %v2342 = vpop.f32.mrf.mxu0
        %v2343 = vadd.f32 0.0, %v2342
        %v2344 = vpop.f32.mrf.mxu0
        %v2345 = vpop.f32.mrf.mxu0
        %v2346 = vadd.f32 0.0, %v2345
        %v2347 = vpop.f32.mrf.mxu0
        %2348 = vmatprep.mubr.bf16.mxu0 0
        %2349 = vmatmul.mubr.bf16.gmra.mxu0 %v2186
        %v2350 = vpop.f32.mrf.mxu0
        %v2351 = vadd.f32 0.0, %v2350
        %v2352 = vpop.f32.mrf.mxu0
        %v2353 = vpop.f32.mrf.mxu0
        %v2354 = vadd.f32 0.0, %v2353
        %v2355 = vpop.f32.mrf.mxu0
        %2356 = vmatprep.mubr.bf16.mxu0 0
        %2357 = vmatmul.mubr.bf16.gmra.mxu0 %v2187
        %v2358 = vpop.f32.mrf.mxu0
        %v2359 = vadd.f32 0.0, %v2358
        %v2360 = vpop.f32.mrf.mxu0
        %v2361 = vpop.f32.mrf.mxu0
        %v2362 = vadd.f32 0.0, %v2361
        %v2363 = vpop.f32.mrf.mxu0
        %2364 = vdwg.mxu0
        %v2365 = vadd.f32 %v2188, %v2303
        %v2366 = vadd.f32 %v2189, %v2306
        %v2367 = vadd.f32 %v2190, %v2311
        %v2368 = vadd.f32 %v2191, %v2314
        %v2369 = vadd.f32 %v2192, %v2319
        %v2370 = vadd.f32 %v2193, %v2322
        %v2371 = vadd.f32 %v2194, %v2327
        %v2372 = vadd.f32 %v2195, %v2330
        %v2373 = vadd.f32 %v2196, %v2335
        %v2374 = vadd.f32 %v2197, %v2338
        %v2375 = vadd.f32 %v2198, %v2343
        %v2376 = vadd.f32 %v2199, %v2346
        %v2377 = vadd.f32 %v2200, %v2351
        %v2378 = vadd.f32 %v2201, %v2354
        %v2379 = vadd.f32 %v2202, %v2359
        %v2380 = vadd.f32 %v2203, %v2362
        %2381 = vst [vmem:[#allocation2] sm:$0xff] %v2365
        %2382 = vst [vmem:[#allocation2 + $0x8] sm:$0xff] %v2366
        %2383 = vst [vmem:[#allocation2 + $0x10] sm:$0xff] %v2367
        %2384 = vst [vmem:[#allocation2 + $0x18] sm:$0xff] %v2368
        %2385 = vst [vmem:[#allocation2 + $0x20] sm:$0xff] %v2369
        %2386 = vst [vmem:[#allocation2 + $0x28] sm:$0xff] %v2370
        %2387 = vst [vmem:[#allocation2 + $0x30] sm:$0xff] %v2371
        %2388 = vst [vmem:[#allocation2 + $0x38] sm:$0xff] %v2372
        %2389 = vst [vmem:[#allocation2 + $0x40] sm:$0xff] %v2373
        %2390 = vst [vmem:[#allocation2 + $0x48] sm:$0xff] %v2374
        %2391 = vst [vmem:[#allocation2 + $0x50] sm:$0xff] %v2375
        %2392 = vst [vmem:[#allocation2 + $0x58] sm:$0xff] %v2376
        %2393 = vst [vmem:[#allocation2 + $0x60] sm:$0xff] %v2377
        %2394 = vst [vmem:[#allocation2 + $0x68] sm:$0xff] %v2378
        %2395 = vst [vmem:[#allocation2 + $0x70] sm:$0xff] %v2379
        %2396 = vst [vmem:[#allocation2 + $0x78] sm:$0xff] %v2380
        %v2397 = vld [vmem:[#allocation3] sm:$0xff]
        %v2398 = vld [vmem:[#allocation3 + $0x8] sm:$0xff]
        %v2399 = vld [vmem:[#allocation3 + $0x10] sm:$0xff]
        %v2400 = vld [vmem:[#allocation3 + $0x18] sm:$0xff]
        %v2401 = vld [vmem:[#allocation3 + $0x20] sm:$0xff]
        %v2402 = vld [vmem:[#allocation3 + $0x28] sm:$0xff]
        %v2403 = vld [vmem:[#allocation3 + $0x30] sm:$0xff]
        %v2404 = vld [vmem:[#allocation3 + $0x38] sm:$0xff]
        %v2405 = vld [vmem:[#allocation3 + $0x40] sm:$0xff]
        %v2406 = vld [vmem:[#allocation3 + $0x48] sm:$0xff]
        %v2407 = vld [vmem:[#allocation3 + $0x50] sm:$0xff]
        %v2408 = vld [vmem:[#allocation3 + $0x58] sm:$0xff]
        %v2409 = vld [vmem:[#allocation3 + $0x60] sm:$0xff]
        %v2410 = vld [vmem:[#allocation3 + $0x68] sm:$0xff]
        %v2411 = vld [vmem:[#allocation3 + $0x70] sm:$0xff]
        %v2412 = vld [vmem:[#allocation3 + $0x78] sm:$0xff]
        %v2413 = vld [vmem:[%s843] sm:$0xf]
        %v2414 = vld [vmem:[%s843 + $0x4] sm:$0xf]
        %v2415 = vld [vmem:[%s843 + $0x8] sm:$0xf]
        %v2416 = vld [vmem:[%s843 + $0xc] sm:$0xf]
        %v2417 = vld [vmem:[%s843 + $0x10] sm:$0xf]
        %v2418 = vld [vmem:[%s843 + $0x14] sm:$0xf]
        %v2419 = vld [vmem:[%s843 + $0x18] sm:$0xf]
        %v2420 = vld [vmem:[%s843 + $0x1c] sm:$0xf]
        %v2421 = vld [vmem:[%s843 + $0x20] sm:$0xf]
        %v2422 = vld [vmem:[%s843 + $0x24] sm:$0xf]
        %v2423 = vld [vmem:[%s843 + $0x28] sm:$0xf]
        %v2424 = vld [vmem:[%s843 + $0x2c] sm:$0xf]
        %v2425 = vld [vmem:[%s843 + $0x30] sm:$0xf]
        %v2426 = vld [vmem:[%s843 + $0x34] sm:$0xf]
        %v2427 = vld [vmem:[%s843 + $0x38] sm:$0xf]
        %v2428 = vld [vmem:[%s843 + $0x3c] sm:$0xf]
        %v2445 = vunpack.c.l.b16 %v2413
        %v2446 = vunpack.c.l.b16 %v2414
        %v2447 = vunpack.c.l.b16 %v2415
        %v2448 = vunpack.c.l.b16 %v2416
        %v2449 = vunpack.c.l.b16 %v2417
        %v2450 = vunpack.c.l.b16 %v2418
        %v2451 = vunpack.c.l.b16 %v2419
        %v2452 = vunpack.c.l.b16 %v2420
        %v2453 = vunpack.c.l.b16 %v2421
        %v2454 = vunpack.c.l.b16 %v2422
        %v2455 = vunpack.c.l.b16 %v2423
        %v2456 = vunpack.c.l.b16 %v2424
        %v2457 = vunpack.c.l.b16 %v2425
        %v2458 = vunpack.c.l.b16 %v2426
        %v2459 = vunpack.c.l.b16 %v2427
        %v2460 = vunpack.c.l.b16 %v2428
        %v2461 = vpack.c.b16 %v2446, %v2445
        %v2462 = vpack.c.b16 %v2448, %v2447
        %v2463 = vpack.c.b16 %v2450, %v2449
        %v2464 = vpack.c.b16 %v2452, %v2451
        %v2465 = vpack.c.b16 %v2454, %v2453
        %v2466 = vpack.c.b16 %v2456, %v2455
        %v2467 = vpack.c.b16 %v2458, %v2457
        %v2468 = vpack.c.b16 %v2460, %v2459
        %2477 = vmatprep.subr.bf16.mxu0 0
        %2478 = vmatpush1.bf16.msra.mxu0 %v2468
        %2479 = vmatprep.subr.bf16.mxu0 0
        %2480 = vmatpush1.bf16.msra.mxu0 %v2467
        %2481 = vmatprep.subr.bf16.mxu0 0
        %2482 = vmatpush1.bf16.msra.mxu0 %v2466
        %2483 = vmatprep.subr.bf16.mxu0 0
        %2484 = vmatpush1.bf16.msra.mxu0 %v2465
        %2485 = vmatprep.subr.bf16.mxu0 0
        %2486 = vmatpush1.bf16.msra.mxu0 %v2464
        %2487 = vmatprep.subr.bf16.mxu0 0
        %2488 = vmatpush1.bf16.msra.mxu0 %v2463
        %2489 = vmatprep.subr.bf16.mxu0 0
        %2490 = vmatpush1.bf16.msra.mxu0 %v2462
        %2491 = vmatprep.subr.bf16.mxu0 0
        %2492 = vmatpush1.bf16.msra.mxu0 %v2461
        %2493 = vmatprep.subr.bf16.mxu0 0
        %2494 = vmatpush2.bf16.msra.mxu0 0
        %2495 = vmatprep.subr.bf16.mxu0 0
        %2496 = vmatpush2.bf16.msra.mxu0 0
        %2497 = vmatprep.subr.bf16.mxu0 0
        %2498 = vmatpush2.bf16.msra.mxu0 0
        %2499 = vmatprep.subr.bf16.mxu0 0
        %2500 = vmatpush2.bf16.msra.mxu0 0
        %2501 = vmatprep.subr.bf16.mxu0 0
        %2502 = vmatpush2.bf16.msra.mxu0 0
        %2503 = vmatprep.subr.bf16.mxu0 0
        %2504 = vmatpush2.bf16.msra.mxu0 0
        %2505 = vmatprep.subr.bf16.mxu0 0
        %2506 = vmatpush2.bf16.msra.mxu0 0
        %2507 = vmatprep.subr.bf16.mxu0 0
        %2508 = vmatpush2.bf16.msra.mxu0 0
        %2509 = vmatprep.mubr.bf16.mxu0 0
        %2510 = vmatmul.mubr.bf16.gmra.mxu0 %v2180
        %v2511 = vpop.f32.mrf.mxu0
        %v2512 = vadd.f32 0.0, %v2511
        %v2513 = vpop.f32.mrf.mxu0
        %v2514 = vpop.f32.mrf.mxu0
        %v2515 = vadd.f32 0.0, %v2514
        %v2516 = vpop.f32.mrf.mxu0
        %2517 = vmatprep.mubr.bf16.mxu0 0
        %2518 = vmatmul.mubr.bf16.gmra.mxu0 %v2181
        %v2519 = vpop.f32.mrf.mxu0
        %v2520 = vadd.f32 0.0, %v2519
        %v2521 = vpop.f32.mrf.mxu0
        %v2522 = vpop.f32.mrf.mxu0
        %v2523 = vadd.f32 0.0, %v2522
        %v2524 = vpop.f32.mrf.mxu0
        %2525 = vmatprep.mubr.bf16.mxu0 0
        %2526 = vmatmul.mubr.bf16.gmra.mxu0 %v2182
        %v2527 = vpop.f32.mrf.mxu0
        %v2528 = vadd.f32 0.0, %v2527
        %v2529 = vpop.f32.mrf.mxu0
        %v2530 = vpop.f32.mrf.mxu0
        %v2531 = vadd.f32 0.0, %v2530
        %v2532 = vpop.f32.mrf.mxu0
        %2533 = vmatprep.mubr.bf16.mxu0 0
        %2534 = vmatmul.mubr.bf16.gmra.mxu0 %v2183
        %v2535 = vpop.f32.mrf.mxu0
        %v2536 = vadd.f32 0.0, %v2535
        %v2537 = vpop.f32.mrf.mxu0
        %v2538 = vpop.f32.mrf.mxu0
        %v2539 = vadd.f32 0.0, %v2538
        %v2540 = vpop.f32.mrf.mxu0
        %2541 = vmatprep.mubr.bf16.mxu0 0
        %2542 = vmatmul.mubr.bf16.gmra.mxu0 %v2184
        %v2543 = vpop.f32.mrf.mxu0
        %v2544 = vadd.f32 0.0, %v2543
        %v2545 = vpop.f32.mrf.mxu0
        %v2546 = vpop.f32.mrf.mxu0
        %v2547 = vadd.f32 0.0, %v2546
        %v2548 = vpop.f32.mrf.mxu0
        %2549 = vmatprep.mubr.bf16.mxu0 0
        %2550 = vmatmul.mubr.bf16.gmra.mxu0 %v2185
        %v2551 = vpop.f32.mrf.mxu0
        %v2552 = vadd.f32 0.0, %v2551
        %v2553 = vpop.f32.mrf.mxu0
        %v2554 = vpop.f32.mrf.mxu0
        %v2555 = vadd.f32 0.0, %v2554
        %v2556 = vpop.f32.mrf.mxu0
        %2557 = vmatprep.mubr.bf16.mxu0 0
        %2558 = vmatmul.mubr.bf16.gmra.mxu0 %v2186
        %v2559 = vpop.f32.mrf.mxu0
        %v2560 = vadd.f32 0.0, %v2559
        %v2561 = vpop.f32.mrf.mxu0
        %v2562 = vpop.f32.mrf.mxu0
        %v2563 = vadd.f32 0.0, %v2562
        %v2564 = vpop.f32.mrf.mxu0
        %2565 = vmatprep.mubr.bf16.mxu0 0
        %2566 = vmatmul.mubr.bf16.gmra.mxu0 %v2187
        %v2567 = vpop.f32.mrf.mxu0
        %v2568 = vadd.f32 0.0, %v2567
        %v2569 = vpop.f32.mrf.mxu0
        %v2570 = vpop.f32.mrf.mxu0
        %v2571 = vadd.f32 0.0, %v2570
        %v2572 = vpop.f32.mrf.mxu0
        %2573 = vdwg.mxu0
        %v2574 = vadd.f32 %v2397, %v2512
        %v2575 = vadd.f32 %v2398, %v2515
        %v2576 = vadd.f32 %v2399, %v2520
        %v2577 = vadd.f32 %v2400, %v2523
        %v2578 = vadd.f32 %v2401, %v2528
        %v2579 = vadd.f32 %v2402, %v2531
        %v2580 = vadd.f32 %v2403, %v2536
        %v2581 = vadd.f32 %v2404, %v2539
        %v2582 = vadd.f32 %v2405, %v2544
        %v2583 = vadd.f32 %v2406, %v2547
        %v2584 = vadd.f32 %v2407, %v2552
        %v2585 = vadd.f32 %v2408, %v2555
        %v2586 = vadd.f32 %v2409, %v2560
        %v2587 = vadd.f32 %v2410, %v2563
        %v2588 = vadd.f32 %v2411, %v2568
        %v2589 = vadd.f32 %v2412, %v2571
        %2590 = vst.msk [vmem:[#allocation3] sm:$0xff] %vm1352, %v2574
        %2591 = vst.msk [vmem:[#allocation3 + $0x8] sm:$0xff] %vm1352, %v2575
        %2592 = vst.msk [vmem:[#allocation3 + $0x10] sm:$0xff] %vm1352, %v2576
        %2593 = vst.msk [vmem:[#allocation3 + $0x18] sm:$0xff] %vm1352, %v2577
        %2594 = vst.msk [vmem:[#allocation3 + $0x20] sm:$0xff] %vm1352, %v2578
        %2595 = vst.msk [vmem:[#allocation3 + $0x28] sm:$0xff] %vm1352, %v2579
        %2596 = vst.msk [vmem:[#allocation3 + $0x30] sm:$0xff] %vm1352, %v2580
        %2597 = vst.msk [vmem:[#allocation3 + $0x38] sm:$0xff] %vm1352, %v2581
        %2598 = vst.msk [vmem:[#allocation3 + $0x40] sm:$0xff] %vm1352, %v2582
        %2599 = vst.msk [vmem:[#allocation3 + $0x48] sm:$0xff] %vm1352, %v2583
        %2600 = vst.msk [vmem:[#allocation3 + $0x50] sm:$0xff] %vm1352, %v2584
        %2601 = vst.msk [vmem:[#allocation3 + $0x58] sm:$0xff] %vm1352, %v2585
        %2602 = vst.msk [vmem:[#allocation3 + $0x60] sm:$0xff] %vm1352, %v2586
        %2603 = vst.msk [vmem:[#allocation3 + $0x68] sm:$0xff] %vm1352, %v2587
        %2604 = vst.msk [vmem:[#allocation3 + $0x70] sm:$0xff] %vm1352, %v2588
        %2605 = vst.msk [vmem:[#allocation3 + $0x78] sm:$0xff] %vm1352, %v2589
        %p2606 = scmp.eq.s32.totalorder %s29, 1
        // Predicated region
        $region229: #{tpu_custom_call.1} parent=207 // pred_check
          %p2607 = pneg %p2606
        $region230: #{tpu_custom_call.1} parent=207 // pred_check_branch
          %2609 = sbr.rel (%p2607) target = $region232
        $region231: #{tpu_custom_call.1} parent=207 // pred_region
          %v2610 = vld [vmem:[#allocation3] sm:$0xff]
          %v2611 = vld [vmem:[#allocation3 + $0x8] sm:$0xff]
          %v2612 = vld [vmem:[#allocation3 + $0x10] sm:$0xff]
          %v2613 = vld [vmem:[#allocation3 + $0x18] sm:$0xff]
          %v2614 = vld [vmem:[#allocation3 + $0x20] sm:$0xff]
          %v2615 = vld [vmem:[#allocation3 + $0x28] sm:$0xff]
          %v2616 = vld [vmem:[#allocation3 + $0x30] sm:$0xff]
          %v2617 = vld [vmem:[#allocation3 + $0x38] sm:$0xff]
          %v2618 = vld [vmem:[#allocation3 + $0x40] sm:$0xff]
          %v2619 = vld [vmem:[#allocation3 + $0x48] sm:$0xff]
          %v2620 = vld [vmem:[#allocation3 + $0x50] sm:$0xff]
          %v2621 = vld [vmem:[#allocation3 + $0x58] sm:$0xff]
          %v2622 = vld [vmem:[#allocation3 + $0x60] sm:$0xff]
          %v2623 = vld [vmem:[#allocation3 + $0x68] sm:$0xff]
          %v2624 = vld [vmem:[#allocation3 + $0x70] sm:$0xff]
          %v2625 = vld [vmem:[#allocation3 + $0x78] sm:$0xff]
          %v2626 = vld [vmem:[%s831] sm:$0xff]
          %v2627 = vld [vmem:[%s831 + $0x8] sm:$0xff]
          %v2628 = vld [vmem:[%s831 + $0x10] sm:$0xff]
          %v2629 = vld [vmem:[%s831 + $0x18] sm:$0xff]
          %v2630 = vld [vmem:[%s831 + $0x20] sm:$0xff]
          %v2631 = vld [vmem:[%s831 + $0x28] sm:$0xff]
          %v2632 = vld [vmem:[%s831 + $0x30] sm:$0xff]
          %v2633 = vld [vmem:[%s831 + $0x38] sm:$0xff]
          %v2634 = vld [vmem:[%s831 + $0x40] sm:$0xff]
          %v2635 = vld [vmem:[%s831 + $0x48] sm:$0xff]
          %v2636 = vld [vmem:[%s831 + $0x50] sm:$0xff]
          %v2637 = vld [vmem:[%s831 + $0x58] sm:$0xff]
          %v2638 = vld [vmem:[%s831 + $0x60] sm:$0xff]
          %v2639 = vld [vmem:[%s831 + $0x68] sm:$0xff]
          %v2640 = vld [vmem:[%s831 + $0x70] sm:$0xff]
          %v2641 = vld [vmem:[%s831 + $0x78] sm:$0xff]
          %v2642 = vmul.f32 %v2610, %v2626
          %v2643 = vmul.f32 %v2611, %v2627
          %v2644 = vmul.f32 %v2612, %v2628
          %v2645 = vmul.f32 %v2613, %v2629
          %v2646 = vmul.f32 %v2614, %v2630
          %v2647 = vmul.f32 %v2615, %v2631
          %v2648 = vmul.f32 %v2616, %v2632
          %v2649 = vmul.f32 %v2617, %v2633
          %v2650 = vmul.f32 %v2618, %v2634
          %v2651 = vmul.f32 %v2619, %v2635
          %v2652 = vmul.f32 %v2620, %v2636
          %v2653 = vmul.f32 %v2621, %v2637
          %v2654 = vmul.f32 %v2622, %v2638
          %v2655 = vmul.f32 %v2623, %v2639
          %v2656 = vmul.f32 %v2624, %v2640
          %v2657 = vmul.f32 %v2625, %v2641
          %v2658 = vpack.c.bf16 %v2643, %v2642
          %v2659 = vpack.c.bf16 %v2645, %v2644
          %v2660 = vpack.c.bf16 %v2647, %v2646
          %v2661 = vpack.c.bf16 %v2649, %v2648
          %v2662 = vpack.c.bf16 %v2651, %v2650
          %v2663 = vpack.c.bf16 %v2653, %v2652
          %v2664 = vpack.c.bf16 %v2655, %v2654
          %v2665 = vpack.c.bf16 %v2657, %v2656
          %v2666 = vld [vmem:[#allocation2] sm:$0xff]
          %v2667 = vld [vmem:[#allocation2 + $0x8] sm:$0xff]
          %v2668 = vld [vmem:[#allocation2 + $0x10] sm:$0xff]
          %v2669 = vld [vmem:[#allocation2 + $0x18] sm:$0xff]
          %v2670 = vld [vmem:[#allocation2 + $0x20] sm:$0xff]
          %v2671 = vld [vmem:[#allocation2 + $0x28] sm:$0xff]
          %v2672 = vld [vmem:[#allocation2 + $0x30] sm:$0xff]
          %v2673 = vld [vmem:[#allocation2 + $0x38] sm:$0xff]
          %v2674 = vld [vmem:[#allocation2 + $0x40] sm:$0xff]
          %v2675 = vld [vmem:[#allocation2 + $0x48] sm:$0xff]
          %v2676 = vld [vmem:[#allocation2 + $0x50] sm:$0xff]
          %v2677 = vld [vmem:[#allocation2 + $0x58] sm:$0xff]
          %v2678 = vld [vmem:[#allocation2 + $0x60] sm:$0xff]
          %v2679 = vld [vmem:[#allocation2 + $0x68] sm:$0xff]
          %v2680 = vld [vmem:[#allocation2 + $0x70] sm:$0xff]
          %v2681 = vld [vmem:[#allocation2 + $0x78] sm:$0xff]
          %v2682 = vld [vmem:[%s3] sm:$0xf]
          %v2683 = vld [vmem:[%s3 + $0x4] sm:$0xf]
          %v2684 = vld [vmem:[%s3 + $0x8] sm:$0xf]
          %v2685 = vld [vmem:[%s3 + $0xc] sm:$0xf]
          %v2690 = vunpack.c.l.b16 %v2682
          %v2691 = vunpack.c.l.b16 %v2683
          %v2692 = vunpack.c.l.b16 %v2684
          %v2693 = vunpack.c.l.b16 %v2685
          %v2694 = vpack.c.b16 %v2691, %v2690
          %v2695 = vpack.c.b16 %v2693, %v2692
          %v2699 = vsel %vm1352, %v2658, 0
          %v2702 = vsel %vm1352, %v2659, 0
          %v2705 = vsel %vm1352, %v2660, 0
          %v2708 = vsel %vm1352, %v2661, 0
          %v2711 = vsel %vm1352, %v2662, 0
          %v2714 = vsel %vm1352, %v2663, 0
          %v2717 = vsel %vm1352, %v2664, 0
          %v2720 = vsel %vm1352, %v2665, 0
          %2722 = vmatprep.subr.bf16.mxu0 0
          %2723 = vmatpush1.bf16.msra.mxu0 0
          %2724 = vmatprep.subr.bf16.mxu0 0
          %2725 = vmatpush1.bf16.msra.mxu0 0
          %2726 = vmatprep.subr.bf16.mxu0 0
          %2727 = vmatpush1.bf16.msra.mxu0 0
          %2728 = vmatprep.subr.bf16.mxu0 0
          %2729 = vmatpush1.bf16.msra.mxu0 0
          %2730 = vmatprep.subr.bf16.mxu0 0
          %2731 = vmatpush1.bf16.msra.mxu0 0
          %2732 = vmatprep.subr.bf16.mxu0 0
          %2733 = vmatpush1.bf16.msra.mxu0 0
          %2734 = vmatprep.subr.bf16.mxu0 0
          %2735 = vmatpush1.bf16.msra.mxu0 %v2695
          %2736 = vmatprep.subr.bf16.mxu0 0
          %2737 = vmatpush1.bf16.msra.mxu0 %v2694
          %2738 = vmatprep.subr.bf16.mxu0 0
          %2739 = vmatpush2.bf16.msra.mxu0 0
          %2740 = vmatprep.subr.bf16.mxu0 0
          %2741 = vmatpush2.bf16.msra.mxu0 0
          %2742 = vmatprep.subr.bf16.mxu0 0
          %2743 = vmatpush2.bf16.msra.mxu0 0
          %2744 = vmatprep.subr.bf16.mxu0 0
          %2745 = vmatpush2.bf16.msra.mxu0 0
          %2746 = vmatprep.subr.bf16.mxu0 0
          %2747 = vmatpush2.bf16.msra.mxu0 0
          %2748 = vmatprep.subr.bf16.mxu0 0
          %2749 = vmatpush2.bf16.msra.mxu0 0
          %2750 = vmatprep.subr.bf16.mxu0 0
          %2751 = vmatpush2.bf16.msra.mxu0 0
          %2752 = vmatprep.subr.bf16.mxu0 0
          %2753 = vmatpush2.bf16.msra.mxu0 0
          %2754 = vmatprep.mubr.bf16.mxu0 0
          %2755 = vmatmul.mubr.bf16.gmra.mxu0 %v2699
          %v2756 = vpop.f32.mrf.mxu0
          %v2757 = vadd.f32 0.0, %v2756
          %v2758 = vpop.f32.mrf.mxu0
          %v2759 = vpop.f32.mrf.mxu0
          %v2760 = vadd.f32 0.0, %v2759
          %v2761 = vpop.f32.mrf.mxu0
          %2762 = vmatprep.mubr.bf16.mxu0 0
          %2763 = vmatmul.mubr.bf16.gmra.mxu0 %v2702
          %v2764 = vpop.f32.mrf.mxu0
          %v2765 = vadd.f32 0.0, %v2764
          %v2766 = vpop.f32.mrf.mxu0
          %v2767 = vpop.f32.mrf.mxu0
          %v2768 = vadd.f32 0.0, %v2767
          %v2769 = vpop.f32.mrf.mxu0
          %2770 = vmatprep.mubr.bf16.mxu0 0
          %2771 = vmatmul.mubr.bf16.gmra.mxu0 %v2705
          %v2772 = vpop.f32.mrf.mxu0
          %v2773 = vadd.f32 0.0, %v2772
          %v2774 = vpop.f32.mrf.mxu0
          %v2775 = vpop.f32.mrf.mxu0
          %v2776 = vadd.f32 0.0, %v2775
          %v2777 = vpop.f32.mrf.mxu0
          %2778 = vmatprep.mubr.bf16.mxu0 0
          %2779 = vmatmul.mubr.bf16.gmra.mxu0 %v2708
          %v2780 = vpop.f32.mrf.mxu0
          %v2781 = vadd.f32 0.0, %v2780
          %v2782 = vpop.f32.mrf.mxu0
          %v2783 = vpop.f32.mrf.mxu0
          %v2784 = vadd.f32 0.0, %v2783
          %v2785 = vpop.f32.mrf.mxu0
          %2786 = vmatprep.mubr.bf16.mxu0 0
          %2787 = vmatmul.mubr.bf16.gmra.mxu0 %v2711
          %v2788 = vpop.f32.mrf.mxu0
          %v2789 = vadd.f32 0.0, %v2788
          %v2790 = vpop.f32.mrf.mxu0
          %v2791 = vpop.f32.mrf.mxu0
          %v2792 = vadd.f32 0.0, %v2791
          %v2793 = vpop.f32.mrf.mxu0
          %2794 = vmatprep.mubr.bf16.mxu0 0
          %2795 = vmatmul.mubr.bf16.gmra.mxu0 %v2714
          %v2796 = vpop.f32.mrf.mxu0
          %v2797 = vadd.f32 0.0, %v2796
          %v2798 = vpop.f32.mrf.mxu0
          %v2799 = vpop.f32.mrf.mxu0
          %v2800 = vadd.f32 0.0, %v2799
          %v2801 = vpop.f32.mrf.mxu0
          %2802 = vmatprep.mubr.bf16.mxu0 0
          %2803 = vmatmul.mubr.bf16.gmra.mxu0 %v2717
          %v2804 = vpop.f32.mrf.mxu0
          %v2805 = vadd.f32 0.0, %v2804
          %v2806 = vpop.f32.mrf.mxu0
          %v2807 = vpop.f32.mrf.mxu0
          %v2808 = vadd.f32 0.0, %v2807
          %v2809 = vpop.f32.mrf.mxu0
          %2810 = vmatprep.mubr.bf16.mxu0 0
          %2811 = vmatmul.mubr.bf16.gmra.mxu0 %v2720
          %v2812 = vpop.f32.mrf.mxu0
          %v2813 = vadd.f32 0.0, %v2812
          %v2814 = vpop.f32.mrf.mxu0
          %v2815 = vpop.f32.mrf.mxu0
          %v2816 = vadd.f32 0.0, %v2815
          %v2817 = vpop.f32.mrf.mxu0
          %2818 = vdwg.mxu0
          %v2819 = vadd.f32 %v2666, %v2757
          %v2820 = vadd.f32 %v2667, %v2760
          %v2821 = vadd.f32 %v2668, %v2765
          %v2822 = vadd.f32 %v2669, %v2768
          %v2823 = vadd.f32 %v2670, %v2773
          %v2824 = vadd.f32 %v2671, %v2776
          %v2825 = vadd.f32 %v2672, %v2781
          %v2826 = vadd.f32 %v2673, %v2784
          %v2827 = vadd.f32 %v2674, %v2789
          %v2828 = vadd.f32 %v2675, %v2792
          %v2829 = vadd.f32 %v2676, %v2797
          %v2830 = vadd.f32 %v2677, %v2800
          %v2831 = vadd.f32 %v2678, %v2805
          %v2832 = vadd.f32 %v2679, %v2808
          %v2833 = vadd.f32 %v2680, %v2813
          %v2834 = vadd.f32 %v2681, %v2816
          %2835 = vst [vmem:[%s819] sm:$0xff] %v2819
          %2836 = vst [vmem:[%s819 + $0x8] sm:$0xff] %v2820
          %2837 = vst [vmem:[%s819 + $0x10] sm:$0xff] %v2821
          %2838 = vst [vmem:[%s819 + $0x18] sm:$0xff] %v2822
          %2839 = vst [vmem:[%s819 + $0x20] sm:$0xff] %v2823
          %2840 = vst [vmem:[%s819 + $0x28] sm:$0xff] %v2824
          %2841 = vst [vmem:[%s819 + $0x30] sm:$0xff] %v2825
          %2842 = vst [vmem:[%s819 + $0x38] sm:$0xff] %v2826
          %2843 = vst [vmem:[%s819 + $0x40] sm:$0xff] %v2827
          %2844 = vst [vmem:[%s819 + $0x48] sm:$0xff] %v2828
          %2845 = vst [vmem:[%s819 + $0x50] sm:$0xff] %v2829
          %2846 = vst [vmem:[%s819 + $0x58] sm:$0xff] %v2830
          %2847 = vst [vmem:[%s819 + $0x60] sm:$0xff] %v2831
          %2848 = vst [vmem:[%s819 + $0x68] sm:$0xff] %v2832
          %2849 = vst [vmem:[%s819 + $0x70] sm:$0xff] %v2833
          %2850 = vst [vmem:[%s819 + $0x78] sm:$0xff] %v2834
        $region232: #{tpu_custom_call.1} parent=207 // pred_fallthru
          _
        %s2851 = sand.u32 %s294, 1
        %s2852 = scalar_lea.sflag [#allocation10], %s2851
        %s2853 = sand.u32 %s294, 1
        %s2854 = smul.addr %s2853, 128
        %s2855 = scalar_lea.vmem [#allocation9], %s2854
        // Predicated region
        $region233: #{tpu_custom_call.1} parent=207 // pred_check
          %p2856 = pneg %p304
        $region234: #{tpu_custom_call.1} parent=207 // pred_check_branch
          %2858 = sbr.rel (%p2856) target = $region236
        $region235: #{tpu_custom_call.1} parent=207 // pred_region
          %s2859 = smul.u32 16, %s28
          %s2861 = ssub.s32 2048, 2048
          %2862 = vsyncadd %s2852, %s2861
          %s2863 = smul.addr %s2859, 128
          %s2864 = scalar_lea.hbm %s10, %s2863
          %s2865 = sshll.u32 %s2855, 4
          %s2866 = int_to_ptr.vmem [resolvable:$true] %s2865
          %2871 = dma.vmem_to_hbm [thread:$0]  %s2866, 2048, %s2864, %s2852, 128, 128, 8
        $region236: #{tpu_custom_call.1} parent=207 // pred_fallthru
          _
      $region208: #{tpu_custom_call.1} parent=5 // pred_fallthru
        _
      %p2872 = scmp.le.s32.totalorder 2, %s19
      // Predicated region
      $region237: #{tpu_custom_call.1} parent=5 // pred_check
        %p2873 = pneg %p2872
      $region238: #{tpu_custom_call.1} parent=5 // pred_check_branch
        %2875 = sbr.rel (%p2873) target = $region240
      $region239: #{tpu_custom_call.1} parent=5 // pred_region
        %s2876 = ssub.s32 %s19, 2
        // Predicated region
        $region241: #{tpu_custom_call.1} parent=239 // pred_check
          %p2877 = pneg %p310
        $region242: #{tpu_custom_call.1} parent=239 // pred_check_branch
          %2879 = sbr.rel (%p2877) target = $region244
        $region243: #{tpu_custom_call.1} parent=239 // pred_region
          %s2880 = sand.u32 %s295, 1
          %s2881 = scalar_lea.sflag [#allocation10], %s2880
          %s2882 = sand.u32 %s295, 1
          %s2883 = smul.addr %s2882, 128
          %s2884 = scalar_lea.vmem [#allocation9], %s2883
          %2885 = dma.done %s2881, 2048
        $region244: #{tpu_custom_call.1} parent=239 // pred_fallthru
          _
      $region240: #{tpu_custom_call.1} parent=5 // pred_fallthru
        _
    $region6: #{tpu_custom_call.1} parent=1 // loop_footer
      %s23 = sadd.s32 1, %s19
    $region7: #{tpu_custom_call.1} parent=1 // loop_footer_branch
      %18 = sbr.rel target = $region3
    $region8: #{tpu_custom_call.1} parent=1 // loop_exit
      _
    %2886 = vsyncpa [#allocation10], 1
    %s2887 = scalar_lea.sflag [#allocation10], 1
    %2888 = vsyncpa %s2887, 1

</llo_original>
